<compile_context>
chip_gen: v7x
topology: tpu7x:2x2x1
jax: 0.10.0
libtpu: 0.0.40
codegen_flags: <defaults>
</compile_context>

<pallas_src>
import jax
import jax.numpy as jnp
from jax.experimental import pallas as pl
from jax.experimental.pallas import tpu as pltpu


def _relu_conv1x1_kernel(w_ref, x_ref, o_ref):
    """w_ref: (tn, C_in) bf16 weight tile; x_ref: (1, C_in, M) f32; o_ref: (1, tn, M) f32."""
    x = jnp.maximum(x_ref[0], 0.0).astype(jnp.bfloat16)              # fused ReLU + bf16 cast
    y = jnp.dot(w_ref[...], x, preferred_element_type=jnp.float32)   # bf16 MXU, f32 accumulation
    o_ref[0] = y.astype(o_ref.dtype)


@jax.jit
def relu_conv1x1(x_nchw, weight_oihw):
    """x_nchw: (N, C_in, H, W) f32; weight_oihw: (C_out, C_in, 1, 1) f32."""
    n, c_in, h, w = x_nchw.shape
    c_out = weight_oihw.shape[0]
    m = h * w

    # Static C_out tile choice: prefer 4 tiles (>=2 pipelined steps per v7x TC,
    # smaller exposed prologue DMA everywhere), fall back to 2, then full.
    tn = c_out
    for parts in (4, 2):
        if c_out % parts == 0 and (c_out // parts) % 8 == 0:
            tn = c_out // parts
            break

    # Free reshapes (no transposes, no padding copies).
    x3 = x_nchw.reshape(n, c_in, m)                                  # (N, C_in, M)
    wmat = weight_oihw.reshape(c_out, c_in).astype(jnp.bfloat16)     # (C_out, C_in) bf16

    grid = (n, c_out // tn)

    bytes_accessed = (
        wmat.size * 2            # bf16 weights
        + x3.size * 4            # f32 activations (read once)
        + n * c_out * m * 4      # f32 output
    )

    out = pl.pallas_call(
        _relu_conv1x1_kernel,
        out_shape=jax.ShapeDtypeStruct((n, c_out, m), x_nchw.dtype),
        grid=grid,
        in_specs=[
            # Weight tile varies with the C_out grid axis only.
            pl.BlockSpec((tn, c_in), lambda b, j: (j, 0)),
            # Whole image block per batch; block index constant over j, so the
            # pipeline does not re-DMA it between C_out tiles.
            pl.BlockSpec((1, c_in, m), lambda b, j: (b, 0, 0)),
        ],
        out_specs=pl.BlockSpec((1, tn, m), lambda b, j: (b, j, 0)),
        compiler_params=pltpu.CompilerParams(
            dimension_semantics=("parallel", "parallel"),
            vmem_limit_bytes=32 * 1024 * 1024,
        ),
        cost_estimate=pl.CostEstimate(
            flops=2 * n * c_out * c_in * m,
            transcendentals=0,
            bytes_accessed=bytes_accessed,
        ),
    )(wmat, x3)

    return out.reshape(n, c_out, h, w)


if __name__ == "__main__":
    key = jax.random.PRNGKey(0)
    kx, kw = jax.random.split(key)

    # Shapes fixed by the module: Conv2d(2112 -> 1056, 1x1), spec input 1x2112x14x14.
    N, C_IN, H, W = 1, 2112, 14, 14
    C_OUT = 1056

    x = jax.random.normal(kx, (N, C_IN, H, W), dtype=jnp.float32)
    weight = jax.random.normal(kw, (C_OUT, C_IN, 1, 1), dtype=jnp.float32) * (
        1.0 / jnp.sqrt(C_IN)
    )

    out = jax.block_until_ready(relu_conv1x1(x, weight))

    # Reference check in plain JAX (f32). Tolerance loosened for the bf16
    # operand cast (f32 accumulation over K=2112 keeps error small).
    ref = jnp.einsum(
        "nchw,oc->nohw", jnp.maximum(x, 0.0), weight.reshape(C_OUT, C_IN)
    )
    assert out.shape == (N, C_OUT, H, W), out.shape
    max_err = float(jnp.max(jnp.abs(out - ref)))
    assert jnp.allclose(out, ref, atol=5e-2, rtol=5e-2), max_err

    print("KERNEL_OK")
</pallas_src>

<mosaic_0001>
module attributes {stable_mosaic.version = 11 : i64} {
  func.func @_relu_conv1x1_kernel(%arg0: i32, %arg1: i32, %arg2: memref<264x2112xbf16, #tpu.memory_space<vmem>>, %arg3: memref<1x2112x196xf32, #tpu.memory_space<vmem>>, %arg4: memref<1x264x196xf32, #tpu.memory_space<vmem>>) attributes {dimension_semantics = [#tpu.dimension_semantics<parallel>, #tpu.dimension_semantics<parallel>], iteration_bounds = array<i64: 1, 4>, scalar_prefetch = 0 : i64, scratch_operands = 0 : i64, tpu.core_type = #tpu.core_type<tc>, window_params = [{transform_indices = @transform_0, window_bounds = array<i64: 264, 2112>}, {transform_indices = @transform_1, window_bounds = array<i64: 1, 2112, 196>}, {transform_indices = @transform_2, window_bounds = array<i64: 1, 264, 196>}]} {
    %c0 = arith.constant 0 : index
    %c0_0 = arith.constant 0 : index
    %c0_1 = arith.constant 0 : index
    %0 = vector.load %arg3[%c0, %c0_0, %c0_1] : memref<1x2112x196xf32, #tpu.memory_space<vmem>>, vector<1x2112x196xf32>
    %1 = vector.shape_cast %0 : vector<1x2112x196xf32> to vector<2112x196xf32>
    %cst = arith.constant 0.000000e+00 : f32
    %2 = vector.broadcast %cst : f32 to vector<2112x196xf32>
    %3 = arith.maximumf %1, %2 : vector<2112x196xf32>
    %4 = arith.truncf %3 : vector<2112x196xf32> to vector<2112x196xbf16>
    %c0_2 = arith.constant 0 : index
    %c0_3 = arith.constant 0 : index
    %5 = vector.load %arg2[%c0_2, %c0_3] : memref<264x2112xbf16, #tpu.memory_space<vmem>>, vector<264x2112xbf16>
    %cst_4 = arith.constant dense<0.000000e+00> : vector<264x196xf32>
    %6 = tpu.matmul %5, %4, %cst_4 {dimension_numbers = #tpu.dot_dimension_numbers<[1], [0], [0], [1], [0, 0, 1, 1], [], []>} : vector<264x2112xbf16>, vector<2112x196xbf16>, vector<264x196xf32> -> vector<264x196xf32>
    %c0_5 = arith.constant 0 : index
    %c0_6 = arith.constant 0 : index
    %c0_7 = arith.constant 0 : index
    %7 = vector.load %arg4[%c0_5, %c0_6, %c0_7] : memref<1x264x196xf32, #tpu.memory_space<vmem>>, vector<1x264x196xf32>
    %8 = vector.shape_cast %7 : vector<1x264x196xf32> to vector<264x196xf32>
    %9 = vector.shape_cast %6 : vector<264x196xf32> to vector<1x264x196xf32>
    tpu.vector_store %arg4[%c0_5, %c0_6, %c0_7], %9 {strides = array<i32>} : memref<1x264x196xf32, #tpu.memory_space<vmem>>, vector<1x264x196xf32>,
    return
  }
  func.func @transform_0(%arg0: i32, %arg1: i32) -> (i32, i32) {
    %c0_i32 = arith.constant 0 : i32
    %c0_i32_0 = arith.constant 0 : i32
    return %arg1, %c0_i32 : i32, i32
  }
  func.func @transform_1(%arg0: i32, %arg1: i32) -> (i32, i32, i32) {
    %c0_i32 = arith.constant 0 : i32
    %c0_i32_0 = arith.constant 0 : i32
    %c0_i32_1 = arith.constant 0 : i32
    return %arg0, %c0_i32, %c0_i32_0 : i32, i32, i32
  }
  func.func @transform_2(%arg0: i32, %arg1: i32) -> (i32, i32, i32) {
    %c0_i32 = arith.constant 0 : i32
    %c0_i32_0 = arith.constant 0 : i32
    return %arg0, %arg1, %c0_i32 : i32, i32, i32
  }
}

</mosaic_0001>

<llo_original>
// kernel: relu_conv1x1.1
$region0: #{relu_conv1x1.1}
  #allocation0 [shape = 'u32[]', space=smem, size = 0x4, offset = 0x4, fixed_abs, tag = 'smem constant byte address 0x4 - core index']
  #allocation1 [shape = 'u32[144,128]{1,0:T(1,128)}', space=vmem, size = 0x12000, scoped, tag = 'internal scratch']
  %s0 = inlined_call_operand.vmem [shape: bf16[1056,2112], index: 0, kind: input, shape index: {}]
  %s1 = inlined_call_operand.vmem [shape: f32[1,2112,196], index: 1, kind: input, shape index: {}]
  %s2 = inlined_call_operand.vmem [shape: f32[1,1056,196], index: 2, kind: output, shape index: {}]
  %s3 = sld [smem:[#allocation0]]
  $region41: #{relu_conv1x1.1} parent=0
    _
  %s5 = ssub.s32 1, %s3
  %s6 = scalar_select 0, %s5, %s3
  loop: start=0, step=1, limit=6
  $region2: #{relu_conv1x1.1} parent=0 // loop_pre_header
    _
  $region3: #{relu_conv1x1.1} parent=0 // loop_header
    %s8 = sphi 0, %s12
    %p9 = scmp.ge.s32.totalorder %s8, 6
    %s15 = sphi 0, %s27
    %s16 = sphi 0, %s23
    %s17 = sphi 0, %s15
    %s18 = sphi 0, %s16
    %s19 = sphi 0, %s17
    %s20 = sphi 0, %s18
    %s30 = sphi 0, %s32
    %s33 = sphi 0, %s30
    %s34 = sphi 0, %s33
    %s50 = sphi 0, %s34
    %s56 = sphi 0, %s58
    %s59 = sphi 0, %s56
    %s60 = sphi 0, %s59
    %s76 = sphi 0, %s60
    %s84 = sphi 0, %s86
    %s87 = sphi 0, %s84
    %s88 = sphi 0, %s87
    %s104 = sphi 0, %s88
  $region4: #{relu_conv1x1.1} parent=0 // loop_header_branch
    %11 = sbr.rel (%p9) target = $region8
  $region5: #{relu_conv1x1.1} parent=0 // loop_body
    %s13 = ssub.s32 %s8, 1
    %s14 = ssub.s32 %s8, 2
    %s21 = sadd.s32 1, %s16
    %p22 = scmp.ge.s32.totalorder %s21, 4
    %s23 = scalar_select %p22, 0, %s21
    %s24 = sadd.s32 1, %s15
    %s25 = scalar_select %p22, %s24, %s15
    %p26 = scmp.ge.s32.totalorder %s25, 1
    %s27 = scalar_select %p26, 0, %s25
    %s28 = ssub.s32 %s16, %s23
    %p29 = scmp.eq.s32.totalorder %s28, 0
    %s31 = sadd.s32 %s30, 1
    %s32 = scalar_select %p29, %s30, %s31
    %p35 = pneg %p29
    %p36 = scmp.eq.s32.totalorder %s8, 3
    %p37 = por %p35, %p36
    %p38 = scmp.ne.s32.totalorder %s30, %s33
    %p39 = scmp.eq.s32.totalorder %s8, 0
    %p40 = por %p38, %p39
    %p41 = scmp.ne.s32.totalorder %s30, %s33
    %p42 = scmp.eq.s32.totalorder %s13, 3
    %p43 = por %p41, %p42
    %p44 = scmp.ne.s32.totalorder %s33, %s34
    %p45 = scmp.eq.s32.totalorder %s13, 0
    %p46 = por %p44, %p45
    %p47 = scmp.ne.s32.totalorder %s33, %s34
    %p48 = scmp.eq.s32.totalorder %s14, 3
    %p49 = por %p47, %p48
    %p51 = scmp.ne.s32.totalorder %s34, %s50
    %p52 = scmp.eq.s32.totalorder %s14, 0
    %p53 = por %p51, %p52
    %s54 = ssub.s32 %s15, %s27
    %p55 = scmp.eq.s32.totalorder %s54, 0
    %s57 = sadd.s32 %s56, 1
    %s58 = scalar_select %p55, %s56, %s57
    %p61 = pneg %p55
    %p62 = scmp.eq.s32.totalorder %s8, 3
    %p63 = por %p61, %p62
    %p64 = scmp.ne.s32.totalorder %s56, %s59
    %p65 = scmp.eq.s32.totalorder %s8, 0
    %p66 = por %p64, %p65
    %p67 = scmp.ne.s32.totalorder %s56, %s59
    %p68 = scmp.eq.s32.totalorder %s13, 3
    %p69 = por %p67, %p68
    %p70 = scmp.ne.s32.totalorder %s59, %s60
    %p71 = scmp.eq.s32.totalorder %s13, 0
    %p72 = por %p70, %p71
    %p73 = scmp.ne.s32.totalorder %s59, %s60
    %p74 = scmp.eq.s32.totalorder %s14, 3
    %p75 = por %p73, %p74
    %p77 = scmp.ne.s32.totalorder %s60, %s76
    %p78 = scmp.eq.s32.totalorder %s14, 0
    %p79 = por %p77, %p78
    %s80 = ssub.s32 %s15, %s27
    %s81 = ssub.s32 %s16, %s23
    %s82 = sor.u32 %s80, %s81
    %p83 = scmp.eq.s32.totalorder %s82, 0
    %s85 = sadd.s32 %s84, 1
    %s86 = scalar_select %p83, %s84, %s85
    %p89 = pneg %p83
    %p90 = scmp.eq.s32.totalorder %s8, 3
    %p91 = por %p89, %p90
    %p92 = scmp.ne.s32.totalorder %s84, %s87
    %p93 = scmp.eq.s32.totalorder %s8, 0
    %p94 = por %p92, %p93
    %p95 = scmp.ne.s32.totalorder %s84, %s87
    %p96 = scmp.eq.s32.totalorder %s13, 3
    %p97 = por %p95, %p96
    %p98 = scmp.ne.s32.totalorder %s87, %s88
    %p99 = scmp.eq.s32.totalorder %s13, 0
    %p100 = por %p98, %p99
    %p101 = scmp.ne.s32.totalorder %s87, %s88
    %p102 = scmp.eq.s32.totalorder %s14, 3
    %p103 = por %p101, %p102
    %p105 = scmp.ne.s32.totalorder %s88, %s104
    %p106 = scmp.eq.s32.totalorder %s14, 0
    %p107 = por %p105, %p106
    %p108 = scmp.le.s32.totalorder 1, %s8
    %p109 = scmp.lt.s32.totalorder %s8, 5
    %p110 = pnand %p108, %p109
    %p111 = pneg %p110
    // Predicated region
    $region9: #{relu_conv1x1.1} parent=5 // pred_check
      _
    $region10: #{relu_conv1x1.1} parent=5 // pred_check_branch
      %113 = sbr.rel (%p110) target = $region12
    $region11: #{relu_conv1x1.1} parent=5 // pred_region
      %s114 = ssub.s32 %s8, 1
      // Predicated region
      $region13: #{relu_conv1x1.1} parent=11 // pred_check
        %p115 = pneg %p72
      $region14: #{relu_conv1x1.1} parent=11 // pred_check_branch
        %117 = sbr.rel (%p115) target = $region16
      $region15: #{relu_conv1x1.1} parent=11 // pred_region
        %p118 = scmp.lt.s32.totalorder %s17, 0
        %s119 = scalar_select %p118, %s17, 0
        %s120 = smul.addr %s119, 528
        %s121 = smul.addr %s120, 8
        %s122 = scalar_lea.vmem %s1, %s121
      $region16: #{relu_conv1x1.1} parent=11 // pred_fallthru
        _
    $region12: #{relu_conv1x1.1} parent=5 // pred_fallthru
      _
    %p123 = scmp.lt.s32.totalorder %s8, 4
    // Predicated region
    $region17: #{relu_conv1x1.1} parent=5 // pred_check
      %p124 = pneg %p123
    $region18: #{relu_conv1x1.1} parent=5 // pred_check_branch
      %126 = sbr.rel (%p124) target = $region20
    $region19: #{relu_conv1x1.1} parent=5 // pred_region
      // Predicated region
      $region21: #{relu_conv1x1.1} parent=19 // pred_check
        %p127 = pneg %p40
      $region22: #{relu_conv1x1.1} parent=19 // pred_check_branch
        %129 = sbr.rel (%p127) target = $region24
      $region23: #{relu_conv1x1.1} parent=19 // pred_region
        %s130 = smul.u32 33, %s16
        %p131 = scmp.lt.s32.totalorder %s130, 131
        %s132 = scalar_select %p131, %s130, 131
        %s133 = smul.addr %s132, 17
        %s134 = smul.addr %s133, 4
        %s135 = scalar_lea.vmem %s0, %s134
        %s136 = smul.u32 33, %s16
      $region24: #{relu_conv1x1.1} parent=19 // pred_fallthru
        _
    $region20: #{relu_conv1x1.1} parent=5 // pred_fallthru
      _
    %p137 = scmp.le.s32.totalorder 1, %s8
    %p138 = scmp.lt.s32.totalorder %s8, 5
    %p139 = pnand %p137, %p138
    %p140 = pneg %p139
    // Predicated region
    $region25: #{relu_conv1x1.1} parent=5 // pred_check
      _
    $region26: #{relu_conv1x1.1} parent=5 // pred_check_branch
      %142 = sbr.rel (%p139) target = $region28
    $region27: #{relu_conv1x1.1} parent=5 // pred_region
      %s143 = ssub.s32 %s8, 1
      %s144 = smul.u32 33, %s18
      %p145 = scmp.lt.s32.totalorder %s144, 131
      %s146 = scalar_select %p145, %s144, 131
      %s147 = smul.addr %s146, 17
      %s148 = smul.addr %s147, 4
      %s149 = scalar_lea.vmem %s0, %s148
      %p150 = pneg %p46
      %p151 = pneg %p43
      %p152 = scmp.lt.s32.totalorder %s17, 0
      %s153 = scalar_select %p152, %s17, 0
      %s154 = smul.addr %s153, 528
      %s155 = smul.addr %s154, 8
      %s156 = scalar_lea.vmem %s1, %s155
      %p157 = pneg %p72
      %p158 = pneg %p69
      %p159 = pneg %p100
      %p160 = pneg %p97
      %s161 = smul.u32 33, %s18
      %p162 = scmp.lt.s32.totalorder %s17, 0
      %s163 = scalar_select %p162, %s17, 0
      %p164 = scmp.lt.s32.totalorder %s161, 131
      %s165 = scalar_select %p164, %s161, 131
      %s166 = smul.addr %s165, 2
      %s167 = smul.addr %s163, 264
      %s168 = sadd.s32 %s166, %s167
      %s169 = smul.addr %s168, 8
      %s170 = scalar_lea.vmem %s2, %s169
      %s171 = smul.u32 33, %s18
      %p172 = scmp.lt.s32.totalorder %s171, 131
      %s173 = scalar_select %p172, %s171, 131
      %s174 = smul.addr %s173, 17
      %s175 = smul.addr %s174, 4
      %s176 = scalar_lea.vmem %s0, %s175
      %s177 = smul.u32 33, %s18
      %p178 = scmp.lt.s32.totalorder %s17, 0
      %s179 = scalar_select %p178, %s17, 0
      %s180 = smul.addr %s179, 528
      %s181 = smul.addr %s180, 8
      %s182 = scalar_lea.vmem %s1, %s181
      %s183 = smul.u32 33, %s18
      %p184 = scmp.lt.s32.totalorder %s17, 0
      %s185 = scalar_select %p184, %s17, 0
      %p186 = scmp.lt.s32.totalorder %s183, 131
      %s187 = scalar_select %p186, %s183, 131
      %s188 = smul.addr %s187, 2
      %s189 = smul.addr %s185, 264
      %s190 = sadd.s32 %s188, %s189
      %s191 = smul.addr %s190, 8
      %s192 = scalar_lea.vmem %s2, %s191
      %s193 = smul.u32 33, %s18
      %v195 = vld [vmem:[%s182] sm:$0xff]
      %v196 = vld [vmem:[%s182 + $0x8] sm:$0xff]
      %v197 = vld [vmem:[%s182 + $0x10] sm:$0xff]
      %v198 = vld [vmem:[%s182 + $0x18] sm:$0xff]
      %v199 = vld [vmem:[%s182 + $0x20] sm:$0xff]
      %v200 = vld [vmem:[%s182 + $0x28] sm:$0xff]
      %v201 = vld [vmem:[%s182 + $0x30] sm:$0xff]
      %v202 = vld [vmem:[%s182 + $0x38] sm:$0xff]
      %v203 = vld [vmem:[%s182 + $0x40] sm:$0xff]
      %v204 = vld [vmem:[%s182 + $0x48] sm:$0xff]
      %v205 = vld [vmem:[%s182 + $0x50] sm:$0xff]
      %v206 = vld [vmem:[%s182 + $0x58] sm:$0xff]
      %v207 = vld [vmem:[%s182 + $0x60] sm:$0xff]
      %v208 = vld [vmem:[%s182 + $0x68] sm:$0xff]
      %v209 = vld [vmem:[%s182 + $0x70] sm:$0xff]
      %v210 = vld [vmem:[%s182 + $0x78] sm:$0xff]
      %v211 = vld [vmem:[%s182 + $0x80] sm:$0xff]
      %v212 = vld [vmem:[%s182 + $0x88] sm:$0xff]
      %v213 = vld [vmem:[%s182 + $0x90] sm:$0xff]
      %v214 = vld [vmem:[%s182 + $0x98] sm:$0xff]
      %v215 = vld [vmem:[%s182 + $0xa0] sm:$0xff]
      %v216 = vld [vmem:[%s182 + $0xa8] sm:$0xff]
      %v217 = vld [vmem:[%s182 + $0xb0] sm:$0xff]
      %v218 = vld [vmem:[%s182 + $0xb8] sm:$0xff]
      %v219 = vld [vmem:[%s182 + $0xc0] sm:$0xff]
      %v220 = vld [vmem:[%s182 + $0xc8] sm:$0xff]
      %v221 = vld [vmem:[%s182 + $0xd0] sm:$0xff]
      %v222 = vld [vmem:[%s182 + $0xd8] sm:$0xff]
      %v223 = vld [vmem:[%s182 + $0xe0] sm:$0xff]
      %v224 = vld [vmem:[%s182 + $0xe8] sm:$0xff]
      %v225 = vld [vmem:[%s182 + $0xf0] sm:$0xff]
      %v226 = vld [vmem:[%s182 + $0xf8] sm:$0xff]
      %v227 = vld [vmem:[%s182 + $0x100] sm:$0xff]
      %v228 = vld [vmem:[%s182 + $0x108] sm:$0xff]
      %v229 = vld [vmem:[%s182 + $0x110] sm:$0xff]
      %v230 = vld [vmem:[%s182 + $0x118] sm:$0xff]
      %v231 = vld [vmem:[%s182 + $0x120] sm:$0xff]
      %v232 = vld [vmem:[%s182 + $0x128] sm:$0xff]
      %v233 = vld [vmem:[%s182 + $0x130] sm:$0xff]
      %v234 = vld [vmem:[%s182 + $0x138] sm:$0xff]
      %v235 = vld [vmem:[%s182 + $0x140] sm:$0xff]
      %v236 = vld [vmem:[%s182 + $0x148] sm:$0xff]
      %v237 = vld [vmem:[%s182 + $0x150] sm:$0xff]
      %v238 = vld [vmem:[%s182 + $0x158] sm:$0xff]
      %v239 = vld [vmem:[%s182 + $0x160] sm:$0xff]
      %v240 = vld [vmem:[%s182 + $0x168] sm:$0xff]
      %v241 = vld [vmem:[%s182 + $0x170] sm:$0xff]
      %v242 = vld [vmem:[%s182 + $0x178] sm:$0xff]
      %v243 = vld [vmem:[%s182 + $0x180] sm:$0xff]
      %v244 = vld [vmem:[%s182 + $0x188] sm:$0xff]
      %v245 = vld [vmem:[%s182 + $0x190] sm:$0xff]
      %v246 = vld [vmem:[%s182 + $0x198] sm:$0xff]
      %v247 = vld [vmem:[%s182 + $0x1a0] sm:$0xff]
      %v248 = vld [vmem:[%s182 + $0x1a8] sm:$0xff]
      %v249 = vld [vmem:[%s182 + $0x1b0] sm:$0xff]
      %v250 = vld [vmem:[%s182 + $0x1b8] sm:$0xff]
      %v251 = vld [vmem:[%s182 + $0x1c0] sm:$0xff]
      %v252 = vld [vmem:[%s182 + $0x1c8] sm:$0xff]
      %v253 = vld [vmem:[%s182 + $0x1d0] sm:$0xff]
      %v254 = vld [vmem:[%s182 + $0x1d8] sm:$0xff]
      %v255 = vld [vmem:[%s182 + $0x1e0] sm:$0xff]
      %v256 = vld [vmem:[%s182 + $0x1e8] sm:$0xff]
      %v257 = vld [vmem:[%s182 + $0x1f0] sm:$0xff]
      %v258 = vld [vmem:[%s182 + $0x1f8] sm:$0xff]
      %v259 = vld [vmem:[%s182 + $0x200] sm:$0xff]
      %v260 = vld [vmem:[%s182 + $0x208] sm:$0xff]
      %v261 = vld [vmem:[%s182 + $0x210] sm:$0xff]
      %v262 = vld [vmem:[%s182 + $0x218] sm:$0xff]
      %v263 = vld [vmem:[%s182 + $0x220] sm:$0xff]
      %v264 = vld [vmem:[%s182 + $0x228] sm:$0xff]
      %v265 = vld [vmem:[%s182 + $0x230] sm:$0xff]
      %v266 = vld [vmem:[%s182 + $0x238] sm:$0xff]
      %v267 = vld [vmem:[%s182 + $0x240] sm:$0xff]
      %v268 = vld [vmem:[%s182 + $0x248] sm:$0xff]
      %v269 = vld [vmem:[%s182 + $0x250] sm:$0xff]
      %v270 = vld [vmem:[%s182 + $0x258] sm:$0xff]
      %v271 = vld [vmem:[%s182 + $0x260] sm:$0xff]
      %v272 = vld [vmem:[%s182 + $0x268] sm:$0xff]
      %v273 = vld [vmem:[%s182 + $0x270] sm:$0xff]
      %v274 = vld [vmem:[%s182 + $0x278] sm:$0xff]
      %v275 = vld [vmem:[%s182 + $0x280] sm:$0xff]
      %v276 = vld [vmem:[%s182 + $0x288] sm:$0xff]
      %v277 = vld [vmem:[%s182 + $0x290] sm:$0xff]
      %v278 = vld [vmem:[%s182 + $0x298] sm:$0xff]
      %v279 = vld [vmem:[%s182 + $0x2a0] sm:$0xff]
      %v280 = vld [vmem:[%s182 + $0x2a8] sm:$0xff]
      %v281 = vld [vmem:[%s182 + $0x2b0] sm:$0xff]
      %v282 = vld [vmem:[%s182 + $0x2b8] sm:$0xff]
      %v283 = vld [vmem:[%s182 + $0x2c0] sm:$0xff]
      %v284 = vld [vmem:[%s182 + $0x2c8] sm:$0xff]
      %v285 = vld [vmem:[%s182 + $0x2d0] sm:$0xff]
      %v286 = vld [vmem:[%s182 + $0x2d8] sm:$0xff]
      %v287 = vld [vmem:[%s182 + $0x2e0] sm:$0xff]
      %v288 = vld [vmem:[%s182 + $0x2e8] sm:$0xff]
      %v289 = vld [vmem:[%s182 + $0x2f0] sm:$0xff]
      %v290 = vld [vmem:[%s182 + $0x2f8] sm:$0xff]
      %v291 = vld [vmem:[%s182 + $0x300] sm:$0xff]
      %v292 = vld [vmem:[%s182 + $0x308] sm:$0xff]
      %v293 = vld [vmem:[%s182 + $0x310] sm:$0xff]
      %v294 = vld [vmem:[%s182 + $0x318] sm:$0xff]
      %v295 = vld [vmem:[%s182 + $0x320] sm:$0xff]
      %v296 = vld [vmem:[%s182 + $0x328] sm:$0xff]
      %v297 = vld [vmem:[%s182 + $0x330] sm:$0xff]
      %v298 = vld [vmem:[%s182 + $0x338] sm:$0xff]
      %v299 = vld [vmem:[%s182 + $0x340] sm:$0xff]
      %v300 = vld [vmem:[%s182 + $0x348] sm:$0xff]
      %v301 = vld [vmem:[%s182 + $0x350] sm:$0xff]
      %v302 = vld [vmem:[%s182 + $0x358] sm:$0xff]
      %v303 = vld [vmem:[%s182 + $0x360] sm:$0xff]
      %v304 = vld [vmem:[%s182 + $0x368] sm:$0xff]
      %v305 = vld [vmem:[%s182 + $0x370] sm:$0xff]
      %v306 = vld [vmem:[%s182 + $0x378] sm:$0xff]
      %v307 = vld [vmem:[%s182 + $0x380] sm:$0xff]
      %v308 = vld [vmem:[%s182 + $0x388] sm:$0xff]
      %v309 = vld [vmem:[%s182 + $0x390] sm:$0xff]
      %v310 = vld [vmem:[%s182 + $0x398] sm:$0xff]
      %v311 = vld [vmem:[%s182 + $0x3a0] sm:$0xff]
      %v312 = vld [vmem:[%s182 + $0x3a8] sm:$0xff]
      %v313 = vld [vmem:[%s182 + $0x3b0] sm:$0xff]
      %v314 = vld [vmem:[%s182 + $0x3b8] sm:$0xff]
      %v315 = vld [vmem:[%s182 + $0x3c0] sm:$0xff]
      %v316 = vld [vmem:[%s182 + $0x3c8] sm:$0xff]
      %v317 = vld [vmem:[%s182 + $0x3d0] sm:$0xff]
      %v318 = vld [vmem:[%s182 + $0x3d8] sm:$0xff]
      %v319 = vld [vmem:[%s182 + $0x3e0] sm:$0xff]
      %v320 = vld [vmem:[%s182 + $0x3e8] sm:$0xff]
      %v321 = vld [vmem:[%s182 + $0x3f0] sm:$0xff]
      %v322 = vld [vmem:[%s182 + $0x3f8] sm:$0xff]
      %v323 = vld [vmem:[%s182 + $0x400] sm:$0xff]
      %v324 = vld [vmem:[%s182 + $0x408] sm:$0xff]
      %v325 = vld [vmem:[%s182 + $0x410] sm:$0xff]
      %v326 = vld [vmem:[%s182 + $0x418] sm:$0xff]
      %v327 = vld [vmem:[%s182 + $0x420] sm:$0xff]
      %v328 = vld [vmem:[%s182 + $0x428] sm:$0xff]
      %v329 = vld [vmem:[%s182 + $0x430] sm:$0xff]
      %v330 = vld [vmem:[%s182 + $0x438] sm:$0xff]
      %v331 = vld [vmem:[%s182 + $0x440] sm:$0xff]
      %v332 = vld [vmem:[%s182 + $0x448] sm:$0xff]
      %v333 = vld [vmem:[%s182 + $0x450] sm:$0xff]
      %v334 = vld [vmem:[%s182 + $0x458] sm:$0xff]
      %v335 = vld [vmem:[%s182 + $0x460] sm:$0xff]
      %v336 = vld [vmem:[%s182 + $0x468] sm:$0xff]
      %v337 = vld [vmem:[%s182 + $0x470] sm:$0xff]
      %v338 = vld [vmem:[%s182 + $0x478] sm:$0xff]
      %v339 = vld [vmem:[%s182 + $0x480] sm:$0xff]
      %v340 = vld [vmem:[%s182 + $0x488] sm:$0xff]
      %v341 = vld [vmem:[%s182 + $0x490] sm:$0xff]
      %v342 = vld [vmem:[%s182 + $0x498] sm:$0xff]
      %v343 = vld [vmem:[%s182 + $0x4a0] sm:$0xff]
      %v344 = vld [vmem:[%s182 + $0x4a8] sm:$0xff]
      %v345 = vld [vmem:[%s182 + $0x4b0] sm:$0xff]
      %v346 = vld [vmem:[%s182 + $0x4b8] sm:$0xff]
      %v347 = vld [vmem:[%s182 + $0x4c0] sm:$0xff]
      %v348 = vld [vmem:[%s182 + $0x4c8] sm:$0xff]
      %v349 = vld [vmem:[%s182 + $0x4d0] sm:$0xff]
      %v350 = vld [vmem:[%s182 + $0x4d8] sm:$0xff]
      %v351 = vld [vmem:[%s182 + $0x4e0] sm:$0xff]
      %v352 = vld [vmem:[%s182 + $0x4e8] sm:$0xff]
      %v353 = vld [vmem:[%s182 + $0x4f0] sm:$0xff]
      %v354 = vld [vmem:[%s182 + $0x4f8] sm:$0xff]
      %v355 = vld [vmem:[%s182 + $0x500] sm:$0xff]
      %v356 = vld [vmem:[%s182 + $0x508] sm:$0xff]
      %v357 = vld [vmem:[%s182 + $0x510] sm:$0xff]
      %v358 = vld [vmem:[%s182 + $0x518] sm:$0xff]
      %v359 = vld [vmem:[%s182 + $0x520] sm:$0xff]
      %v360 = vld [vmem:[%s182 + $0x528] sm:$0xff]
      %v361 = vld [vmem:[%s182 + $0x530] sm:$0xff]
      %v362 = vld [vmem:[%s182 + $0x538] sm:$0xff]
      %v363 = vld [vmem:[%s182 + $0x540] sm:$0xff]
      %v364 = vld [vmem:[%s182 + $0x548] sm:$0xff]
      %v365 = vld [vmem:[%s182 + $0x550] sm:$0xff]
      %v366 = vld [vmem:[%s182 + $0x558] sm:$0xff]
      %v367 = vld [vmem:[%s182 + $0x560] sm:$0xff]
      %v368 = vld [vmem:[%s182 + $0x568] sm:$0xff]
      %v369 = vld [vmem:[%s182 + $0x570] sm:$0xff]
      %v370 = vld [vmem:[%s182 + $0x578] sm:$0xff]
      %v371 = vld [vmem:[%s182 + $0x580] sm:$0xff]
      %v372 = vld [vmem:[%s182 + $0x588] sm:$0xff]
      %v373 = vld [vmem:[%s182 + $0x590] sm:$0xff]
      %v374 = vld [vmem:[%s182 + $0x598] sm:$0xff]
      %v375 = vld [vmem:[%s182 + $0x5a0] sm:$0xff]
      %v376 = vld [vmem:[%s182 + $0x5a8] sm:$0xff]
      %v377 = vld [vmem:[%s182 + $0x5b0] sm:$0xff]
      %v378 = vld [vmem:[%s182 + $0x5b8] sm:$0xff]
      %v379 = vld [vmem:[%s182 + $0x5c0] sm:$0xff]
      %v380 = vld [vmem:[%s182 + $0x5c8] sm:$0xff]
      %v381 = vld [vmem:[%s182 + $0x5d0] sm:$0xff]
      %v382 = vld [vmem:[%s182 + $0x5d8] sm:$0xff]
      %v383 = vld [vmem:[%s182 + $0x5e0] sm:$0xff]
      %v384 = vld [vmem:[%s182 + $0x5e8] sm:$0xff]
      %v385 = vld [vmem:[%s182 + $0x5f0] sm:$0xff]
      %v386 = vld [vmem:[%s182 + $0x5f8] sm:$0xff]
      %v387 = vld [vmem:[%s182 + $0x600] sm:$0xff]
      %v388 = vld [vmem:[%s182 + $0x608] sm:$0xff]
      %v389 = vld [vmem:[%s182 + $0x610] sm:$0xff]
      %v390 = vld [vmem:[%s182 + $0x618] sm:$0xff]
      %v391 = vld [vmem:[%s182 + $0x620] sm:$0xff]
      %v392 = vld [vmem:[%s182 + $0x628] sm:$0xff]
      %v393 = vld [vmem:[%s182 + $0x630] sm:$0xff]
      %v394 = vld [vmem:[%s182 + $0x638] sm:$0xff]
      %v395 = vld [vmem:[%s182 + $0x640] sm:$0xff]
      %v396 = vld [vmem:[%s182 + $0x648] sm:$0xff]
      %v397 = vld [vmem:[%s182 + $0x650] sm:$0xff]
      %v398 = vld [vmem:[%s182 + $0x658] sm:$0xff]
      %v399 = vld [vmem:[%s182 + $0x660] sm:$0xff]
      %v400 = vld [vmem:[%s182 + $0x668] sm:$0xff]
      %v401 = vld [vmem:[%s182 + $0x670] sm:$0xff]
      %v402 = vld [vmem:[%s182 + $0x678] sm:$0xff]
      %v403 = vld [vmem:[%s182 + $0x680] sm:$0xff]
      %v404 = vld [vmem:[%s182 + $0x688] sm:$0xff]
      %v405 = vld [vmem:[%s182 + $0x690] sm:$0xff]
      %v406 = vld [vmem:[%s182 + $0x698] sm:$0xff]
      %v407 = vld [vmem:[%s182 + $0x6a0] sm:$0xff]
      %v408 = vld [vmem:[%s182 + $0x6a8] sm:$0xff]
      %v409 = vld [vmem:[%s182 + $0x6b0] sm:$0xff]
      %v410 = vld [vmem:[%s182 + $0x6b8] sm:$0xff]
      %v411 = vld [vmem:[%s182 + $0x6c0] sm:$0xff]
      %v412 = vld [vmem:[%s182 + $0x6c8] sm:$0xff]
      %v413 = vld [vmem:[%s182 + $0x6d0] sm:$0xff]
      %v414 = vld [vmem:[%s182 + $0x6d8] sm:$0xff]
      %v415 = vld [vmem:[%s182 + $0x6e0] sm:$0xff]
      %v416 = vld [vmem:[%s182 + $0x6e8] sm:$0xff]
      %v417 = vld [vmem:[%s182 + $0x6f0] sm:$0xff]
      %v418 = vld [vmem:[%s182 + $0x6f8] sm:$0xff]
      %v419 = vld [vmem:[%s182 + $0x700] sm:$0xff]
      %v420 = vld [vmem:[%s182 + $0x708] sm:$0xff]
      %v421 = vld [vmem:[%s182 + $0x710] sm:$0xff]
      %v422 = vld [vmem:[%s182 + $0x718] sm:$0xff]
      %v423 = vld [vmem:[%s182 + $0x720] sm:$0xff]
      %v424 = vld [vmem:[%s182 + $0x728] sm:$0xff]
      %v425 = vld [vmem:[%s182 + $0x730] sm:$0xff]
      %v426 = vld [vmem:[%s182 + $0x738] sm:$0xff]
      %v427 = vld [vmem:[%s182 + $0x740] sm:$0xff]
      %v428 = vld [vmem:[%s182 + $0x748] sm:$0xff]
      %v429 = vld [vmem:[%s182 + $0x750] sm:$0xff]
      %v430 = vld [vmem:[%s182 + $0x758] sm:$0xff]
      %v431 = vld [vmem:[%s182 + $0x760] sm:$0xff]
      %v432 = vld [vmem:[%s182 + $0x768] sm:$0xff]
      %v433 = vld [vmem:[%s182 + $0x770] sm:$0xff]
      %v434 = vld [vmem:[%s182 + $0x778] sm:$0xff]
      %v435 = vld [vmem:[%s182 + $0x780] sm:$0xff]
      %v436 = vld [vmem:[%s182 + $0x788] sm:$0xff]
      %v437 = vld [vmem:[%s182 + $0x790] sm:$0xff]
      %v438 = vld [vmem:[%s182 + $0x798] sm:$0xff]
      %v439 = vld [vmem:[%s182 + $0x7a0] sm:$0xff]
      %v440 = vld [vmem:[%s182 + $0x7a8] sm:$0xff]
      %v441 = vld [vmem:[%s182 + $0x7b0] sm:$0xff]
      %v442 = vld [vmem:[%s182 + $0x7b8] sm:$0xff]
      %v443 = vld [vmem:[%s182 + $0x7c0] sm:$0xff]
      %v444 = vld [vmem:[%s182 + $0x7c8] sm:$0xff]
      %v445 = vld [vmem:[%s182 + $0x7d0] sm:$0xff]
      %v446 = vld [vmem:[%s182 + $0x7d8] sm:$0xff]
      %v447 = vld [vmem:[%s182 + $0x7e0] sm:$0xff]
      %v448 = vld [vmem:[%s182 + $0x7e8] sm:$0xff]
      %v449 = vld [vmem:[%s182 + $0x7f0] sm:$0xff]
      %v450 = vld [vmem:[%s182 + $0x7f8] sm:$0xff]
      %v451 = vld [vmem:[%s182 + $0x800] sm:$0xff]
      %v452 = vld [vmem:[%s182 + $0x808] sm:$0xff]
      %v453 = vld [vmem:[%s182 + $0x810] sm:$0xff]
      %v454 = vld [vmem:[%s182 + $0x818] sm:$0xff]
      %v455 = vld [vmem:[%s182 + $0x820] sm:$0xff]
      %v456 = vld [vmem:[%s182 + $0x828] sm:$0xff]
      %v457 = vld [vmem:[%s182 + $0x830] sm:$0xff]
      %v458 = vld [vmem:[%s182 + $0x838] sm:$0xff]
      %v459 = vld [vmem:[%s182 + $0x840] sm:$0xff]
      %v460 = vld [vmem:[%s182 + $0x848] sm:$0xff]
      %v461 = vld [vmem:[%s182 + $0x850] sm:$0xff]
      %v462 = vld [vmem:[%s182 + $0x858] sm:$0xff]
      %v463 = vld [vmem:[%s182 + $0x860] sm:$0xff]
      %v464 = vld [vmem:[%s182 + $0x868] sm:$0xff]
      %v465 = vld [vmem:[%s182 + $0x870] sm:$0xff]
      %v466 = vld [vmem:[%s182 + $0x878] sm:$0xff]
      %v467 = vld [vmem:[%s182 + $0x880] sm:$0xff]
      %v468 = vld [vmem:[%s182 + $0x888] sm:$0xff]
      %v469 = vld [vmem:[%s182 + $0x890] sm:$0xff]
      %v470 = vld [vmem:[%s182 + $0x898] sm:$0xff]
      %v471 = vld [vmem:[%s182 + $0x8a0] sm:$0xff]
      %v472 = vld [vmem:[%s182 + $0x8a8] sm:$0xff]
      %v473 = vld [vmem:[%s182 + $0x8b0] sm:$0xff]
      %v474 = vld [vmem:[%s182 + $0x8b8] sm:$0xff]
      %v475 = vld [vmem:[%s182 + $0x8c0] sm:$0xff]
      %v476 = vld [vmem:[%s182 + $0x8c8] sm:$0xff]
      %v477 = vld [vmem:[%s182 + $0x8d0] sm:$0xff]
      %v478 = vld [vmem:[%s182 + $0x8d8] sm:$0xff]
      %v479 = vld [vmem:[%s182 + $0x8e0] sm:$0xff]
      %v480 = vld [vmem:[%s182 + $0x8e8] sm:$0xff]
      %v481 = vld [vmem:[%s182 + $0x8f0] sm:$0xff]
      %v482 = vld [vmem:[%s182 + $0x8f8] sm:$0xff]
      %v483 = vld [vmem:[%s182 + $0x900] sm:$0xff]
      %v484 = vld [vmem:[%s182 + $0x908] sm:$0xff]
      %v485 = vld [vmem:[%s182 + $0x910] sm:$0xff]
      %v486 = vld [vmem:[%s182 + $0x918] sm:$0xff]
      %v487 = vld [vmem:[%s182 + $0x920] sm:$0xff]
      %v488 = vld [vmem:[%s182 + $0x928] sm:$0xff]
      %v489 = vld [vmem:[%s182 + $0x930] sm:$0xff]
      %v490 = vld [vmem:[%s182 + $0x938] sm:$0xff]
      %v491 = vld [vmem:[%s182 + $0x940] sm:$0xff]
      %v492 = vld [vmem:[%s182 + $0x948] sm:$0xff]
      %v493 = vld [vmem:[%s182 + $0x950] sm:$0xff]
      %v494 = vld [vmem:[%s182 + $0x958] sm:$0xff]
      %v495 = vld [vmem:[%s182 + $0x960] sm:$0xff]
      %v496 = vld [vmem:[%s182 + $0x968] sm:$0xff]
      %v497 = vld [vmem:[%s182 + $0x970] sm:$0xff]
      %v498 = vld [vmem:[%s182 + $0x978] sm:$0xff]
      %v499 = vld [vmem:[%s182 + $0x980] sm:$0xff]
      %v500 = vld [vmem:[%s182 + $0x988] sm:$0xff]
      %v501 = vld [vmem:[%s182 + $0x990] sm:$0xff]
      %v502 = vld [vmem:[%s182 + $0x998] sm:$0xff]
      %v503 = vld [vmem:[%s182 + $0x9a0] sm:$0xff]
      %v504 = vld [vmem:[%s182 + $0x9a8] sm:$0xff]
      %v505 = vld [vmem:[%s182 + $0x9b0] sm:$0xff]
      %v506 = vld [vmem:[%s182 + $0x9b8] sm:$0xff]
      %v507 = vld [vmem:[%s182 + $0x9c0] sm:$0xff]
      %v508 = vld [vmem:[%s182 + $0x9c8] sm:$0xff]
      %v509 = vld [vmem:[%s182 + $0x9d0] sm:$0xff]
      %v510 = vld [vmem:[%s182 + $0x9d8] sm:$0xff]
      %v511 = vld [vmem:[%s182 + $0x9e0] sm:$0xff]
      %v512 = vld [vmem:[%s182 + $0x9e8] sm:$0xff]
      %v513 = vld [vmem:[%s182 + $0x9f0] sm:$0xff]
      %v514 = vld [vmem:[%s182 + $0x9f8] sm:$0xff]
      %v515 = vld [vmem:[%s182 + $0xa00] sm:$0xff]
      %v516 = vld [vmem:[%s182 + $0xa08] sm:$0xff]
      %v517 = vld [vmem:[%s182 + $0xa10] sm:$0xff]
      %v518 = vld [vmem:[%s182 + $0xa18] sm:$0xff]
      %v519 = vld [vmem:[%s182 + $0xa20] sm:$0xff]
      %v520 = vld [vmem:[%s182 + $0xa28] sm:$0xff]
      %v521 = vld [vmem:[%s182 + $0xa30] sm:$0xff]
      %v522 = vld [vmem:[%s182 + $0xa38] sm:$0xff]
      %v523 = vld [vmem:[%s182 + $0xa40] sm:$0xff]
      %v524 = vld [vmem:[%s182 + $0xa48] sm:$0xff]
      %v525 = vld [vmem:[%s182 + $0xa50] sm:$0xff]
      %v526 = vld [vmem:[%s182 + $0xa58] sm:$0xff]
      %v527 = vld [vmem:[%s182 + $0xa60] sm:$0xff]
      %v528 = vld [vmem:[%s182 + $0xa68] sm:$0xff]
      %v529 = vld [vmem:[%s182 + $0xa70] sm:$0xff]
      %v530 = vld [vmem:[%s182 + $0xa78] sm:$0xff]
      %v531 = vld [vmem:[%s182 + $0xa80] sm:$0xff]
      %v532 = vld [vmem:[%s182 + $0xa88] sm:$0xff]
      %v533 = vld [vmem:[%s182 + $0xa90] sm:$0xff]
      %v534 = vld [vmem:[%s182 + $0xa98] sm:$0xff]
      %v535 = vld [vmem:[%s182 + $0xaa0] sm:$0xff]
      %v536 = vld [vmem:[%s182 + $0xaa8] sm:$0xff]
      %v537 = vld [vmem:[%s182 + $0xab0] sm:$0xff]
      %v538 = vld [vmem:[%s182 + $0xab8] sm:$0xff]
      %v539 = vld [vmem:[%s182 + $0xac0] sm:$0xff]
      %v540 = vld [vmem:[%s182 + $0xac8] sm:$0xff]
      %v541 = vld [vmem:[%s182 + $0xad0] sm:$0xff]
      %v542 = vld [vmem:[%s182 + $0xad8] sm:$0xff]
      %v543 = vld [vmem:[%s182 + $0xae0] sm:$0xff]
      %v544 = vld [vmem:[%s182 + $0xae8] sm:$0xff]
      %v545 = vld [vmem:[%s182 + $0xaf0] sm:$0xff]
      %v546 = vld [vmem:[%s182 + $0xaf8] sm:$0xff]
      %v547 = vld [vmem:[%s182 + $0xb00] sm:$0xff]
      %v548 = vld [vmem:[%s182 + $0xb08] sm:$0xff]
      %v549 = vld [vmem:[%s182 + $0xb10] sm:$0xff]
      %v550 = vld [vmem:[%s182 + $0xb18] sm:$0xff]
      %v551 = vld [vmem:[%s182 + $0xb20] sm:$0xff]
      %v552 = vld [vmem:[%s182 + $0xb28] sm:$0xff]
      %v553 = vld [vmem:[%s182 + $0xb30] sm:$0xff]
      %v554 = vld [vmem:[%s182 + $0xb38] sm:$0xff]
      %v555 = vld [vmem:[%s182 + $0xb40] sm:$0xff]
      %v556 = vld [vmem:[%s182 + $0xb48] sm:$0xff]
      %v557 = vld [vmem:[%s182 + $0xb50] sm:$0xff]
      %v558 = vld [vmem:[%s182 + $0xb58] sm:$0xff]
      %v559 = vld [vmem:[%s182 + $0xb60] sm:$0xff]
      %v560 = vld [vmem:[%s182 + $0xb68] sm:$0xff]
      %v561 = vld [vmem:[%s182 + $0xb70] sm:$0xff]
      %v562 = vld [vmem:[%s182 + $0xb78] sm:$0xff]
      %v563 = vld [vmem:[%s182 + $0xb80] sm:$0xff]
      %v564 = vld [vmem:[%s182 + $0xb88] sm:$0xff]
      %v565 = vld [vmem:[%s182 + $0xb90] sm:$0xff]
      %v566 = vld [vmem:[%s182 + $0xb98] sm:$0xff]
      %v567 = vld [vmem:[%s182 + $0xba0] sm:$0xff]
      %v568 = vld [vmem:[%s182 + $0xba8] sm:$0xff]
      %v569 = vld [vmem:[%s182 + $0xbb0] sm:$0xff]
      %v570 = vld [vmem:[%s182 + $0xbb8] sm:$0xff]
      %v571 = vld [vmem:[%s182 + $0xbc0] sm:$0xff]
      %v572 = vld [vmem:[%s182 + $0xbc8] sm:$0xff]
      %v573 = vld [vmem:[%s182 + $0xbd0] sm:$0xff]
      %v574 = vld [vmem:[%s182 + $0xbd8] sm:$0xff]
      %v575 = vld [vmem:[%s182 + $0xbe0] sm:$0xff]
      %v576 = vld [vmem:[%s182 + $0xbe8] sm:$0xff]
      %v577 = vld [vmem:[%s182 + $0xbf0] sm:$0xff]
      %v578 = vld [vmem:[%s182 + $0xbf8] sm:$0xff]
      %v579 = vld [vmem:[%s182 + $0xc00] sm:$0xff]
      %v580 = vld [vmem:[%s182 + $0xc08] sm:$0xff]
      %v581 = vld [vmem:[%s182 + $0xc10] sm:$0xff]
      %v582 = vld [vmem:[%s182 + $0xc18] sm:$0xff]
      %v583 = vld [vmem:[%s182 + $0xc20] sm:$0xff]
      %v584 = vld [vmem:[%s182 + $0xc28] sm:$0xff]
      %v585 = vld [vmem:[%s182 + $0xc30] sm:$0xff]
      %v586 = vld [vmem:[%s182 + $0xc38] sm:$0xff]
      %v587 = vld [vmem:[%s182 + $0xc40] sm:$0xff]
      %v588 = vld [vmem:[%s182 + $0xc48] sm:$0xff]
      %v589 = vld [vmem:[%s182 + $0xc50] sm:$0xff]
      %v590 = vld [vmem:[%s182 + $0xc58] sm:$0xff]
      %v591 = vld [vmem:[%s182 + $0xc60] sm:$0xff]
      %v592 = vld [vmem:[%s182 + $0xc68] sm:$0xff]
      %v593 = vld [vmem:[%s182 + $0xc70] sm:$0xff]
      %v594 = vld [vmem:[%s182 + $0xc78] sm:$0xff]
      %v595 = vld [vmem:[%s182 + $0xc80] sm:$0xff]
      %v596 = vld [vmem:[%s182 + $0xc88] sm:$0xff]
      %v597 = vld [vmem:[%s182 + $0xc90] sm:$0xff]
      %v598 = vld [vmem:[%s182 + $0xc98] sm:$0xff]
      %v599 = vld [vmem:[%s182 + $0xca0] sm:$0xff]
      %v600 = vld [vmem:[%s182 + $0xca8] sm:$0xff]
      %v601 = vld [vmem:[%s182 + $0xcb0] sm:$0xff]
      %v602 = vld [vmem:[%s182 + $0xcb8] sm:$0xff]
      %v603 = vld [vmem:[%s182 + $0xcc0] sm:$0xff]
      %v604 = vld [vmem:[%s182 + $0xcc8] sm:$0xff]
      %v605 = vld [vmem:[%s182 + $0xcd0] sm:$0xff]
      %v606 = vld [vmem:[%s182 + $0xcd8] sm:$0xff]
      %v607 = vld [vmem:[%s182 + $0xce0] sm:$0xff]
      %v608 = vld [vmem:[%s182 + $0xce8] sm:$0xff]
      %v609 = vld [vmem:[%s182 + $0xcf0] sm:$0xff]
      %v610 = vld [vmem:[%s182 + $0xcf8] sm:$0xff]
      %v611 = vld [vmem:[%s182 + $0xd00] sm:$0xff]
      %v612 = vld [vmem:[%s182 + $0xd08] sm:$0xff]
      %v613 = vld [vmem:[%s182 + $0xd10] sm:$0xff]
      %v614 = vld [vmem:[%s182 + $0xd18] sm:$0xff]
      %v615 = vld [vmem:[%s182 + $0xd20] sm:$0xff]
      %v616 = vld [vmem:[%s182 + $0xd28] sm:$0xff]
      %v617 = vld [vmem:[%s182 + $0xd30] sm:$0xff]
      %v618 = vld [vmem:[%s182 + $0xd38] sm:$0xff]
      %v619 = vld [vmem:[%s182 + $0xd40] sm:$0xff]
      %v620 = vld [vmem:[%s182 + $0xd48] sm:$0xff]
      %v621 = vld [vmem:[%s182 + $0xd50] sm:$0xff]
      %v622 = vld [vmem:[%s182 + $0xd58] sm:$0xff]
      %v623 = vld [vmem:[%s182 + $0xd60] sm:$0xff]
      %v624 = vld [vmem:[%s182 + $0xd68] sm:$0xff]
      %v625 = vld [vmem:[%s182 + $0xd70] sm:$0xff]
      %v626 = vld [vmem:[%s182 + $0xd78] sm:$0xff]
      %v627 = vld [vmem:[%s182 + $0xd80] sm:$0xff]
      %v628 = vld [vmem:[%s182 + $0xd88] sm:$0xff]
      %v629 = vld [vmem:[%s182 + $0xd90] sm:$0xff]
      %v630 = vld [vmem:[%s182 + $0xd98] sm:$0xff]
      %v631 = vld [vmem:[%s182 + $0xda0] sm:$0xff]
      %v632 = vld [vmem:[%s182 + $0xda8] sm:$0xff]
      %v633 = vld [vmem:[%s182 + $0xdb0] sm:$0xff]
      %v634 = vld [vmem:[%s182 + $0xdb8] sm:$0xff]
      %v635 = vld [vmem:[%s182 + $0xdc0] sm:$0xff]
      %v636 = vld [vmem:[%s182 + $0xdc8] sm:$0xff]
      %v637 = vld [vmem:[%s182 + $0xdd0] sm:$0xff]
      %v638 = vld [vmem:[%s182 + $0xdd8] sm:$0xff]
      %v639 = vld [vmem:[%s182 + $0xde0] sm:$0xff]
      %v640 = vld [vmem:[%s182 + $0xde8] sm:$0xff]
      %v641 = vld [vmem:[%s182 + $0xdf0] sm:$0xff]
      %v642 = vld [vmem:[%s182 + $0xdf8] sm:$0xff]
      %v643 = vld [vmem:[%s182 + $0xe00] sm:$0xff]
      %v644 = vld [vmem:[%s182 + $0xe08] sm:$0xff]
      %v645 = vld [vmem:[%s182 + $0xe10] sm:$0xff]
      %v646 = vld [vmem:[%s182 + $0xe18] sm:$0xff]
      %v647 = vld [vmem:[%s182 + $0xe20] sm:$0xff]
      %v648 = vld [vmem:[%s182 + $0xe28] sm:$0xff]
      %v649 = vld [vmem:[%s182 + $0xe30] sm:$0xff]
      %v650 = vld [vmem:[%s182 + $0xe38] sm:$0xff]
      %v651 = vld [vmem:[%s182 + $0xe40] sm:$0xff]
      %v652 = vld [vmem:[%s182 + $0xe48] sm:$0xff]
      %v653 = vld [vmem:[%s182 + $0xe50] sm:$0xff]
      %v654 = vld [vmem:[%s182 + $0xe58] sm:$0xff]
      %v655 = vld [vmem:[%s182 + $0xe60] sm:$0xff]
      %v656 = vld [vmem:[%s182 + $0xe68] sm:$0xff]
      %v657 = vld [vmem:[%s182 + $0xe70] sm:$0xff]
      %v658 = vld [vmem:[%s182 + $0xe78] sm:$0xff]
      %v659 = vld [vmem:[%s182 + $0xe80] sm:$0xff]
      %v660 = vld [vmem:[%s182 + $0xe88] sm:$0xff]
      %v661 = vld [vmem:[%s182 + $0xe90] sm:$0xff]
      %v662 = vld [vmem:[%s182 + $0xe98] sm:$0xff]
      %v663 = vld [vmem:[%s182 + $0xea0] sm:$0xff]
      %v664 = vld [vmem:[%s182 + $0xea8] sm:$0xff]
      %v665 = vld [vmem:[%s182 + $0xeb0] sm:$0xff]
      %v666 = vld [vmem:[%s182 + $0xeb8] sm:$0xff]
      %v667 = vld [vmem:[%s182 + $0xec0] sm:$0xff]
      %v668 = vld [vmem:[%s182 + $0xec8] sm:$0xff]
      %v669 = vld [vmem:[%s182 + $0xed0] sm:$0xff]
      %v670 = vld [vmem:[%s182 + $0xed8] sm:$0xff]
      %v671 = vld [vmem:[%s182 + $0xee0] sm:$0xff]
      %v672 = vld [vmem:[%s182 + $0xee8] sm:$0xff]
      %v673 = vld [vmem:[%s182 + $0xef0] sm:$0xff]
      %v674 = vld [vmem:[%s182 + $0xef8] sm:$0xff]
      %v675 = vld [vmem:[%s182 + $0xf00] sm:$0xff]
      %v676 = vld [vmem:[%s182 + $0xf08] sm:$0xff]
      %v677 = vld [vmem:[%s182 + $0xf10] sm:$0xff]
      %v678 = vld [vmem:[%s182 + $0xf18] sm:$0xff]
      %v679 = vld [vmem:[%s182 + $0xf20] sm:$0xff]
      %v680 = vld [vmem:[%s182 + $0xf28] sm:$0xff]
      %v681 = vld [vmem:[%s182 + $0xf30] sm:$0xff]
      %v682 = vld [vmem:[%s182 + $0xf38] sm:$0xff]
      %v683 = vld [vmem:[%s182 + $0xf40] sm:$0xff]
      %v684 = vld [vmem:[%s182 + $0xf48] sm:$0xff]
      %v685 = vld [vmem:[%s182 + $0xf50] sm:$0xff]
      %v686 = vld [vmem:[%s182 + $0xf58] sm:$0xff]
      %v687 = vld [vmem:[%s182 + $0xf60] sm:$0xff]
      %v688 = vld [vmem:[%s182 + $0xf68] sm:$0xff]
      %v689 = vld [vmem:[%s182 + $0xf70] sm:$0xff]
      %v690 = vld [vmem:[%s182 + $0xf78] sm:$0xff]
      %v691 = vld [vmem:[%s182 + $0xf80] sm:$0xff]
      %v692 = vld [vmem:[%s182 + $0xf88] sm:$0xff]
      %v693 = vld [vmem:[%s182 + $0xf90] sm:$0xff]
      %v694 = vld [vmem:[%s182 + $0xf98] sm:$0xff]
      %v695 = vld [vmem:[%s182 + $0xfa0] sm:$0xff]
      %v696 = vld [vmem:[%s182 + $0xfa8] sm:$0xff]
      %v697 = vld [vmem:[%s182 + $0xfb0] sm:$0xff]
      %v698 = vld [vmem:[%s182 + $0xfb8] sm:$0xff]
      %v699 = vld [vmem:[%s182 + $0xfc0] sm:$0xff]
      %v700 = vld [vmem:[%s182 + $0xfc8] sm:$0xff]
      %v701 = vld [vmem:[%s182 + $0xfd0] sm:$0xff]
      %v702 = vld [vmem:[%s182 + $0xfd8] sm:$0xff]
      %v703 = vld [vmem:[%s182 + $0xfe0] sm:$0xff]
      %v704 = vld [vmem:[%s182 + $0xfe8] sm:$0xff]
      %v705 = vld [vmem:[%s182 + $0xff0] sm:$0xff]
      %v706 = vld [vmem:[%s182 + $0xff8] sm:$0xff]
      %v707 = vld [vmem:[%s182 + $0x1000] sm:$0xff]
      %v708 = vld [vmem:[%s182 + $0x1008] sm:$0xff]
      %v709 = vld [vmem:[%s182 + $0x1010] sm:$0xff]
      %v710 = vld [vmem:[%s182 + $0x1018] sm:$0xff]
      %v711 = vld [vmem:[%s182 + $0x1020] sm:$0xff]
      %v712 = vld [vmem:[%s182 + $0x1028] sm:$0xff]
      %v713 = vld [vmem:[%s182 + $0x1030] sm:$0xff]
      %v714 = vld [vmem:[%s182 + $0x1038] sm:$0xff]
      %v715 = vld [vmem:[%s182 + $0x1040] sm:$0xff]
      %v716 = vld [vmem:[%s182 + $0x1048] sm:$0xff]
      %v717 = vld [vmem:[%s182 + $0x1050] sm:$0xff]
      %v718 = vld [vmem:[%s182 + $0x1058] sm:$0xff]
      %v719 = vld [vmem:[%s182 + $0x1060] sm:$0xff]
      %v720 = vld [vmem:[%s182 + $0x1068] sm:$0xff]
      %v721 = vld [vmem:[%s182 + $0x1070] sm:$0xff]
      %v722 = vld [vmem:[%s182 + $0x1078] sm:$0xff]
      %v723 = vmax.f32 %v195, 0.0
      %v724 = vmax.f32 %v196, 0.0
      %v725 = vmax.f32 %v197, 0.0
      %v726 = vmax.f32 %v198, 0.0
      %v727 = vmax.f32 %v199, 0.0
      %v728 = vmax.f32 %v200, 0.0
      %v729 = vmax.f32 %v201, 0.0
      %v730 = vmax.f32 %v202, 0.0
      %v731 = vmax.f32 %v203, 0.0
      %v732 = vmax.f32 %v204, 0.0
      %v733 = vmax.f32 %v205, 0.0
      %v734 = vmax.f32 %v206, 0.0
      %v735 = vmax.f32 %v207, 0.0
      %v736 = vmax.f32 %v208, 0.0
      %v737 = vmax.f32 %v209, 0.0
      %v738 = vmax.f32 %v210, 0.0
      %v739 = vmax.f32 %v211, 0.0
      %v740 = vmax.f32 %v212, 0.0
      %v741 = vmax.f32 %v213, 0.0
      %v742 = vmax.f32 %v214, 0.0
      %v743 = vmax.f32 %v215, 0.0
      %v744 = vmax.f32 %v216, 0.0
      %v745 = vmax.f32 %v217, 0.0
      %v746 = vmax.f32 %v218, 0.0
      %v747 = vmax.f32 %v219, 0.0
      %v748 = vmax.f32 %v220, 0.0
      %v749 = vmax.f32 %v221, 0.0
      %v750 = vmax.f32 %v222, 0.0
      %v751 = vmax.f32 %v223, 0.0
      %v752 = vmax.f32 %v224, 0.0
      %v753 = vmax.f32 %v225, 0.0
      %v754 = vmax.f32 %v226, 0.0
      %v755 = vmax.f32 %v227, 0.0
      %v756 = vmax.f32 %v228, 0.0
      %v757 = vmax.f32 %v229, 0.0
      %v758 = vmax.f32 %v230, 0.0
      %v759 = vmax.f32 %v231, 0.0
      %v760 = vmax.f32 %v232, 0.0
      %v761 = vmax.f32 %v233, 0.0
      %v762 = vmax.f32 %v234, 0.0
      %v763 = vmax.f32 %v235, 0.0
      %v764 = vmax.f32 %v236, 0.0
      %v765 = vmax.f32 %v237, 0.0
      %v766 = vmax.f32 %v238, 0.0
      %v767 = vmax.f32 %v239, 0.0
      %v768 = vmax.f32 %v240, 0.0
      %v769 = vmax.f32 %v241, 0.0
      %v770 = vmax.f32 %v242, 0.0
      %v771 = vmax.f32 %v243, 0.0
      %v772 = vmax.f32 %v244, 0.0
      %v773 = vmax.f32 %v245, 0.0
      %v774 = vmax.f32 %v246, 0.0
      %v775 = vmax.f32 %v247, 0.0
      %v776 = vmax.f32 %v248, 0.0
      %v777 = vmax.f32 %v249, 0.0
      %v778 = vmax.f32 %v250, 0.0
      %v779 = vmax.f32 %v251, 0.0
      %v780 = vmax.f32 %v252, 0.0
      %v781 = vmax.f32 %v253, 0.0
      %v782 = vmax.f32 %v254, 0.0
      %v783 = vmax.f32 %v255, 0.0
      %v784 = vmax.f32 %v256, 0.0
      %v785 = vmax.f32 %v257, 0.0
      %v786 = vmax.f32 %v258, 0.0
      %v787 = vmax.f32 %v259, 0.0
      %v788 = vmax.f32 %v260, 0.0
      %v789 = vmax.f32 %v261, 0.0
      %v790 = vmax.f32 %v262, 0.0
      %v791 = vmax.f32 %v263, 0.0
      %v792 = vmax.f32 %v264, 0.0
      %v793 = vmax.f32 %v265, 0.0
      %v794 = vmax.f32 %v266, 0.0
      %v795 = vmax.f32 %v267, 0.0
      %v796 = vmax.f32 %v268, 0.0
      %v797 = vmax.f32 %v269, 0.0
      %v798 = vmax.f32 %v270, 0.0
      %v799 = vmax.f32 %v271, 0.0
      %v800 = vmax.f32 %v272, 0.0
      %v801 = vmax.f32 %v273, 0.0
      %v802 = vmax.f32 %v274, 0.0
      %v803 = vmax.f32 %v275, 0.0
      %v804 = vmax.f32 %v276, 0.0
      %v805 = vmax.f32 %v277, 0.0
      %v806 = vmax.f32 %v278, 0.0
      %v807 = vmax.f32 %v279, 0.0
      %v808 = vmax.f32 %v280, 0.0
      %v809 = vmax.f32 %v281, 0.0
      %v810 = vmax.f32 %v282, 0.0
      %v811 = vmax.f32 %v283, 0.0
      %v812 = vmax.f32 %v284, 0.0
      %v813 = vmax.f32 %v285, 0.0
      %v814 = vmax.f32 %v286, 0.0
      %v815 = vmax.f32 %v287, 0.0
      %v816 = vmax.f32 %v288, 0.0
      %v817 = vmax.f32 %v289, 0.0
      %v818 = vmax.f32 %v290, 0.0
      %v819 = vmax.f32 %v291, 0.0
      %v820 = vmax.f32 %v292, 0.0
      %v821 = vmax.f32 %v293, 0.0
      %v822 = vmax.f32 %v294, 0.0
      %v823 = vmax.f32 %v295, 0.0
      %v824 = vmax.f32 %v296, 0.0
      %v825 = vmax.f32 %v297, 0.0
      %v826 = vmax.f32 %v298, 0.0
      %v827 = vmax.f32 %v299, 0.0
      %v828 = vmax.f32 %v300, 0.0
      %v829 = vmax.f32 %v301, 0.0
      %v830 = vmax.f32 %v302, 0.0
      %v831 = vmax.f32 %v303, 0.0
      %v832 = vmax.f32 %v304, 0.0
      %v833 = vmax.f32 %v305, 0.0
      %v834 = vmax.f32 %v306, 0.0
      %v835 = vmax.f32 %v307, 0.0
      %v836 = vmax.f32 %v308, 0.0
      %v837 = vmax.f32 %v309, 0.0
      %v838 = vmax.f32 %v310, 0.0
      %v839 = vmax.f32 %v311, 0.0
      %v840 = vmax.f32 %v312, 0.0
      %v841 = vmax.f32 %v313, 0.0
      %v842 = vmax.f32 %v314, 0.0
      %v843 = vmax.f32 %v315, 0.0
      %v844 = vmax.f32 %v316, 0.0
      %v845 = vmax.f32 %v317, 0.0
      %v846 = vmax.f32 %v318, 0.0
      %v847 = vmax.f32 %v319, 0.0
      %v848 = vmax.f32 %v320, 0.0
      %v849 = vmax.f32 %v321, 0.0
      %v850 = vmax.f32 %v322, 0.0
      %v851 = vmax.f32 %v323, 0.0
      %v852 = vmax.f32 %v324, 0.0
      %v853 = vmax.f32 %v325, 0.0
      %v854 = vmax.f32 %v326, 0.0
      %v855 = vmax.f32 %v327, 0.0
      %v856 = vmax.f32 %v328, 0.0
      %v857 = vmax.f32 %v329, 0.0
      %v858 = vmax.f32 %v330, 0.0
      %v859 = vmax.f32 %v331, 0.0
      %v860 = vmax.f32 %v332, 0.0
      %v861 = vmax.f32 %v333, 0.0
      %v862 = vmax.f32 %v334, 0.0
      %v863 = vmax.f32 %v335, 0.0
      %v864 = vmax.f32 %v336, 0.0
      %v865 = vmax.f32 %v337, 0.0
      %v866 = vmax.f32 %v338, 0.0
      %v867 = vmax.f32 %v339, 0.0
      %v868 = vmax.f32 %v340, 0.0
      %v869 = vmax.f32 %v341, 0.0
      %v870 = vmax.f32 %v342, 0.0
      %v871 = vmax.f32 %v343, 0.0
      %v872 = vmax.f32 %v344, 0.0
      %v873 = vmax.f32 %v345, 0.0
      %v874 = vmax.f32 %v346, 0.0
      %v875 = vmax.f32 %v347, 0.0
      %v876 = vmax.f32 %v348, 0.0
      %v877 = vmax.f32 %v349, 0.0
      %v878 = vmax.f32 %v350, 0.0
      %v879 = vmax.f32 %v351, 0.0
      %v880 = vmax.f32 %v352, 0.0
      %v881 = vmax.f32 %v353, 0.0
      %v882 = vmax.f32 %v354, 0.0
      %v883 = vmax.f32 %v355, 0.0
      %v884 = vmax.f32 %v356, 0.0
      %v885 = vmax.f32 %v357, 0.0
      %v886 = vmax.f32 %v358, 0.0
      %v887 = vmax.f32 %v359, 0.0
      %v888 = vmax.f32 %v360, 0.0
      %v889 = vmax.f32 %v361, 0.0
      %v890 = vmax.f32 %v362, 0.0
      %v891 = vmax.f32 %v363, 0.0
      %v892 = vmax.f32 %v364, 0.0
      %v893 = vmax.f32 %v365, 0.0
      %v894 = vmax.f32 %v366, 0.0
      %v895 = vmax.f32 %v367, 0.0
      %v896 = vmax.f32 %v368, 0.0
      %v897 = vmax.f32 %v369, 0.0
      %v898 = vmax.f32 %v370, 0.0
      %v899 = vmax.f32 %v371, 0.0
      %v900 = vmax.f32 %v372, 0.0
      %v901 = vmax.f32 %v373, 0.0
      %v902 = vmax.f32 %v374, 0.0
      %v903 = vmax.f32 %v375, 0.0
      %v904 = vmax.f32 %v376, 0.0
      %v905 = vmax.f32 %v377, 0.0
      %v906 = vmax.f32 %v378, 0.0
      %v907 = vmax.f32 %v379, 0.0
      %v908 = vmax.f32 %v380, 0.0
      %v909 = vmax.f32 %v381, 0.0
      %v910 = vmax.f32 %v382, 0.0
      %v911 = vmax.f32 %v383, 0.0
      %v912 = vmax.f32 %v384, 0.0
      %v913 = vmax.f32 %v385, 0.0
      %v914 = vmax.f32 %v386, 0.0
      %v915 = vmax.f32 %v387, 0.0
      %v916 = vmax.f32 %v388, 0.0
      %v917 = vmax.f32 %v389, 0.0
      %v918 = vmax.f32 %v390, 0.0
      %v919 = vmax.f32 %v391, 0.0
      %v920 = vmax.f32 %v392, 0.0
      %v921 = vmax.f32 %v393, 0.0
      %v922 = vmax.f32 %v394, 0.0
      %v923 = vmax.f32 %v395, 0.0
      %v924 = vmax.f32 %v396, 0.0
      %v925 = vmax.f32 %v397, 0.0
      %v926 = vmax.f32 %v398, 0.0
      %v927 = vmax.f32 %v399, 0.0
      %v928 = vmax.f32 %v400, 0.0
      %v929 = vmax.f32 %v401, 0.0
      %v930 = vmax.f32 %v402, 0.0
      %v931 = vmax.f32 %v403, 0.0
      %v932 = vmax.f32 %v404, 0.0
      %v933 = vmax.f32 %v405, 0.0
      %v934 = vmax.f32 %v406, 0.0
      %v935 = vmax.f32 %v407, 0.0
      %v936 = vmax.f32 %v408, 0.0
      %v937 = vmax.f32 %v409, 0.0
      %v938 = vmax.f32 %v410, 0.0
      %v939 = vmax.f32 %v411, 0.0
      %v940 = vmax.f32 %v412, 0.0
      %v941 = vmax.f32 %v413, 0.0
      %v942 = vmax.f32 %v414, 0.0
      %v943 = vmax.f32 %v415, 0.0
      %v944 = vmax.f32 %v416, 0.0
      %v945 = vmax.f32 %v417, 0.0
      %v946 = vmax.f32 %v418, 0.0
      %v947 = vmax.f32 %v419, 0.0
      %v948 = vmax.f32 %v420, 0.0
      %v949 = vmax.f32 %v421, 0.0
      %v950 = vmax.f32 %v422, 0.0
      %v951 = vmax.f32 %v423, 0.0
      %v952 = vmax.f32 %v424, 0.0
      %v953 = vmax.f32 %v425, 0.0
      %v954 = vmax.f32 %v426, 0.0
      %v955 = vmax.f32 %v427, 0.0
      %v956 = vmax.f32 %v428, 0.0
      %v957 = vmax.f32 %v429, 0.0
      %v958 = vmax.f32 %v430, 0.0
      %v959 = vmax.f32 %v431, 0.0
      %v960 = vmax.f32 %v432, 0.0
      %v961 = vmax.f32 %v433, 0.0
      %v962 = vmax.f32 %v434, 0.0
      %v963 = vmax.f32 %v435, 0.0
      %v964 = vmax.f32 %v436, 0.0
      %v965 = vmax.f32 %v437, 0.0
      %v966 = vmax.f32 %v438, 0.0
      %v967 = vmax.f32 %v439, 0.0
      %v968 = vmax.f32 %v440, 0.0
      %v969 = vmax.f32 %v441, 0.0
      %v970 = vmax.f32 %v442, 0.0
      %v971 = vmax.f32 %v443, 0.0
      %v972 = vmax.f32 %v444, 0.0
      %v973 = vmax.f32 %v445, 0.0
      %v974 = vmax.f32 %v446, 0.0
      %v975 = vmax.f32 %v447, 0.0
      %v976 = vmax.f32 %v448, 0.0
      %v977 = vmax.f32 %v449, 0.0
      %v978 = vmax.f32 %v450, 0.0
      %v979 = vmax.f32 %v451, 0.0
      %v980 = vmax.f32 %v452, 0.0
      %v981 = vmax.f32 %v453, 0.0
      %v982 = vmax.f32 %v454, 0.0
      %v983 = vmax.f32 %v455, 0.0
      %v984 = vmax.f32 %v456, 0.0
      %v985 = vmax.f32 %v457, 0.0
      %v986 = vmax.f32 %v458, 0.0
      %v987 = vmax.f32 %v459, 0.0
      %v988 = vmax.f32 %v460, 0.0
      %v989 = vmax.f32 %v461, 0.0
      %v990 = vmax.f32 %v462, 0.0
      %v991 = vmax.f32 %v463, 0.0
      %v992 = vmax.f32 %v464, 0.0
      %v993 = vmax.f32 %v465, 0.0
      %v994 = vmax.f32 %v466, 0.0
      %v995 = vmax.f32 %v467, 0.0
      %v996 = vmax.f32 %v468, 0.0
      %v997 = vmax.f32 %v469, 0.0
      %v998 = vmax.f32 %v470, 0.0
      %v999 = vmax.f32 %v471, 0.0
      %v1000 = vmax.f32 %v472, 0.0
      %v1001 = vmax.f32 %v473, 0.0
      %v1002 = vmax.f32 %v474, 0.0
      %v1003 = vmax.f32 %v475, 0.0
      %v1004 = vmax.f32 %v476, 0.0
      %v1005 = vmax.f32 %v477, 0.0
      %v1006 = vmax.f32 %v478, 0.0
      %v1007 = vmax.f32 %v479, 0.0
      %v1008 = vmax.f32 %v480, 0.0
      %v1009 = vmax.f32 %v481, 0.0
      %v1010 = vmax.f32 %v482, 0.0
      %v1011 = vmax.f32 %v483, 0.0
      %v1012 = vmax.f32 %v484, 0.0
      %v1013 = vmax.f32 %v485, 0.0
      %v1014 = vmax.f32 %v486, 0.0
      %v1015 = vmax.f32 %v487, 0.0
      %v1016 = vmax.f32 %v488, 0.0
      %v1017 = vmax.f32 %v489, 0.0
      %v1018 = vmax.f32 %v490, 0.0
      %v1019 = vmax.f32 %v491, 0.0
      %v1020 = vmax.f32 %v492, 0.0
      %v1021 = vmax.f32 %v493, 0.0
      %v1022 = vmax.f32 %v494, 0.0
      %v1023 = vmax.f32 %v495, 0.0
      %v1024 = vmax.f32 %v496, 0.0
      %v1025 = vmax.f32 %v497, 0.0
      %v1026 = vmax.f32 %v498, 0.0
      %v1027 = vmax.f32 %v499, 0.0
      %v1028 = vmax.f32 %v500, 0.0
      %v1029 = vmax.f32 %v501, 0.0
      %v1030 = vmax.f32 %v502, 0.0
      %v1031 = vmax.f32 %v503, 0.0
      %v1032 = vmax.f32 %v504, 0.0
      %v1033 = vmax.f32 %v505, 0.0
      %v1034 = vmax.f32 %v506, 0.0
      %v1035 = vmax.f32 %v507, 0.0
      %v1036 = vmax.f32 %v508, 0.0
      %v1037 = vmax.f32 %v509, 0.0
      %v1038 = vmax.f32 %v510, 0.0
      %v1039 = vmax.f32 %v511, 0.0
      %v1040 = vmax.f32 %v512, 0.0
      %v1041 = vmax.f32 %v513, 0.0
      %v1042 = vmax.f32 %v514, 0.0
      %v1043 = vmax.f32 %v515, 0.0
      %v1044 = vmax.f32 %v516, 0.0
      %v1045 = vmax.f32 %v517, 0.0
      %v1046 = vmax.f32 %v518, 0.0
      %v1047 = vmax.f32 %v519, 0.0
      %v1048 = vmax.f32 %v520, 0.0
      %v1049 = vmax.f32 %v521, 0.0
      %v1050 = vmax.f32 %v522, 0.0
      %v1051 = vmax.f32 %v523, 0.0
      %v1052 = vmax.f32 %v524, 0.0
      %v1053 = vmax.f32 %v525, 0.0
      %v1054 = vmax.f32 %v526, 0.0
      %v1055 = vmax.f32 %v527, 0.0
      %v1056 = vmax.f32 %v528, 0.0
      %v1057 = vmax.f32 %v529, 0.0
      %v1058 = vmax.f32 %v530, 0.0
      %v1059 = vmax.f32 %v531, 0.0
      %v1060 = vmax.f32 %v532, 0.0
      %v1061 = vmax.f32 %v533, 0.0
      %v1062 = vmax.f32 %v534, 0.0
      %v1063 = vmax.f32 %v535, 0.0
      %v1064 = vmax.f32 %v536, 0.0
      %v1065 = vmax.f32 %v537, 0.0
      %v1066 = vmax.f32 %v538, 0.0
      %v1067 = vmax.f32 %v539, 0.0
      %v1068 = vmax.f32 %v540, 0.0
      %v1069 = vmax.f32 %v541, 0.0
      %v1070 = vmax.f32 %v542, 0.0
      %v1071 = vmax.f32 %v543, 0.0
      %v1072 = vmax.f32 %v544, 0.0
      %v1073 = vmax.f32 %v545, 0.0
      %v1074 = vmax.f32 %v546, 0.0
      %v1075 = vmax.f32 %v547, 0.0
      %v1076 = vmax.f32 %v548, 0.0
      %v1077 = vmax.f32 %v549, 0.0
      %v1078 = vmax.f32 %v550, 0.0
      %v1079 = vmax.f32 %v551, 0.0
      %v1080 = vmax.f32 %v552, 0.0
      %v1081 = vmax.f32 %v553, 0.0
      %v1082 = vmax.f32 %v554, 0.0
      %v1083 = vmax.f32 %v555, 0.0
      %v1084 = vmax.f32 %v556, 0.0
      %v1085 = vmax.f32 %v557, 0.0
      %v1086 = vmax.f32 %v558, 0.0
      %v1087 = vmax.f32 %v559, 0.0
      %v1088 = vmax.f32 %v560, 0.0
      %v1089 = vmax.f32 %v561, 0.0
      %v1090 = vmax.f32 %v562, 0.0
      %v1091 = vmax.f32 %v563, 0.0
      %v1092 = vmax.f32 %v564, 0.0
      %v1093 = vmax.f32 %v565, 0.0
      %v1094 = vmax.f32 %v566, 0.0
      %v1095 = vmax.f32 %v567, 0.0
      %v1096 = vmax.f32 %v568, 0.0
      %v1097 = vmax.f32 %v569, 0.0
      %v1098 = vmax.f32 %v570, 0.0
      %v1099 = vmax.f32 %v571, 0.0
      %v1100 = vmax.f32 %v572, 0.0
      %v1101 = vmax.f32 %v573, 0.0
      %v1102 = vmax.f32 %v574, 0.0
      %v1103 = vmax.f32 %v575, 0.0
      %v1104 = vmax.f32 %v576, 0.0
      %v1105 = vmax.f32 %v577, 0.0
      %v1106 = vmax.f32 %v578, 0.0
      %v1107 = vmax.f32 %v579, 0.0
      %v1108 = vmax.f32 %v580, 0.0
      %v1109 = vmax.f32 %v581, 0.0
      %v1110 = vmax.f32 %v582, 0.0
      %v1111 = vmax.f32 %v583, 0.0
      %v1112 = vmax.f32 %v584, 0.0
      %v1113 = vmax.f32 %v585, 0.0
      %v1114 = vmax.f32 %v586, 0.0
      %v1115 = vmax.f32 %v587, 0.0
      %v1116 = vmax.f32 %v588, 0.0
      %v1117 = vmax.f32 %v589, 0.0
      %v1118 = vmax.f32 %v590, 0.0
      %v1119 = vmax.f32 %v591, 0.0
      %v1120 = vmax.f32 %v592, 0.0
      %v1121 = vmax.f32 %v593, 0.0
      %v1122 = vmax.f32 %v594, 0.0
      %v1123 = vmax.f32 %v595, 0.0
      %v1124 = vmax.f32 %v596, 0.0
      %v1125 = vmax.f32 %v597, 0.0
      %v1126 = vmax.f32 %v598, 0.0
      %v1127 = vmax.f32 %v599, 0.0
      %v1128 = vmax.f32 %v600, 0.0
      %v1129 = vmax.f32 %v601, 0.0
      %v1130 = vmax.f32 %v602, 0.0
      %v1131 = vmax.f32 %v603, 0.0
      %v1132 = vmax.f32 %v604, 0.0
      %v1133 = vmax.f32 %v605, 0.0
      %v1134 = vmax.f32 %v606, 0.0
      %v1135 = vmax.f32 %v607, 0.0
      %v1136 = vmax.f32 %v608, 0.0
      %v1137 = vmax.f32 %v609, 0.0
      %v1138 = vmax.f32 %v610, 0.0
      %v1139 = vmax.f32 %v611, 0.0
      %v1140 = vmax.f32 %v612, 0.0
      %v1141 = vmax.f32 %v613, 0.0
      %v1142 = vmax.f32 %v614, 0.0
      %v1143 = vmax.f32 %v615, 0.0
      %v1144 = vmax.f32 %v616, 0.0
      %v1145 = vmax.f32 %v617, 0.0
      %v1146 = vmax.f32 %v618, 0.0
      %v1147 = vmax.f32 %v619, 0.0
      %v1148 = vmax.f32 %v620, 0.0
      %v1149 = vmax.f32 %v621, 0.0
      %v1150 = vmax.f32 %v622, 0.0
      %v1151 = vmax.f32 %v623, 0.0
      %v1152 = vmax.f32 %v624, 0.0
      %v1153 = vmax.f32 %v625, 0.0
      %v1154 = vmax.f32 %v626, 0.0
      %v1155 = vmax.f32 %v627, 0.0
      %v1156 = vmax.f32 %v628, 0.0
      %v1157 = vmax.f32 %v629, 0.0
      %v1158 = vmax.f32 %v630, 0.0
      %v1159 = vmax.f32 %v631, 0.0
      %v1160 = vmax.f32 %v632, 0.0
      %v1161 = vmax.f32 %v633, 0.0
      %v1162 = vmax.f32 %v634, 0.0
      %v1163 = vmax.f32 %v635, 0.0
      %v1164 = vmax.f32 %v636, 0.0
      %v1165 = vmax.f32 %v637, 0.0
      %v1166 = vmax.f32 %v638, 0.0
      %v1167 = vmax.f32 %v639, 0.0
      %v1168 = vmax.f32 %v640, 0.0
      %v1169 = vmax.f32 %v641, 0.0
      %v1170 = vmax.f32 %v642, 0.0
      %v1171 = vmax.f32 %v643, 0.0
      %v1172 = vmax.f32 %v644, 0.0
      %v1173 = vmax.f32 %v645, 0.0
      %v1174 = vmax.f32 %v646, 0.0
      %v1175 = vmax.f32 %v647, 0.0
      %v1176 = vmax.f32 %v648, 0.0
      %v1177 = vmax.f32 %v649, 0.0
      %v1178 = vmax.f32 %v650, 0.0
      %v1179 = vmax.f32 %v651, 0.0
      %v1180 = vmax.f32 %v652, 0.0
      %v1181 = vmax.f32 %v653, 0.0
      %v1182 = vmax.f32 %v654, 0.0
      %v1183 = vmax.f32 %v655, 0.0
      %v1184 = vmax.f32 %v656, 0.0
      %v1185 = vmax.f32 %v657, 0.0
      %v1186 = vmax.f32 %v658, 0.0
      %v1187 = vmax.f32 %v659, 0.0
      %v1188 = vmax.f32 %v660, 0.0
      %v1189 = vmax.f32 %v661, 0.0
      %v1190 = vmax.f32 %v662, 0.0
      %v1191 = vmax.f32 %v663, 0.0
      %v1192 = vmax.f32 %v664, 0.0
      %v1193 = vmax.f32 %v665, 0.0
      %v1194 = vmax.f32 %v666, 0.0
      %v1195 = vmax.f32 %v667, 0.0
      %v1196 = vmax.f32 %v668, 0.0
      %v1197 = vmax.f32 %v669, 0.0
      %v1198 = vmax.f32 %v670, 0.0
      %v1199 = vmax.f32 %v671, 0.0
      %v1200 = vmax.f32 %v672, 0.0
      %v1201 = vmax.f32 %v673, 0.0
      %v1202 = vmax.f32 %v674, 0.0
      %v1203 = vmax.f32 %v675, 0.0
      %v1204 = vmax.f32 %v676, 0.0
      %v1205 = vmax.f32 %v677, 0.0
      %v1206 = vmax.f32 %v678, 0.0
      %v1207 = vmax.f32 %v679, 0.0
      %v1208 = vmax.f32 %v680, 0.0
      %v1209 = vmax.f32 %v681, 0.0
      %v1210 = vmax.f32 %v682, 0.0
      %v1211 = vmax.f32 %v683, 0.0
      %v1212 = vmax.f32 %v684, 0.0
      %v1213 = vmax.f32 %v685, 0.0
      %v1214 = vmax.f32 %v686, 0.0
      %v1215 = vmax.f32 %v687, 0.0
      %v1216 = vmax.f32 %v688, 0.0
      %v1217 = vmax.f32 %v689, 0.0
      %v1218 = vmax.f32 %v690, 0.0
      %v1219 = vmax.f32 %v691, 0.0
      %v1220 = vmax.f32 %v692, 0.0
      %v1221 = vmax.f32 %v693, 0.0
      %v1222 = vmax.f32 %v694, 0.0
      %v1223 = vmax.f32 %v695, 0.0
      %v1224 = vmax.f32 %v696, 0.0
      %v1225 = vmax.f32 %v697, 0.0
      %v1226 = vmax.f32 %v698, 0.0
      %v1227 = vmax.f32 %v699, 0.0
      %v1228 = vmax.f32 %v700, 0.0
      %v1229 = vmax.f32 %v701, 0.0
      %v1230 = vmax.f32 %v702, 0.0
      %v1231 = vmax.f32 %v703, 0.0
      %v1232 = vmax.f32 %v704, 0.0
      %v1233 = vmax.f32 %v705, 0.0
      %v1234 = vmax.f32 %v706, 0.0
      %v1235 = vmax.f32 %v707, 0.0
      %v1236 = vmax.f32 %v708, 0.0
      %v1237 = vmax.f32 %v709, 0.0
      %v1238 = vmax.f32 %v710, 0.0
      %v1239 = vmax.f32 %v711, 0.0
      %v1240 = vmax.f32 %v712, 0.0
      %v1241 = vmax.f32 %v713, 0.0
      %v1242 = vmax.f32 %v714, 0.0
      %v1243 = vmax.f32 %v715, 0.0
      %v1244 = vmax.f32 %v716, 0.0
      %v1245 = vmax.f32 %v717, 0.0
      %v1246 = vmax.f32 %v718, 0.0
      %v1247 = vmax.f32 %v719, 0.0
      %v1248 = vmax.f32 %v720, 0.0
      %v1249 = vmax.f32 %v721, 0.0
      %v1250 = vmax.f32 %v722, 0.0
      %v1251 = vpack.c.bf16 %v725, %v723
      %v1252 = vpack.c.bf16 %v726, %v724
      %v1253 = vpack.c.bf16 %v729, %v727
      %v1254 = vpack.c.bf16 %v730, %v728
      %v1255 = vpack.c.bf16 %v733, %v731
      %v1256 = vpack.c.bf16 %v734, %v732
      %v1257 = vpack.c.bf16 %v737, %v735
      %v1258 = vpack.c.bf16 %v738, %v736
      %v1259 = vpack.c.bf16 %v741, %v739
      %v1260 = vpack.c.bf16 %v742, %v740
      %v1261 = vpack.c.bf16 %v745, %v743
      %v1262 = vpack.c.bf16 %v746, %v744
      %v1263 = vpack.c.bf16 %v749, %v747
      %v1264 = vpack.c.bf16 %v750, %v748
      %v1265 = vpack.c.bf16 %v753, %v751
      %v1266 = vpack.c.bf16 %v754, %v752
      %v1267 = vpack.c.bf16 %v757, %v755
      %v1268 = vpack.c.bf16 %v758, %v756
      %v1269 = vpack.c.bf16 %v761, %v759
      %v1270 = vpack.c.bf16 %v762, %v760
      %v1271 = vpack.c.bf16 %v765, %v763
      %v1272 = vpack.c.bf16 %v766, %v764
      %v1273 = vpack.c.bf16 %v769, %v767
      %v1274 = vpack.c.bf16 %v770, %v768
      %v1275 = vpack.c.bf16 %v773, %v771
      %v1276 = vpack.c.bf16 %v774, %v772
      %v1277 = vpack.c.bf16 %v777, %v775
      %v1278 = vpack.c.bf16 %v778, %v776
      %v1279 = vpack.c.bf16 %v781, %v779
      %v1280 = vpack.c.bf16 %v782, %v780
      %v1281 = vpack.c.bf16 %v785, %v783
      %v1282 = vpack.c.bf16 %v786, %v784
      %v1283 = vpack.c.bf16 %v789, %v787
      %v1284 = vpack.c.bf16 %v790, %v788
      %v1285 = vpack.c.bf16 %v793, %v791
      %v1286 = vpack.c.bf16 %v794, %v792
      %v1287 = vpack.c.bf16 %v797, %v795
      %v1288 = vpack.c.bf16 %v798, %v796
      %v1289 = vpack.c.bf16 %v801, %v799
      %v1290 = vpack.c.bf16 %v802, %v800
      %v1291 = vpack.c.bf16 %v805, %v803
      %v1292 = vpack.c.bf16 %v806, %v804
      %v1293 = vpack.c.bf16 %v809, %v807
      %v1294 = vpack.c.bf16 %v810, %v808
      %v1295 = vpack.c.bf16 %v813, %v811
      %v1296 = vpack.c.bf16 %v814, %v812
      %v1297 = vpack.c.bf16 %v817, %v815
      %v1298 = vpack.c.bf16 %v818, %v816
      %v1299 = vpack.c.bf16 %v821, %v819
      %v1300 = vpack.c.bf16 %v822, %v820
      %v1301 = vpack.c.bf16 %v825, %v823
      %v1302 = vpack.c.bf16 %v826, %v824
      %v1303 = vpack.c.bf16 %v829, %v827
      %v1304 = vpack.c.bf16 %v830, %v828
      %v1305 = vpack.c.bf16 %v833, %v831
      %v1306 = vpack.c.bf16 %v834, %v832
      %v1307 = vpack.c.bf16 %v837, %v835
      %v1308 = vpack.c.bf16 %v838, %v836
      %v1309 = vpack.c.bf16 %v841, %v839
      %v1310 = vpack.c.bf16 %v842, %v840
      %v1311 = vpack.c.bf16 %v845, %v843
      %v1312 = vpack.c.bf16 %v846, %v844
      %v1313 = vpack.c.bf16 %v849, %v847
      %v1314 = vpack.c.bf16 %v850, %v848
      %v1315 = vpack.c.bf16 %v853, %v851
      %v1316 = vpack.c.bf16 %v854, %v852
      %v1317 = vpack.c.bf16 %v857, %v855
      %v1318 = vpack.c.bf16 %v858, %v856
      %v1319 = vpack.c.bf16 %v861, %v859
      %v1320 = vpack.c.bf16 %v862, %v860
      %v1321 = vpack.c.bf16 %v865, %v863
      %v1322 = vpack.c.bf16 %v866, %v864
      %v1323 = vpack.c.bf16 %v869, %v867
      %v1324 = vpack.c.bf16 %v870, %v868
      %v1325 = vpack.c.bf16 %v873, %v871
      %v1326 = vpack.c.bf16 %v874, %v872
      %v1327 = vpack.c.bf16 %v877, %v875
      %v1328 = vpack.c.bf16 %v878, %v876
      %v1329 = vpack.c.bf16 %v881, %v879
      %v1330 = vpack.c.bf16 %v882, %v880
      %v1331 = vpack.c.bf16 %v885, %v883
      %v1332 = vpack.c.bf16 %v886, %v884
      %v1333 = vpack.c.bf16 %v889, %v887
      %v1334 = vpack.c.bf16 %v890, %v888
      %v1335 = vpack.c.bf16 %v893, %v891
      %v1336 = vpack.c.bf16 %v894, %v892
      %v1337 = vpack.c.bf16 %v897, %v895
      %v1338 = vpack.c.bf16 %v898, %v896
      %v1339 = vpack.c.bf16 %v901, %v899
      %v1340 = vpack.c.bf16 %v902, %v900
      %v1341 = vpack.c.bf16 %v905, %v903
      %v1342 = vpack.c.bf16 %v906, %v904
      %v1343 = vpack.c.bf16 %v909, %v907
      %v1344 = vpack.c.bf16 %v910, %v908
      %v1345 = vpack.c.bf16 %v913, %v911
      %v1346 = vpack.c.bf16 %v914, %v912
      %v1347 = vpack.c.bf16 %v917, %v915
      %v1348 = vpack.c.bf16 %v918, %v916
      %v1349 = vpack.c.bf16 %v921, %v919
      %v1350 = vpack.c.bf16 %v922, %v920
      %v1351 = vpack.c.bf16 %v925, %v923
      %v1352 = vpack.c.bf16 %v926, %v924
      %v1353 = vpack.c.bf16 %v929, %v927
      %v1354 = vpack.c.bf16 %v930, %v928
      %v1355 = vpack.c.bf16 %v933, %v931
      %v1356 = vpack.c.bf16 %v934, %v932
      %v1357 = vpack.c.bf16 %v937, %v935
      %v1358 = vpack.c.bf16 %v938, %v936
      %v1359 = vpack.c.bf16 %v941, %v939
      %v1360 = vpack.c.bf16 %v942, %v940
      %v1361 = vpack.c.bf16 %v945, %v943
      %v1362 = vpack.c.bf16 %v946, %v944
      %v1363 = vpack.c.bf16 %v949, %v947
      %v1364 = vpack.c.bf16 %v950, %v948
      %v1365 = vpack.c.bf16 %v953, %v951
      %v1366 = vpack.c.bf16 %v954, %v952
      %v1367 = vpack.c.bf16 %v957, %v955
      %v1368 = vpack.c.bf16 %v958, %v956
      %v1369 = vpack.c.bf16 %v961, %v959
      %v1370 = vpack.c.bf16 %v962, %v960
      %v1371 = vpack.c.bf16 %v965, %v963
      %v1372 = vpack.c.bf16 %v966, %v964
      %v1373 = vpack.c.bf16 %v969, %v967
      %v1374 = vpack.c.bf16 %v970, %v968
      %v1375 = vpack.c.bf16 %v973, %v971
      %v1376 = vpack.c.bf16 %v974, %v972
      %v1377 = vpack.c.bf16 %v977, %v975
      %v1378 = vpack.c.bf16 %v978, %v976
      %v1379 = vpack.c.bf16 %v981, %v979
      %v1380 = vpack.c.bf16 %v982, %v980
      %v1381 = vpack.c.bf16 %v985, %v983
      %v1382 = vpack.c.bf16 %v986, %v984
      %v1383 = vpack.c.bf16 %v989, %v987
      %v1384 = vpack.c.bf16 %v990, %v988
      %v1385 = vpack.c.bf16 %v993, %v991
      %v1386 = vpack.c.bf16 %v994, %v992
      %v1387 = vpack.c.bf16 %v997, %v995
      %v1388 = vpack.c.bf16 %v998, %v996
      %v1389 = vpack.c.bf16 %v1001, %v999
      %v1390 = vpack.c.bf16 %v1002, %v1000
      %v1391 = vpack.c.bf16 %v1005, %v1003
      %v1392 = vpack.c.bf16 %v1006, %v1004
      %v1393 = vpack.c.bf16 %v1009, %v1007
      %v1394 = vpack.c.bf16 %v1010, %v1008
      %v1395 = vpack.c.bf16 %v1013, %v1011
      %v1396 = vpack.c.bf16 %v1014, %v1012
      %v1397 = vpack.c.bf16 %v1017, %v1015
      %v1398 = vpack.c.bf16 %v1018, %v1016
      %v1399 = vpack.c.bf16 %v1021, %v1019
      %v1400 = vpack.c.bf16 %v1022, %v1020
      %v1401 = vpack.c.bf16 %v1025, %v1023
      %v1402 = vpack.c.bf16 %v1026, %v1024
      %v1403 = vpack.c.bf16 %v1029, %v1027
      %v1404 = vpack.c.bf16 %v1030, %v1028
      %v1405 = vpack.c.bf16 %v1033, %v1031
      %v1406 = vpack.c.bf16 %v1034, %v1032
      %v1407 = vpack.c.bf16 %v1037, %v1035
      %v1408 = vpack.c.bf16 %v1038, %v1036
      %v1409 = vpack.c.bf16 %v1041, %v1039
      %v1410 = vpack.c.bf16 %v1042, %v1040
      %v1411 = vpack.c.bf16 %v1045, %v1043
      %v1412 = vpack.c.bf16 %v1046, %v1044
      %v1413 = vpack.c.bf16 %v1049, %v1047
      %v1414 = vpack.c.bf16 %v1050, %v1048
      %v1415 = vpack.c.bf16 %v1053, %v1051
      %v1416 = vpack.c.bf16 %v1054, %v1052
      %v1417 = vpack.c.bf16 %v1057, %v1055
      %v1418 = vpack.c.bf16 %v1058, %v1056
      %v1419 = vpack.c.bf16 %v1061, %v1059
      %v1420 = vpack.c.bf16 %v1062, %v1060
      %v1421 = vpack.c.bf16 %v1065, %v1063
      %v1422 = vpack.c.bf16 %v1066, %v1064
      %v1423 = vpack.c.bf16 %v1069, %v1067
      %v1424 = vpack.c.bf16 %v1070, %v1068
      %v1425 = vpack.c.bf16 %v1073, %v1071
      %v1426 = vpack.c.bf16 %v1074, %v1072
      %v1427 = vpack.c.bf16 %v1077, %v1075
      %v1428 = vpack.c.bf16 %v1078, %v1076
      %v1429 = vpack.c.bf16 %v1081, %v1079
      %v1430 = vpack.c.bf16 %v1082, %v1080
      %v1431 = vpack.c.bf16 %v1085, %v1083
      %v1432 = vpack.c.bf16 %v1086, %v1084
      %v1433 = vpack.c.bf16 %v1089, %v1087
      %v1434 = vpack.c.bf16 %v1090, %v1088
      %v1435 = vpack.c.bf16 %v1093, %v1091
      %v1436 = vpack.c.bf16 %v1094, %v1092
      %v1437 = vpack.c.bf16 %v1097, %v1095
      %v1438 = vpack.c.bf16 %v1098, %v1096
      %v1439 = vpack.c.bf16 %v1101, %v1099
      %v1440 = vpack.c.bf16 %v1102, %v1100
      %v1441 = vpack.c.bf16 %v1105, %v1103
      %v1442 = vpack.c.bf16 %v1106, %v1104
      %v1443 = vpack.c.bf16 %v1109, %v1107
      %v1444 = vpack.c.bf16 %v1110, %v1108
      %v1445 = vpack.c.bf16 %v1113, %v1111
      %v1446 = vpack.c.bf16 %v1114, %v1112
      %v1447 = vpack.c.bf16 %v1117, %v1115
      %v1448 = vpack.c.bf16 %v1118, %v1116
      %v1449 = vpack.c.bf16 %v1121, %v1119
      %v1450 = vpack.c.bf16 %v1122, %v1120
      %v1451 = vpack.c.bf16 %v1125, %v1123
      %v1452 = vpack.c.bf16 %v1126, %v1124
      %v1453 = vpack.c.bf16 %v1129, %v1127
      %v1454 = vpack.c.bf16 %v1130, %v1128
      %v1455 = vpack.c.bf16 %v1133, %v1131
      %v1456 = vpack.c.bf16 %v1134, %v1132
      %v1457 = vpack.c.bf16 %v1137, %v1135
      %v1458 = vpack.c.bf16 %v1138, %v1136
      %v1459 = vpack.c.bf16 %v1141, %v1139
      %v1460 = vpack.c.bf16 %v1142, %v1140
      %v1461 = vpack.c.bf16 %v1145, %v1143
      %v1462 = vpack.c.bf16 %v1146, %v1144
      %v1463 = vpack.c.bf16 %v1149, %v1147
      %v1464 = vpack.c.bf16 %v1150, %v1148
      %v1465 = vpack.c.bf16 %v1153, %v1151
      %v1466 = vpack.c.bf16 %v1154, %v1152
      %v1467 = vpack.c.bf16 %v1157, %v1155
      %v1468 = vpack.c.bf16 %v1158, %v1156
      %v1469 = vpack.c.bf16 %v1161, %v1159
      %v1470 = vpack.c.bf16 %v1162, %v1160
      %v1471 = vpack.c.bf16 %v1165, %v1163
      %v1472 = vpack.c.bf16 %v1166, %v1164
      %v1473 = vpack.c.bf16 %v1169, %v1167
      %v1474 = vpack.c.bf16 %v1170, %v1168
      %v1475 = vpack.c.bf16 %v1173, %v1171
      %v1476 = vpack.c.bf16 %v1174, %v1172
      %v1477 = vpack.c.bf16 %v1177, %v1175
      %v1478 = vpack.c.bf16 %v1178, %v1176
      %v1479 = vpack.c.bf16 %v1181, %v1179
      %v1480 = vpack.c.bf16 %v1182, %v1180
      %v1481 = vpack.c.bf16 %v1185, %v1183
      %v1482 = vpack.c.bf16 %v1186, %v1184
      %v1483 = vpack.c.bf16 %v1189, %v1187
      %v1484 = vpack.c.bf16 %v1190, %v1188
      %v1485 = vpack.c.bf16 %v1193, %v1191
      %v1486 = vpack.c.bf16 %v1194, %v1192
      %v1487 = vpack.c.bf16 %v1197, %v1195
      %v1488 = vpack.c.bf16 %v1198, %v1196
      %v1489 = vpack.c.bf16 %v1201, %v1199
      %v1490 = vpack.c.bf16 %v1202, %v1200
      %v1491 = vpack.c.bf16 %v1205, %v1203
      %v1492 = vpack.c.bf16 %v1206, %v1204
      %v1493 = vpack.c.bf16 %v1209, %v1207
      %v1494 = vpack.c.bf16 %v1210, %v1208
      %v1495 = vpack.c.bf16 %v1213, %v1211
      %v1496 = vpack.c.bf16 %v1214, %v1212
      %v1497 = vpack.c.bf16 %v1217, %v1215
      %v1498 = vpack.c.bf16 %v1218, %v1216
      %v1499 = vpack.c.bf16 %v1221, %v1219
      %v1500 = vpack.c.bf16 %v1222, %v1220
      %v1501 = vpack.c.bf16 %v1225, %v1223
      %v1502 = vpack.c.bf16 %v1226, %v1224
      %v1503 = vpack.c.bf16 %v1229, %v1227
      %v1504 = vpack.c.bf16 %v1230, %v1228
      %v1505 = vpack.c.bf16 %v1233, %v1231
      %v1506 = vpack.c.bf16 %v1234, %v1232
      %v1507 = vpack.c.bf16 %v1237, %v1235
      %v1508 = vpack.c.bf16 %v1238, %v1236
      %v1509 = vpack.c.bf16 %v1241, %v1239
      %v1510 = vpack.c.bf16 %v1242, %v1240
      %v1511 = vpack.c.bf16 %v1245, %v1243
      %v1512 = vpack.c.bf16 %v1246, %v1244
      %v1513 = vpack.c.bf16 %v1249, %v1247
      %v1514 = vpack.c.bf16 %v1250, %v1248
      %v1515 = vld [vmem:[%s176] sm:$0xff]
      %v1516 = vld [vmem:[%s176 + $0x8] sm:$0xff]
      %v1517 = vld [vmem:[%s176 + $0x10] sm:$0xff]
      %v1518 = vld [vmem:[%s176 + $0x18] sm:$0xff]
      %v1519 = vld [vmem:[%s176 + $0x20] sm:$0xff]
      %v1520 = vld [vmem:[%s176 + $0x28] sm:$0xff]
      %v1521 = vld [vmem:[%s176 + $0x30] sm:$0xff]
      %v1522 = vld [vmem:[%s176 + $0x38] sm:$0xff]
      %v1523 = vld [vmem:[%s176 + $0x40] sm:$0xf]
      %v1524 = vld [vmem:[%s176 + $0x44] sm:$0xff]
      %v1525 = vld [vmem:[%s176 + $0x4c] sm:$0xff]
      %v1526 = vld [vmem:[%s176 + $0x54] sm:$0xff]
      %v1527 = vld [vmem:[%s176 + $0x5c] sm:$0xff]
      %v1528 = vld [vmem:[%s176 + $0x64] sm:$0xff]
      %v1529 = vld [vmem:[%s176 + $0x6c] sm:$0xff]
      %v1530 = vld [vmem:[%s176 + $0x74] sm:$0xff]
      %v1531 = vld [vmem:[%s176 + $0x7c] sm:$0xff]
      %v1532 = vld [vmem:[%s176 + $0x84] sm:$0xf]
      %v1533 = vld [vmem:[%s176 + $0x88] sm:$0xff]
      %v1534 = vld [vmem:[%s176 + $0x90] sm:$0xff]
      %v1535 = vld [vmem:[%s176 + $0x98] sm:$0xff]
      %v1536 = vld [vmem:[%s176 + $0xa0] sm:$0xff]
      %v1537 = vld [vmem:[%s176 + $0xa8] sm:$0xff]
      %v1538 = vld [vmem:[%s176 + $0xb0] sm:$0xff]
      %v1539 = vld [vmem:[%s176 + $0xb8] sm:$0xff]
      %v1540 = vld [vmem:[%s176 + $0xc0] sm:$0xff]
      %v1541 = vld [vmem:[%s176 + $0xc8] sm:$0xf]
      %v1542 = vld [vmem:[%s176 + $0xcc] sm:$0xff]
      %v1543 = vld [vmem:[%s176 + $0xd4] sm:$0xff]
      %v1544 = vld [vmem:[%s176 + $0xdc] sm:$0xff]
      %v1545 = vld [vmem:[%s176 + $0xe4] sm:$0xff]
      %v1546 = vld [vmem:[%s176 + $0xec] sm:$0xff]
      %v1547 = vld [vmem:[%s176 + $0xf4] sm:$0xff]
      %v1548 = vld [vmem:[%s176 + $0xfc] sm:$0xff]
      %v1549 = vld [vmem:[%s176 + $0x104] sm:$0xff]
      %v1550 = vld [vmem:[%s176 + $0x10c] sm:$0xf]
      %v1551 = vld [vmem:[%s176 + $0x110] sm:$0xff]
      %v1552 = vld [vmem:[%s176 + $0x118] sm:$0xff]
      %v1553 = vld [vmem:[%s176 + $0x120] sm:$0xff]
      %v1554 = vld [vmem:[%s176 + $0x128] sm:$0xff]
      %v1555 = vld [vmem:[%s176 + $0x130] sm:$0xff]
      %v1556 = vld [vmem:[%s176 + $0x138] sm:$0xff]
      %v1557 = vld [vmem:[%s176 + $0x140] sm:$0xff]
      %v1558 = vld [vmem:[%s176 + $0x148] sm:$0xff]
      %v1559 = vld [vmem:[%s176 + $0x150] sm:$0xf]
      %v1560 = vld [vmem:[%s176 + $0x154] sm:$0xff]
      %v1561 = vld [vmem:[%s176 + $0x15c] sm:$0xff]
      %v1562 = vld [vmem:[%s176 + $0x164] sm:$0xff]
      %v1563 = vld [vmem:[%s176 + $0x16c] sm:$0xff]
      %v1564 = vld [vmem:[%s176 + $0x174] sm:$0xff]
      %v1565 = vld [vmem:[%s176 + $0x17c] sm:$0xff]
      %v1566 = vld [vmem:[%s176 + $0x184] sm:$0xff]
      %v1567 = vld [vmem:[%s176 + $0x18c] sm:$0xff]
      %v1568 = vld [vmem:[%s176 + $0x194] sm:$0xf]
      %v1569 = vld [vmem:[%s176 + $0x198] sm:$0xff]
      %v1570 = vld [vmem:[%s176 + $0x1a0] sm:$0xff]
      %v1571 = vld [vmem:[%s176 + $0x1a8] sm:$0xff]
      %v1572 = vld [vmem:[%s176 + $0x1b0] sm:$0xff]
      %v1573 = vld [vmem:[%s176 + $0x1b8] sm:$0xff]
      %v1574 = vld [vmem:[%s176 + $0x1c0] sm:$0xff]
      %v1575 = vld [vmem:[%s176 + $0x1c8] sm:$0xff]
      %v1576 = vld [vmem:[%s176 + $0x1d0] sm:$0xff]
      %v1577 = vld [vmem:[%s176 + $0x1d8] sm:$0xf]
      %v1578 = vld [vmem:[%s176 + $0x1dc] sm:$0xff]
      %v1579 = vld [vmem:[%s176 + $0x1e4] sm:$0xff]
      %v1580 = vld [vmem:[%s176 + $0x1ec] sm:$0xff]
      %v1581 = vld [vmem:[%s176 + $0x1f4] sm:$0xff]
      %v1582 = vld [vmem:[%s176 + $0x1fc] sm:$0xff]
      %v1583 = vld [vmem:[%s176 + $0x204] sm:$0xff]
      %v1584 = vld [vmem:[%s176 + $0x20c] sm:$0xff]
      %v1585 = vld [vmem:[%s176 + $0x214] sm:$0xff]
      %v1586 = vld [vmem:[%s176 + $0x21c] sm:$0xf]
      %v1587 = vld [vmem:[%s176 + $0x220] sm:$0xff]
      %v1588 = vld [vmem:[%s176 + $0x228] sm:$0xff]
      %v1589 = vld [vmem:[%s176 + $0x230] sm:$0xff]
      %v1590 = vld [vmem:[%s176 + $0x238] sm:$0xff]
      %v1591 = vld [vmem:[%s176 + $0x240] sm:$0xff]
      %v1592 = vld [vmem:[%s176 + $0x248] sm:$0xff]
      %v1593 = vld [vmem:[%s176 + $0x250] sm:$0xff]
      %v1594 = vld [vmem:[%s176 + $0x258] sm:$0xff]
      %v1595 = vld [vmem:[%s176 + $0x260] sm:$0xf]
      %v1596 = vld [vmem:[%s176 + $0x264] sm:$0xff]
      %v1597 = vld [vmem:[%s176 + $0x26c] sm:$0xff]
      %v1598 = vld [vmem:[%s176 + $0x274] sm:$0xff]
      %v1599 = vld [vmem:[%s176 + $0x27c] sm:$0xff]
      %v1600 = vld [vmem:[%s176 + $0x284] sm:$0xff]
      %v1601 = vld [vmem:[%s176 + $0x28c] sm:$0xff]
      %v1602 = vld [vmem:[%s176 + $0x294] sm:$0xff]
      %v1603 = vld [vmem:[%s176 + $0x29c] sm:$0xff]
      %v1604 = vld [vmem:[%s176 + $0x2a4] sm:$0xf]
      %v1605 = vld [vmem:[%s176 + $0x2a8] sm:$0xff]
      %v1606 = vld [vmem:[%s176 + $0x2b0] sm:$0xff]
      %v1607 = vld [vmem:[%s176 + $0x2b8] sm:$0xff]
      %v1608 = vld [vmem:[%s176 + $0x2c0] sm:$0xff]
      %v1609 = vld [vmem:[%s176 + $0x2c8] sm:$0xff]
      %v1610 = vld [vmem:[%s176 + $0x2d0] sm:$0xff]
      %v1611 = vld [vmem:[%s176 + $0x2d8] sm:$0xff]
      %v1612 = vld [vmem:[%s176 + $0x2e0] sm:$0xff]
      %v1613 = vld [vmem:[%s176 + $0x2e8] sm:$0xf]
      %v1614 = vld [vmem:[%s176 + $0x2ec] sm:$0xff]
      %v1615 = vld [vmem:[%s176 + $0x2f4] sm:$0xff]
      %v1616 = vld [vmem:[%s176 + $0x2fc] sm:$0xff]
      %v1617 = vld [vmem:[%s176 + $0x304] sm:$0xff]
      %v1618 = vld [vmem:[%s176 + $0x30c] sm:$0xff]
      %v1619 = vld [vmem:[%s176 + $0x314] sm:$0xff]
      %v1620 = vld [vmem:[%s176 + $0x31c] sm:$0xff]
      %v1621 = vld [vmem:[%s176 + $0x324] sm:$0xff]
      %v1622 = vld [vmem:[%s176 + $0x32c] sm:$0xf]
      %v1623 = vld [vmem:[%s176 + $0x330] sm:$0xff]
      %v1624 = vld [vmem:[%s176 + $0x338] sm:$0xff]
      %v1625 = vld [vmem:[%s176 + $0x340] sm:$0xff]
      %v1626 = vld [vmem:[%s176 + $0x348] sm:$0xff]
      %v1627 = vld [vmem:[%s176 + $0x350] sm:$0xff]
      %v1628 = vld [vmem:[%s176 + $0x358] sm:$0xff]
      %v1629 = vld [vmem:[%s176 + $0x360] sm:$0xff]
      %v1630 = vld [vmem:[%s176 + $0x368] sm:$0xff]
      %v1631 = vld [vmem:[%s176 + $0x370] sm:$0xf]
      %v1632 = vld [vmem:[%s176 + $0x374] sm:$0xff]
      %v1633 = vld [vmem:[%s176 + $0x37c] sm:$0xff]
      %v1634 = vld [vmem:[%s176 + $0x384] sm:$0xff]
      %v1635 = vld [vmem:[%s176 + $0x38c] sm:$0xff]
      %v1636 = vld [vmem:[%s176 + $0x394] sm:$0xff]
      %v1637 = vld [vmem:[%s176 + $0x39c] sm:$0xff]
      %v1638 = vld [vmem:[%s176 + $0x3a4] sm:$0xff]
      %v1639 = vld [vmem:[%s176 + $0x3ac] sm:$0xff]
      %v1640 = vld [vmem:[%s176 + $0x3b4] sm:$0xf]
      %v1641 = vld [vmem:[%s176 + $0x3b8] sm:$0xff]
      %v1642 = vld [vmem:[%s176 + $0x3c0] sm:$0xff]
      %v1643 = vld [vmem:[%s176 + $0x3c8] sm:$0xff]
      %v1644 = vld [vmem:[%s176 + $0x3d0] sm:$0xff]
      %v1645 = vld [vmem:[%s176 + $0x3d8] sm:$0xff]
      %v1646 = vld [vmem:[%s176 + $0x3e0] sm:$0xff]
      %v1647 = vld [vmem:[%s176 + $0x3e8] sm:$0xff]
      %v1648 = vld [vmem:[%s176 + $0x3f0] sm:$0xff]
      %v1649 = vld [vmem:[%s176 + $0x3f8] sm:$0xf]
      %v1650 = vld [vmem:[%s176 + $0x3fc] sm:$0xff]
      %v1651 = vld [vmem:[%s176 + $0x404] sm:$0xff]
      %v1652 = vld [vmem:[%s176 + $0x40c] sm:$0xff]
      %v1653 = vld [vmem:[%s176 + $0x414] sm:$0xff]
      %v1654 = vld [vmem:[%s176 + $0x41c] sm:$0xff]
      %v1655 = vld [vmem:[%s176 + $0x424] sm:$0xff]
      %v1656 = vld [vmem:[%s176 + $0x42c] sm:$0xff]
      %v1657 = vld [vmem:[%s176 + $0x434] sm:$0xff]
      %v1658 = vld [vmem:[%s176 + $0x43c] sm:$0xf]
      %v1659 = vld [vmem:[%s176 + $0x440] sm:$0xff]
      %v1660 = vld [vmem:[%s176 + $0x448] sm:$0xff]
      %v1661 = vld [vmem:[%s176 + $0x450] sm:$0xff]
      %v1662 = vld [vmem:[%s176 + $0x458] sm:$0xff]
      %v1663 = vld [vmem:[%s176 + $0x460] sm:$0xff]
      %v1664 = vld [vmem:[%s176 + $0x468] sm:$0xff]
      %v1665 = vld [vmem:[%s176 + $0x470] sm:$0xff]
      %v1666 = vld [vmem:[%s176 + $0x478] sm:$0xff]
      %v1667 = vld [vmem:[%s176 + $0x480] sm:$0xf]
      %v1668 = vld [vmem:[%s176 + $0x484] sm:$0xff]
      %v1669 = vld [vmem:[%s176 + $0x48c] sm:$0xff]
      %v1670 = vld [vmem:[%s176 + $0x494] sm:$0xff]
      %v1671 = vld [vmem:[%s176 + $0x49c] sm:$0xff]
      %v1672 = vld [vmem:[%s176 + $0x4a4] sm:$0xff]
      %v1673 = vld [vmem:[%s176 + $0x4ac] sm:$0xff]
      %v1674 = vld [vmem:[%s176 + $0x4b4] sm:$0xff]
      %v1675 = vld [vmem:[%s176 + $0x4bc] sm:$0xff]
      %v1676 = vld [vmem:[%s176 + $0x4c4] sm:$0xf]
      %v1677 = vld [vmem:[%s176 + $0x4c8] sm:$0xff]
      %v1678 = vld [vmem:[%s176 + $0x4d0] sm:$0xff]
      %v1679 = vld [vmem:[%s176 + $0x4d8] sm:$0xff]
      %v1680 = vld [vmem:[%s176 + $0x4e0] sm:$0xff]
      %v1681 = vld [vmem:[%s176 + $0x4e8] sm:$0xff]
      %v1682 = vld [vmem:[%s176 + $0x4f0] sm:$0xff]
      %v1683 = vld [vmem:[%s176 + $0x4f8] sm:$0xff]
      %v1684 = vld [vmem:[%s176 + $0x500] sm:$0xff]
      %v1685 = vld [vmem:[%s176 + $0x508] sm:$0xf]
      %v1686 = vld [vmem:[%s176 + $0x50c] sm:$0xff]
      %v1687 = vld [vmem:[%s176 + $0x514] sm:$0xff]
      %v1688 = vld [vmem:[%s176 + $0x51c] sm:$0xff]
      %v1689 = vld [vmem:[%s176 + $0x524] sm:$0xff]
      %v1690 = vld [vmem:[%s176 + $0x52c] sm:$0xff]
      %v1691 = vld [vmem:[%s176 + $0x534] sm:$0xff]
      %v1692 = vld [vmem:[%s176 + $0x53c] sm:$0xff]
      %v1693 = vld [vmem:[%s176 + $0x544] sm:$0xff]
      %v1694 = vld [vmem:[%s176 + $0x54c] sm:$0xf]
      %v1695 = vld [vmem:[%s176 + $0x550] sm:$0xff]
      %v1696 = vld [vmem:[%s176 + $0x558] sm:$0xff]
      %v1697 = vld [vmem:[%s176 + $0x560] sm:$0xff]
      %v1698 = vld [vmem:[%s176 + $0x568] sm:$0xff]
      %v1699 = vld [vmem:[%s176 + $0x570] sm:$0xff]
      %v1700 = vld [vmem:[%s176 + $0x578] sm:$0xff]
      %v1701 = vld [vmem:[%s176 + $0x580] sm:$0xff]
      %v1702 = vld [vmem:[%s176 + $0x588] sm:$0xff]
      %v1703 = vld [vmem:[%s176 + $0x590] sm:$0xf]
      %v1704 = vld [vmem:[%s176 + $0x594] sm:$0xff]
      %v1705 = vld [vmem:[%s176 + $0x59c] sm:$0xff]
      %v1706 = vld [vmem:[%s176 + $0x5a4] sm:$0xff]
      %v1707 = vld [vmem:[%s176 + $0x5ac] sm:$0xff]
      %v1708 = vld [vmem:[%s176 + $0x5b4] sm:$0xff]
      %v1709 = vld [vmem:[%s176 + $0x5bc] sm:$0xff]
      %v1710 = vld [vmem:[%s176 + $0x5c4] sm:$0xff]
      %v1711 = vld [vmem:[%s176 + $0x5cc] sm:$0xff]
      %v1712 = vld [vmem:[%s176 + $0x5d4] sm:$0xf]
      %v1713 = vld [vmem:[%s176 + $0x5d8] sm:$0xff]
      %v1714 = vld [vmem:[%s176 + $0x5e0] sm:$0xff]
      %v1715 = vld [vmem:[%s176 + $0x5e8] sm:$0xff]
      %v1716 = vld [vmem:[%s176 + $0x5f0] sm:$0xff]
      %v1717 = vld [vmem:[%s176 + $0x5f8] sm:$0xff]
      %v1718 = vld [vmem:[%s176 + $0x600] sm:$0xff]
      %v1719 = vld [vmem:[%s176 + $0x608] sm:$0xff]
      %v1720 = vld [vmem:[%s176 + $0x610] sm:$0xff]
      %v1721 = vld [vmem:[%s176 + $0x618] sm:$0xf]
      %v1722 = vld [vmem:[%s176 + $0x61c] sm:$0xff]
      %v1723 = vld [vmem:[%s176 + $0x624] sm:$0xff]
      %v1724 = vld [vmem:[%s176 + $0x62c] sm:$0xff]
      %v1725 = vld [vmem:[%s176 + $0x634] sm:$0xff]
      %v1726 = vld [vmem:[%s176 + $0x63c] sm:$0xff]
      %v1727 = vld [vmem:[%s176 + $0x644] sm:$0xff]
      %v1728 = vld [vmem:[%s176 + $0x64c] sm:$0xff]
      %v1729 = vld [vmem:[%s176 + $0x654] sm:$0xff]
      %v1730 = vld [vmem:[%s176 + $0x65c] sm:$0xf]
      %v1731 = vld [vmem:[%s176 + $0x660] sm:$0xff]
      %v1732 = vld [vmem:[%s176 + $0x668] sm:$0xff]
      %v1733 = vld [vmem:[%s176 + $0x670] sm:$0xff]
      %v1734 = vld [vmem:[%s176 + $0x678] sm:$0xff]
      %v1735 = vld [vmem:[%s176 + $0x680] sm:$0xff]
      %v1736 = vld [vmem:[%s176 + $0x688] sm:$0xff]
      %v1737 = vld [vmem:[%s176 + $0x690] sm:$0xff]
      %v1738 = vld [vmem:[%s176 + $0x698] sm:$0xff]
      %v1739 = vld [vmem:[%s176 + $0x6a0] sm:$0xf]
      %v1740 = vld [vmem:[%s176 + $0x6a4] sm:$0xff]
      %v1741 = vld [vmem:[%s176 + $0x6ac] sm:$0xff]
      %v1742 = vld [vmem:[%s176 + $0x6b4] sm:$0xff]
      %v1743 = vld [vmem:[%s176 + $0x6bc] sm:$0xff]
      %v1744 = vld [vmem:[%s176 + $0x6c4] sm:$0xff]
      %v1745 = vld [vmem:[%s176 + $0x6cc] sm:$0xff]
      %v1746 = vld [vmem:[%s176 + $0x6d4] sm:$0xff]
      %v1747 = vld [vmem:[%s176 + $0x6dc] sm:$0xff]
      %v1748 = vld [vmem:[%s176 + $0x6e4] sm:$0xf]
      %v1749 = vld [vmem:[%s176 + $0x6e8] sm:$0xff]
      %v1750 = vld [vmem:[%s176 + $0x6f0] sm:$0xff]
      %v1751 = vld [vmem:[%s176 + $0x6f8] sm:$0xff]
      %v1752 = vld [vmem:[%s176 + $0x700] sm:$0xff]
      %v1753 = vld [vmem:[%s176 + $0x708] sm:$0xff]
      %v1754 = vld [vmem:[%s176 + $0x710] sm:$0xff]
      %v1755 = vld [vmem:[%s176 + $0x718] sm:$0xff]
      %v1756 = vld [vmem:[%s176 + $0x720] sm:$0xff]
      %v1757 = vld [vmem:[%s176 + $0x728] sm:$0xf]
      %v1758 = vld [vmem:[%s176 + $0x72c] sm:$0xff]
      %v1759 = vld [vmem:[%s176 + $0x734] sm:$0xff]
      %v1760 = vld [vmem:[%s176 + $0x73c] sm:$0xff]
      %v1761 = vld [vmem:[%s176 + $0x744] sm:$0xff]
      %v1762 = vld [vmem:[%s176 + $0x74c] sm:$0xff]
      %v1763 = vld [vmem:[%s176 + $0x754] sm:$0xff]
      %v1764 = vld [vmem:[%s176 + $0x75c] sm:$0xff]
      %v1765 = vld [vmem:[%s176 + $0x764] sm:$0xff]
      %v1766 = vld [vmem:[%s176 + $0x76c] sm:$0xf]
      %v1767 = vld [vmem:[%s176 + $0x770] sm:$0xff]
      %v1768 = vld [vmem:[%s176 + $0x778] sm:$0xff]
      %v1769 = vld [vmem:[%s176 + $0x780] sm:$0xff]
      %v1770 = vld [vmem:[%s176 + $0x788] sm:$0xff]
      %v1771 = vld [vmem:[%s176 + $0x790] sm:$0xff]
      %v1772 = vld [vmem:[%s176 + $0x798] sm:$0xff]
      %v1773 = vld [vmem:[%s176 + $0x7a0] sm:$0xff]
      %v1774 = vld [vmem:[%s176 + $0x7a8] sm:$0xff]
      %v1775 = vld [vmem:[%s176 + $0x7b0] sm:$0xf]
      %v1776 = vld [vmem:[%s176 + $0x7b4] sm:$0xff]
      %v1777 = vld [vmem:[%s176 + $0x7bc] sm:$0xff]
      %v1778 = vld [vmem:[%s176 + $0x7c4] sm:$0xff]
      %v1779 = vld [vmem:[%s176 + $0x7cc] sm:$0xff]
      %v1780 = vld [vmem:[%s176 + $0x7d4] sm:$0xff]
      %v1781 = vld [vmem:[%s176 + $0x7dc] sm:$0xff]
      %v1782 = vld [vmem:[%s176 + $0x7e4] sm:$0xff]
      %v1783 = vld [vmem:[%s176 + $0x7ec] sm:$0xff]
      %v1784 = vld [vmem:[%s176 + $0x7f4] sm:$0xf]
      %v1785 = vld [vmem:[%s176 + $0x7f8] sm:$0xff]
      %v1786 = vld [vmem:[%s176 + $0x800] sm:$0xff]
      %v1787 = vld [vmem:[%s176 + $0x808] sm:$0xff]
      %v1788 = vld [vmem:[%s176 + $0x810] sm:$0xff]
      %v1789 = vld [vmem:[%s176 + $0x818] sm:$0xff]
      %v1790 = vld [vmem:[%s176 + $0x820] sm:$0xff]
      %v1791 = vld [vmem:[%s176 + $0x828] sm:$0xff]
      %v1792 = vld [vmem:[%s176 + $0x830] sm:$0xff]
      %v1793 = vld [vmem:[%s176 + $0x838] sm:$0xf]
      %v1794 = vld [vmem:[%s176 + $0x83c] sm:$0xff]
      %v1795 = vld [vmem:[%s176 + $0x844] sm:$0xff]
      %v1796 = vld [vmem:[%s176 + $0x84c] sm:$0xff]
      %v1797 = vld [vmem:[%s176 + $0x854] sm:$0xff]
      %v1798 = vld [vmem:[%s176 + $0x85c] sm:$0xff]
      %v1799 = vld [vmem:[%s176 + $0x864] sm:$0xff]
      %v1800 = vld [vmem:[%s176 + $0x86c] sm:$0xff]
      %v1801 = vld [vmem:[%s176 + $0x874] sm:$0xff]
      %v1802 = vld [vmem:[%s176 + $0x87c] sm:$0xf]
      %v1803 = vld [vmem:[%s176 + $0x880] sm:$0xff]
      %v1804 = vld [vmem:[%s176 + $0x888] sm:$0xff]
      %v1805 = vld [vmem:[%s176 + $0x890] sm:$0xff]
      %v1806 = vld [vmem:[%s176 + $0x898] sm:$0xff]
      %v1807 = vld [vmem:[%s176 + $0x8a0] sm:$0xff]
      %v1808 = vld [vmem:[%s176 + $0x8a8] sm:$0xff]
      %v1809 = vld [vmem:[%s176 + $0x8b0] sm:$0xff]
      %v1810 = vld [vmem:[%s176 + $0x8b8] sm:$0xff]
      %v1811 = vld [vmem:[%s176 + $0x8c0] sm:$0xf]
      %v2109 = vunpack.c.l.b16 %v1515
      %v2110 = vunpack.c.h.b16 %v1515
      %v2111 = vunpack.c.l.b16 %v1516
      %v2112 = vunpack.c.h.b16 %v1516
      %v2113 = vunpack.c.l.b16 %v1517
      %v2114 = vunpack.c.h.b16 %v1517
      %v2115 = vunpack.c.l.b16 %v1518
      %v2116 = vunpack.c.h.b16 %v1518
      %v2117 = vunpack.c.l.b16 %v1519
      %v2118 = vunpack.c.h.b16 %v1519
      %v2119 = vunpack.c.l.b16 %v1520
      %v2120 = vunpack.c.h.b16 %v1520
      %v2121 = vunpack.c.l.b16 %v1521
      %v2122 = vunpack.c.h.b16 %v1521
      %v2123 = vunpack.c.l.b16 %v1522
      %v2124 = vunpack.c.h.b16 %v1522
      %v2125 = vunpack.c.l.b16 %v1523
      %v2126 = vunpack.c.l.b16 %v1524
      %v2127 = vunpack.c.h.b16 %v1524
      %v2128 = vunpack.c.l.b16 %v1525
      %v2129 = vunpack.c.h.b16 %v1525
      %v2130 = vunpack.c.l.b16 %v1526
      %v2131 = vunpack.c.h.b16 %v1526
      %v2132 = vunpack.c.l.b16 %v1527
      %v2133 = vunpack.c.h.b16 %v1527
      %v2134 = vunpack.c.l.b16 %v1528
      %v2135 = vunpack.c.h.b16 %v1528
      %v2136 = vunpack.c.l.b16 %v1529
      %v2137 = vunpack.c.h.b16 %v1529
      %v2138 = vunpack.c.l.b16 %v1530
      %v2139 = vunpack.c.h.b16 %v1530
      %v2140 = vunpack.c.l.b16 %v1531
      %v2141 = vunpack.c.h.b16 %v1531
      %v2142 = vunpack.c.l.b16 %v1532
      %v2143 = vunpack.c.l.b16 %v1533
      %v2144 = vunpack.c.h.b16 %v1533
      %v2145 = vunpack.c.l.b16 %v1534
      %v2146 = vunpack.c.h.b16 %v1534
      %v2147 = vunpack.c.l.b16 %v1535
      %v2148 = vunpack.c.h.b16 %v1535
      %v2149 = vunpack.c.l.b16 %v1536
      %v2150 = vunpack.c.h.b16 %v1536
      %v2151 = vunpack.c.l.b16 %v1537
      %v2152 = vunpack.c.h.b16 %v1537
      %v2153 = vunpack.c.l.b16 %v1538
      %v2154 = vunpack.c.h.b16 %v1538
      %v2155 = vunpack.c.l.b16 %v1539
      %v2156 = vunpack.c.h.b16 %v1539
      %v2157 = vunpack.c.l.b16 %v1540
      %v2158 = vunpack.c.h.b16 %v1540
      %v2159 = vunpack.c.l.b16 %v1541
      %v2160 = vunpack.c.l.b16 %v1542
      %v2161 = vunpack.c.h.b16 %v1542
      %v2162 = vunpack.c.l.b16 %v1543
      %v2163 = vunpack.c.h.b16 %v1543
      %v2164 = vunpack.c.l.b16 %v1544
      %v2165 = vunpack.c.h.b16 %v1544
      %v2166 = vunpack.c.l.b16 %v1545
      %v2167 = vunpack.c.h.b16 %v1545
      %v2168 = vunpack.c.l.b16 %v1546
      %v2169 = vunpack.c.h.b16 %v1546
      %v2170 = vunpack.c.l.b16 %v1547
      %v2171 = vunpack.c.h.b16 %v1547
      %v2172 = vunpack.c.l.b16 %v1548
      %v2173 = vunpack.c.h.b16 %v1548
      %v2174 = vunpack.c.l.b16 %v1549
      %v2175 = vunpack.c.h.b16 %v1549
      %v2176 = vunpack.c.l.b16 %v1550
      %v2177 = vunpack.c.l.b16 %v1551
      %v2178 = vunpack.c.h.b16 %v1551
      %v2179 = vunpack.c.l.b16 %v1552
      %v2180 = vunpack.c.h.b16 %v1552
      %v2181 = vunpack.c.l.b16 %v1553
      %v2182 = vunpack.c.h.b16 %v1553
      %v2183 = vunpack.c.l.b16 %v1554
      %v2184 = vunpack.c.h.b16 %v1554
      %v2185 = vunpack.c.l.b16 %v1555
      %v2186 = vunpack.c.h.b16 %v1555
      %v2187 = vunpack.c.l.b16 %v1556
      %v2188 = vunpack.c.h.b16 %v1556
      %v2189 = vunpack.c.l.b16 %v1557
      %v2190 = vunpack.c.h.b16 %v1557
      %v2191 = vunpack.c.l.b16 %v1558
      %v2192 = vunpack.c.h.b16 %v1558
      %v2193 = vunpack.c.l.b16 %v1559
      %v2194 = vunpack.c.l.b16 %v1560
      %v2195 = vunpack.c.h.b16 %v1560
      %v2196 = vunpack.c.l.b16 %v1561
      %v2197 = vunpack.c.h.b16 %v1561
      %v2198 = vunpack.c.l.b16 %v1562
      %v2199 = vunpack.c.h.b16 %v1562
      %v2200 = vunpack.c.l.b16 %v1563
      %v2201 = vunpack.c.h.b16 %v1563
      %v2202 = vunpack.c.l.b16 %v1564
      %v2203 = vunpack.c.h.b16 %v1564
      %v2204 = vunpack.c.l.b16 %v1565
      %v2205 = vunpack.c.h.b16 %v1565
      %v2206 = vunpack.c.l.b16 %v1566
      %v2207 = vunpack.c.h.b16 %v1566
      %v2208 = vunpack.c.l.b16 %v1567
      %v2209 = vunpack.c.h.b16 %v1567
      %v2210 = vunpack.c.l.b16 %v1568
      %v2211 = vunpack.c.l.b16 %v1569
      %v2212 = vunpack.c.h.b16 %v1569
      %v2213 = vunpack.c.l.b16 %v1570
      %v2214 = vunpack.c.h.b16 %v1570
      %v2215 = vunpack.c.l.b16 %v1571
      %v2216 = vunpack.c.h.b16 %v1571
      %v2217 = vunpack.c.l.b16 %v1572
      %v2218 = vunpack.c.h.b16 %v1572
      %v2219 = vunpack.c.l.b16 %v1573
      %v2220 = vunpack.c.h.b16 %v1573
      %v2221 = vunpack.c.l.b16 %v1574
      %v2222 = vunpack.c.h.b16 %v1574
      %v2223 = vunpack.c.l.b16 %v1575
      %v2224 = vunpack.c.h.b16 %v1575
      %v2225 = vunpack.c.l.b16 %v1576
      %v2226 = vunpack.c.h.b16 %v1576
      %v2227 = vunpack.c.l.b16 %v1577
      %v2228 = vunpack.c.l.b16 %v1578
      %v2229 = vunpack.c.h.b16 %v1578
      %v2230 = vunpack.c.l.b16 %v1579
      %v2231 = vunpack.c.h.b16 %v1579
      %v2232 = vunpack.c.l.b16 %v1580
      %v2233 = vunpack.c.h.b16 %v1580
      %v2234 = vunpack.c.l.b16 %v1581
      %v2235 = vunpack.c.h.b16 %v1581
      %v2236 = vunpack.c.l.b16 %v1582
      %v2237 = vunpack.c.h.b16 %v1582
      %v2238 = vunpack.c.l.b16 %v1583
      %v2239 = vunpack.c.h.b16 %v1583
      %v2240 = vunpack.c.l.b16 %v1584
      %v2241 = vunpack.c.h.b16 %v1584
      %v2242 = vunpack.c.l.b16 %v1585
      %v2243 = vunpack.c.h.b16 %v1585
      %v2244 = vunpack.c.l.b16 %v1586
      %v2245 = vunpack.c.l.b16 %v1587
      %v2246 = vunpack.c.h.b16 %v1587
      %v2247 = vunpack.c.l.b16 %v1588
      %v2248 = vunpack.c.h.b16 %v1588
      %v2249 = vunpack.c.l.b16 %v1589
      %v2250 = vunpack.c.h.b16 %v1589
      %v2251 = vunpack.c.l.b16 %v1590
      %v2252 = vunpack.c.h.b16 %v1590
      %v2253 = vunpack.c.l.b16 %v1591
      %v2254 = vunpack.c.h.b16 %v1591
      %v2255 = vunpack.c.l.b16 %v1592
      %v2256 = vunpack.c.h.b16 %v1592
      %v2257 = vunpack.c.l.b16 %v1593
      %v2258 = vunpack.c.h.b16 %v1593
      %v2259 = vunpack.c.l.b16 %v1594
      %v2260 = vunpack.c.h.b16 %v1594
      %v2261 = vunpack.c.l.b16 %v1595
      %v2262 = vunpack.c.l.b16 %v1596
      %v2263 = vunpack.c.h.b16 %v1596
      %v2264 = vunpack.c.l.b16 %v1597
      %v2265 = vunpack.c.h.b16 %v1597
      %v2266 = vunpack.c.l.b16 %v1598
      %v2267 = vunpack.c.h.b16 %v1598
      %v2268 = vunpack.c.l.b16 %v1599
      %v2269 = vunpack.c.h.b16 %v1599
      %v2270 = vunpack.c.l.b16 %v1600
      %v2271 = vunpack.c.h.b16 %v1600
      %v2272 = vunpack.c.l.b16 %v1601
      %v2273 = vunpack.c.h.b16 %v1601
      %v2274 = vunpack.c.l.b16 %v1602
      %v2275 = vunpack.c.h.b16 %v1602
      %v2276 = vunpack.c.l.b16 %v1603
      %v2277 = vunpack.c.h.b16 %v1603
      %v2278 = vunpack.c.l.b16 %v1604
      %v2279 = vunpack.c.l.b16 %v1605
      %v2280 = vunpack.c.h.b16 %v1605
      %v2281 = vunpack.c.l.b16 %v1606
      %v2282 = vunpack.c.h.b16 %v1606
      %v2283 = vunpack.c.l.b16 %v1607
      %v2284 = vunpack.c.h.b16 %v1607
      %v2285 = vunpack.c.l.b16 %v1608
      %v2286 = vunpack.c.h.b16 %v1608
      %v2287 = vunpack.c.l.b16 %v1609
      %v2288 = vunpack.c.h.b16 %v1609
      %v2289 = vunpack.c.l.b16 %v1610
      %v2290 = vunpack.c.h.b16 %v1610
      %v2291 = vunpack.c.l.b16 %v1611
      %v2292 = vunpack.c.h.b16 %v1611
      %v2293 = vunpack.c.l.b16 %v1612
      %v2294 = vunpack.c.h.b16 %v1612
      %v2295 = vunpack.c.l.b16 %v1613
      %v2296 = vunpack.c.l.b16 %v1614
      %v2297 = vunpack.c.h.b16 %v1614
      %v2298 = vunpack.c.l.b16 %v1615
      %v2299 = vunpack.c.h.b16 %v1615
      %v2300 = vunpack.c.l.b16 %v1616
      %v2301 = vunpack.c.h.b16 %v1616
      %v2302 = vunpack.c.l.b16 %v1617
      %v2303 = vunpack.c.h.b16 %v1617
      %v2304 = vunpack.c.l.b16 %v1618
      %v2305 = vunpack.c.h.b16 %v1618
      %v2306 = vunpack.c.l.b16 %v1619
      %v2307 = vunpack.c.h.b16 %v1619
      %v2308 = vunpack.c.l.b16 %v1620
      %v2309 = vunpack.c.h.b16 %v1620
      %v2310 = vunpack.c.l.b16 %v1621
      %v2311 = vunpack.c.h.b16 %v1621
      %v2312 = vunpack.c.l.b16 %v1622
      %v2313 = vunpack.c.l.b16 %v1623
      %v2314 = vunpack.c.h.b16 %v1623
      %v2315 = vunpack.c.l.b16 %v1624
      %v2316 = vunpack.c.h.b16 %v1624
      %v2317 = vunpack.c.l.b16 %v1625
      %v2318 = vunpack.c.h.b16 %v1625
      %v2319 = vunpack.c.l.b16 %v1626
      %v2320 = vunpack.c.h.b16 %v1626
      %v2321 = vunpack.c.l.b16 %v1627
      %v2322 = vunpack.c.h.b16 %v1627
      %v2323 = vunpack.c.l.b16 %v1628
      %v2324 = vunpack.c.h.b16 %v1628
      %v2325 = vunpack.c.l.b16 %v1629
      %v2326 = vunpack.c.h.b16 %v1629
      %v2327 = vunpack.c.l.b16 %v1630
      %v2328 = vunpack.c.h.b16 %v1630
      %v2329 = vunpack.c.l.b16 %v1631
      %v2330 = vunpack.c.l.b16 %v1632
      %v2331 = vunpack.c.h.b16 %v1632
      %v2332 = vunpack.c.l.b16 %v1633
      %v2333 = vunpack.c.h.b16 %v1633
      %v2334 = vunpack.c.l.b16 %v1634
      %v2335 = vunpack.c.h.b16 %v1634
      %v2336 = vunpack.c.l.b16 %v1635
      %v2337 = vunpack.c.h.b16 %v1635
      %v2338 = vunpack.c.l.b16 %v1636
      %v2339 = vunpack.c.h.b16 %v1636
      %v2340 = vunpack.c.l.b16 %v1637
      %v2341 = vunpack.c.h.b16 %v1637
      %v2342 = vunpack.c.l.b16 %v1638
      %v2343 = vunpack.c.h.b16 %v1638
      %v2344 = vunpack.c.l.b16 %v1639
      %v2345 = vunpack.c.h.b16 %v1639
      %v2346 = vunpack.c.l.b16 %v1640
      %v2347 = vunpack.c.l.b16 %v1641
      %v2348 = vunpack.c.h.b16 %v1641
      %v2349 = vunpack.c.l.b16 %v1642
      %v2350 = vunpack.c.h.b16 %v1642
      %v2351 = vunpack.c.l.b16 %v1643
      %v2352 = vunpack.c.h.b16 %v1643
      %v2353 = vunpack.c.l.b16 %v1644
      %v2354 = vunpack.c.h.b16 %v1644
      %v2355 = vunpack.c.l.b16 %v1645
      %v2356 = vunpack.c.h.b16 %v1645
      %v2357 = vunpack.c.l.b16 %v1646
      %v2358 = vunpack.c.h.b16 %v1646
      %v2359 = vunpack.c.l.b16 %v1647
      %v2360 = vunpack.c.h.b16 %v1647
      %v2361 = vunpack.c.l.b16 %v1648
      %v2362 = vunpack.c.h.b16 %v1648
      %v2363 = vunpack.c.l.b16 %v1649
      %v2364 = vunpack.c.l.b16 %v1650
      %v2365 = vunpack.c.h.b16 %v1650
      %v2366 = vunpack.c.l.b16 %v1651
      %v2367 = vunpack.c.h.b16 %v1651
      %v2368 = vunpack.c.l.b16 %v1652
      %v2369 = vunpack.c.h.b16 %v1652
      %v2370 = vunpack.c.l.b16 %v1653
      %v2371 = vunpack.c.h.b16 %v1653
      %v2372 = vunpack.c.l.b16 %v1654
      %v2373 = vunpack.c.h.b16 %v1654
      %v2374 = vunpack.c.l.b16 %v1655
      %v2375 = vunpack.c.h.b16 %v1655
      %v2376 = vunpack.c.l.b16 %v1656
      %v2377 = vunpack.c.h.b16 %v1656
      %v2378 = vunpack.c.l.b16 %v1657
      %v2379 = vunpack.c.h.b16 %v1657
      %v2380 = vunpack.c.l.b16 %v1658
      %v2381 = vunpack.c.l.b16 %v1659
      %v2382 = vunpack.c.h.b16 %v1659
      %v2383 = vunpack.c.l.b16 %v1660
      %v2384 = vunpack.c.h.b16 %v1660
      %v2385 = vunpack.c.l.b16 %v1661
      %v2386 = vunpack.c.h.b16 %v1661
      %v2387 = vunpack.c.l.b16 %v1662
      %v2388 = vunpack.c.h.b16 %v1662
      %v2389 = vunpack.c.l.b16 %v1663
      %v2390 = vunpack.c.h.b16 %v1663
      %v2391 = vunpack.c.l.b16 %v1664
      %v2392 = vunpack.c.h.b16 %v1664
      %v2393 = vunpack.c.l.b16 %v1665
      %v2394 = vunpack.c.h.b16 %v1665
      %v2395 = vunpack.c.l.b16 %v1666
      %v2396 = vunpack.c.h.b16 %v1666
      %v2397 = vunpack.c.l.b16 %v1667
      %v2398 = vunpack.c.l.b16 %v1668
      %v2399 = vunpack.c.h.b16 %v1668
      %v2400 = vunpack.c.l.b16 %v1669
      %v2401 = vunpack.c.h.b16 %v1669
      %v2402 = vunpack.c.l.b16 %v1670
      %v2403 = vunpack.c.h.b16 %v1670
      %v2404 = vunpack.c.l.b16 %v1671
      %v2405 = vunpack.c.h.b16 %v1671
      %v2406 = vunpack.c.l.b16 %v1672
      %v2407 = vunpack.c.h.b16 %v1672
      %v2408 = vunpack.c.l.b16 %v1673
      %v2409 = vunpack.c.h.b16 %v1673
      %v2410 = vunpack.c.l.b16 %v1674
      %v2411 = vunpack.c.h.b16 %v1674
      %v2412 = vunpack.c.l.b16 %v1675
      %v2413 = vunpack.c.h.b16 %v1675
      %v2414 = vunpack.c.l.b16 %v1676
      %v2415 = vunpack.c.l.b16 %v1677
      %v2416 = vunpack.c.h.b16 %v1677
      %v2417 = vunpack.c.l.b16 %v1678
      %v2418 = vunpack.c.h.b16 %v1678
      %v2419 = vunpack.c.l.b16 %v1679
      %v2420 = vunpack.c.h.b16 %v1679
      %v2421 = vunpack.c.l.b16 %v1680
      %v2422 = vunpack.c.h.b16 %v1680
      %v2423 = vunpack.c.l.b16 %v1681
      %v2424 = vunpack.c.h.b16 %v1681
      %v2425 = vunpack.c.l.b16 %v1682
      %v2426 = vunpack.c.h.b16 %v1682
      %v2427 = vunpack.c.l.b16 %v1683
      %v2428 = vunpack.c.h.b16 %v1683
      %v2429 = vunpack.c.l.b16 %v1684
      %v2430 = vunpack.c.h.b16 %v1684
      %v2431 = vunpack.c.l.b16 %v1685
      %v2432 = vunpack.c.l.b16 %v1686
      %v2433 = vunpack.c.h.b16 %v1686
      %v2434 = vunpack.c.l.b16 %v1687
      %v2435 = vunpack.c.h.b16 %v1687
      %v2436 = vunpack.c.l.b16 %v1688
      %v2437 = vunpack.c.h.b16 %v1688
      %v2438 = vunpack.c.l.b16 %v1689
      %v2439 = vunpack.c.h.b16 %v1689
      %v2440 = vunpack.c.l.b16 %v1690
      %v2441 = vunpack.c.h.b16 %v1690
      %v2442 = vunpack.c.l.b16 %v1691
      %v2443 = vunpack.c.h.b16 %v1691
      %v2444 = vunpack.c.l.b16 %v1692
      %v2445 = vunpack.c.h.b16 %v1692
      %v2446 = vunpack.c.l.b16 %v1693
      %v2447 = vunpack.c.h.b16 %v1693
      %v2448 = vunpack.c.l.b16 %v1694
      %v2449 = vunpack.c.l.b16 %v1695
      %v2450 = vunpack.c.h.b16 %v1695
      %v2451 = vunpack.c.l.b16 %v1696
      %v2452 = vunpack.c.h.b16 %v1696
      %v2453 = vunpack.c.l.b16 %v1697
      %v2454 = vunpack.c.h.b16 %v1697
      %v2455 = vunpack.c.l.b16 %v1698
      %v2456 = vunpack.c.h.b16 %v1698
      %v2457 = vunpack.c.l.b16 %v1699
      %v2458 = vunpack.c.h.b16 %v1699
      %v2459 = vunpack.c.l.b16 %v1700
      %v2460 = vunpack.c.h.b16 %v1700
      %v2461 = vunpack.c.l.b16 %v1701
      %v2462 = vunpack.c.h.b16 %v1701
      %v2463 = vunpack.c.l.b16 %v1702
      %v2464 = vunpack.c.h.b16 %v1702
      %v2465 = vunpack.c.l.b16 %v1703
      %v2466 = vunpack.c.l.b16 %v1704
      %v2467 = vunpack.c.h.b16 %v1704
      %v2468 = vunpack.c.l.b16 %v1705
      %v2469 = vunpack.c.h.b16 %v1705
      %v2470 = vunpack.c.l.b16 %v1706
      %v2471 = vunpack.c.h.b16 %v1706
      %v2472 = vunpack.c.l.b16 %v1707
      %v2473 = vunpack.c.h.b16 %v1707
      %v2474 = vunpack.c.l.b16 %v1708
      %v2475 = vunpack.c.h.b16 %v1708
      %v2476 = vunpack.c.l.b16 %v1709
      %v2477 = vunpack.c.h.b16 %v1709
      %v2478 = vunpack.c.l.b16 %v1710
      %v2479 = vunpack.c.h.b16 %v1710
      %v2480 = vunpack.c.l.b16 %v1711
      %v2481 = vunpack.c.h.b16 %v1711
      %v2482 = vunpack.c.l.b16 %v1712
      %v2483 = vunpack.c.l.b16 %v1713
      %v2484 = vunpack.c.h.b16 %v1713
      %v2485 = vunpack.c.l.b16 %v1714
      %v2486 = vunpack.c.h.b16 %v1714
      %v2487 = vunpack.c.l.b16 %v1715
      %v2488 = vunpack.c.h.b16 %v1715
      %v2489 = vunpack.c.l.b16 %v1716
      %v2490 = vunpack.c.h.b16 %v1716
      %v2491 = vunpack.c.l.b16 %v1717
      %v2492 = vunpack.c.h.b16 %v1717
      %v2493 = vunpack.c.l.b16 %v1718
      %v2494 = vunpack.c.h.b16 %v1718
      %v2495 = vunpack.c.l.b16 %v1719
      %v2496 = vunpack.c.h.b16 %v1719
      %v2497 = vunpack.c.l.b16 %v1720
      %v2498 = vunpack.c.h.b16 %v1720
      %v2499 = vunpack.c.l.b16 %v1721
      %v2500 = vunpack.c.l.b16 %v1722
      %v2501 = vunpack.c.h.b16 %v1722
      %v2502 = vunpack.c.l.b16 %v1723
      %v2503 = vunpack.c.h.b16 %v1723
      %v2504 = vunpack.c.l.b16 %v1724
      %v2505 = vunpack.c.h.b16 %v1724
      %v2506 = vunpack.c.l.b16 %v1725
      %v2507 = vunpack.c.h.b16 %v1725
      %v2508 = vunpack.c.l.b16 %v1726
      %v2509 = vunpack.c.h.b16 %v1726
      %v2510 = vunpack.c.l.b16 %v1727
      %v2511 = vunpack.c.h.b16 %v1727
      %v2512 = vunpack.c.l.b16 %v1728
      %v2513 = vunpack.c.h.b16 %v1728
      %v2514 = vunpack.c.l.b16 %v1729
      %v2515 = vunpack.c.h.b16 %v1729
      %v2516 = vunpack.c.l.b16 %v1730
      %v2517 = vunpack.c.l.b16 %v1731
      %v2518 = vunpack.c.h.b16 %v1731
      %v2519 = vunpack.c.l.b16 %v1732
      %v2520 = vunpack.c.h.b16 %v1732
      %v2521 = vunpack.c.l.b16 %v1733
      %v2522 = vunpack.c.h.b16 %v1733
      %v2523 = vunpack.c.l.b16 %v1734
      %v2524 = vunpack.c.h.b16 %v1734
      %v2525 = vunpack.c.l.b16 %v1735
      %v2526 = vunpack.c.h.b16 %v1735
      %v2527 = vunpack.c.l.b16 %v1736
      %v2528 = vunpack.c.h.b16 %v1736
      %v2529 = vunpack.c.l.b16 %v1737
      %v2530 = vunpack.c.h.b16 %v1737
      %v2531 = vunpack.c.l.b16 %v1738
      %v2532 = vunpack.c.h.b16 %v1738
      %v2533 = vunpack.c.l.b16 %v1739
      %v2534 = vunpack.c.l.b16 %v1740
      %v2535 = vunpack.c.h.b16 %v1740
      %v2536 = vunpack.c.l.b16 %v1741
      %v2537 = vunpack.c.h.b16 %v1741
      %v2538 = vunpack.c.l.b16 %v1742
      %v2539 = vunpack.c.h.b16 %v1742
      %v2540 = vunpack.c.l.b16 %v1743
      %v2541 = vunpack.c.h.b16 %v1743
      %v2542 = vunpack.c.l.b16 %v1744
      %v2543 = vunpack.c.h.b16 %v1744
      %v2544 = vunpack.c.l.b16 %v1745
      %v2545 = vunpack.c.h.b16 %v1745
      %v2546 = vunpack.c.l.b16 %v1746
      %v2547 = vunpack.c.h.b16 %v1746
      %v2548 = vunpack.c.l.b16 %v1747
      %v2549 = vunpack.c.h.b16 %v1747
      %v2550 = vunpack.c.l.b16 %v1748
      %v2551 = vunpack.c.l.b16 %v1749
      %v2552 = vunpack.c.h.b16 %v1749
      %v2553 = vunpack.c.l.b16 %v1750
      %v2554 = vunpack.c.h.b16 %v1750
      %v2555 = vunpack.c.l.b16 %v1751
      %v2556 = vunpack.c.h.b16 %v1751
      %v2557 = vunpack.c.l.b16 %v1752
      %v2558 = vunpack.c.h.b16 %v1752
      %v2559 = vunpack.c.l.b16 %v1753
      %v2560 = vunpack.c.h.b16 %v1753
      %v2561 = vunpack.c.l.b16 %v1754
      %v2562 = vunpack.c.h.b16 %v1754
      %v2563 = vunpack.c.l.b16 %v1755
      %v2564 = vunpack.c.h.b16 %v1755
      %v2565 = vunpack.c.l.b16 %v1756
      %v2566 = vunpack.c.h.b16 %v1756
      %v2567 = vunpack.c.l.b16 %v1757
      %v2568 = vunpack.c.l.b16 %v1758
      %v2569 = vunpack.c.h.b16 %v1758
      %v2570 = vunpack.c.l.b16 %v1759
      %v2571 = vunpack.c.h.b16 %v1759
      %v2572 = vunpack.c.l.b16 %v1760
      %v2573 = vunpack.c.h.b16 %v1760
      %v2574 = vunpack.c.l.b16 %v1761
      %v2575 = vunpack.c.h.b16 %v1761
      %v2576 = vunpack.c.l.b16 %v1762
      %v2577 = vunpack.c.h.b16 %v1762
      %v2578 = vunpack.c.l.b16 %v1763
      %v2579 = vunpack.c.h.b16 %v1763
      %v2580 = vunpack.c.l.b16 %v1764
      %v2581 = vunpack.c.h.b16 %v1764
      %v2582 = vunpack.c.l.b16 %v1765
      %v2583 = vunpack.c.h.b16 %v1765
      %v2584 = vunpack.c.l.b16 %v1766
      %v2585 = vunpack.c.l.b16 %v1767
      %v2586 = vunpack.c.h.b16 %v1767
      %v2587 = vunpack.c.l.b16 %v1768
      %v2588 = vunpack.c.h.b16 %v1768
      %v2589 = vunpack.c.l.b16 %v1769
      %v2590 = vunpack.c.h.b16 %v1769
      %v2591 = vunpack.c.l.b16 %v1770
      %v2592 = vunpack.c.h.b16 %v1770
      %v2593 = vunpack.c.l.b16 %v1771
      %v2594 = vunpack.c.h.b16 %v1771
      %v2595 = vunpack.c.l.b16 %v1772
      %v2596 = vunpack.c.h.b16 %v1772
      %v2597 = vunpack.c.l.b16 %v1773
      %v2598 = vunpack.c.h.b16 %v1773
      %v2599 = vunpack.c.l.b16 %v1774
      %v2600 = vunpack.c.h.b16 %v1774
      %v2601 = vunpack.c.l.b16 %v1775
      %v2602 = vunpack.c.l.b16 %v1776
      %v2603 = vunpack.c.h.b16 %v1776
      %v2604 = vunpack.c.l.b16 %v1777
      %v2605 = vunpack.c.h.b16 %v1777
      %v2606 = vunpack.c.l.b16 %v1778
      %v2607 = vunpack.c.h.b16 %v1778
      %v2608 = vunpack.c.l.b16 %v1779
      %v2609 = vunpack.c.h.b16 %v1779
      %v2610 = vunpack.c.l.b16 %v1780
      %v2611 = vunpack.c.h.b16 %v1780
      %v2612 = vunpack.c.l.b16 %v1781
      %v2613 = vunpack.c.h.b16 %v1781
      %v2614 = vunpack.c.l.b16 %v1782
      %v2615 = vunpack.c.h.b16 %v1782
      %v2616 = vunpack.c.l.b16 %v1783
      %v2617 = vunpack.c.h.b16 %v1783
      %v2618 = vunpack.c.l.b16 %v1784
      %v2619 = vunpack.c.l.b16 %v1785
      %v2620 = vunpack.c.h.b16 %v1785
      %v2621 = vunpack.c.l.b16 %v1786
      %v2622 = vunpack.c.h.b16 %v1786
      %v2623 = vunpack.c.l.b16 %v1787
      %v2624 = vunpack.c.h.b16 %v1787
      %v2625 = vunpack.c.l.b16 %v1788
      %v2626 = vunpack.c.h.b16 %v1788
      %v2627 = vunpack.c.l.b16 %v1789
      %v2628 = vunpack.c.h.b16 %v1789
      %v2629 = vunpack.c.l.b16 %v1790
      %v2630 = vunpack.c.h.b16 %v1790
      %v2631 = vunpack.c.l.b16 %v1791
      %v2632 = vunpack.c.h.b16 %v1791
      %v2633 = vunpack.c.l.b16 %v1792
      %v2634 = vunpack.c.h.b16 %v1792
      %v2635 = vunpack.c.l.b16 %v1793
      %v2636 = vunpack.c.l.b16 %v1794
      %v2637 = vunpack.c.h.b16 %v1794
      %v2638 = vunpack.c.l.b16 %v1795
      %v2639 = vunpack.c.h.b16 %v1795
      %v2640 = vunpack.c.l.b16 %v1796
      %v2641 = vunpack.c.h.b16 %v1796
      %v2642 = vunpack.c.l.b16 %v1797
      %v2643 = vunpack.c.h.b16 %v1797
      %v2644 = vunpack.c.l.b16 %v1798
      %v2645 = vunpack.c.h.b16 %v1798
      %v2646 = vunpack.c.l.b16 %v1799
      %v2647 = vunpack.c.h.b16 %v1799
      %v2648 = vunpack.c.l.b16 %v1800
      %v2649 = vunpack.c.h.b16 %v1800
      %v2650 = vunpack.c.l.b16 %v1801
      %v2651 = vunpack.c.h.b16 %v1801
      %v2652 = vunpack.c.l.b16 %v1802
      %v2653 = vunpack.c.l.b16 %v1803
      %v2654 = vunpack.c.h.b16 %v1803
      %v2655 = vunpack.c.l.b16 %v1804
      %v2656 = vunpack.c.h.b16 %v1804
      %v2657 = vunpack.c.l.b16 %v1805
      %v2658 = vunpack.c.h.b16 %v1805
      %v2659 = vunpack.c.l.b16 %v1806
      %v2660 = vunpack.c.h.b16 %v1806
      %v2661 = vunpack.c.l.b16 %v1807
      %v2662 = vunpack.c.h.b16 %v1807
      %v2663 = vunpack.c.l.b16 %v1808
      %v2664 = vunpack.c.h.b16 %v1808
      %v2665 = vunpack.c.l.b16 %v1809
      %v2666 = vunpack.c.h.b16 %v1809
      %v2667 = vunpack.c.l.b16 %v1810
      %v2668 = vunpack.c.h.b16 %v1810
      %v2669 = vunpack.c.l.b16 %v1811
      %v2670 = vpack.c.b16 %v2126, %v2109
      %v2671 = vpack.c.b16 %v2127, %v2110
      %v2672 = vpack.c.b16 %v2128, %v2111
      %v2673 = vpack.c.b16 %v2129, %v2112
      %v2674 = vpack.c.b16 %v2130, %v2113
      %v2675 = vpack.c.b16 %v2131, %v2114
      %v2676 = vpack.c.b16 %v2132, %v2115
      %v2677 = vpack.c.b16 %v2133, %v2116
      %v2678 = vpack.c.b16 %v2134, %v2117
      %v2679 = vpack.c.b16 %v2135, %v2118
      %v2680 = vpack.c.b16 %v2136, %v2119
      %v2681 = vpack.c.b16 %v2137, %v2120
      %v2682 = vpack.c.b16 %v2138, %v2121
      %v2683 = vpack.c.b16 %v2139, %v2122
      %v2684 = vpack.c.b16 %v2140, %v2123
      %v2685 = vpack.c.b16 %v2141, %v2124
      %v2686 = vpack.c.b16 %v2142, %v2125
      %v2687 = vpack.c.b16 %v2160, %v2143
      %v2688 = vpack.c.b16 %v2161, %v2144
      %v2689 = vpack.c.b16 %v2162, %v2145
      %v2690 = vpack.c.b16 %v2163, %v2146
      %v2691 = vpack.c.b16 %v2164, %v2147
      %v2692 = vpack.c.b16 %v2165, %v2148
      %v2693 = vpack.c.b16 %v2166, %v2149
      %v2694 = vpack.c.b16 %v2167, %v2150
      %v2695 = vpack.c.b16 %v2168, %v2151
      %v2696 = vpack.c.b16 %v2169, %v2152
      %v2697 = vpack.c.b16 %v2170, %v2153
      %v2698 = vpack.c.b16 %v2171, %v2154
      %v2699 = vpack.c.b16 %v2172, %v2155
      %v2700 = vpack.c.b16 %v2173, %v2156
      %v2701 = vpack.c.b16 %v2174, %v2157
      %v2702 = vpack.c.b16 %v2175, %v2158
      %v2703 = vpack.c.b16 %v2176, %v2159
      %v2704 = vpack.c.b16 %v2194, %v2177
      %v2705 = vpack.c.b16 %v2195, %v2178
      %v2706 = vpack.c.b16 %v2196, %v2179
      %v2707 = vpack.c.b16 %v2197, %v2180
      %v2708 = vpack.c.b16 %v2198, %v2181
      %v2709 = vpack.c.b16 %v2199, %v2182
      %v2710 = vpack.c.b16 %v2200, %v2183
      %v2711 = vpack.c.b16 %v2201, %v2184
      %v2712 = vpack.c.b16 %v2202, %v2185
      %v2713 = vpack.c.b16 %v2203, %v2186
      %v2714 = vpack.c.b16 %v2204, %v2187
      %v2715 = vpack.c.b16 %v2205, %v2188
      %v2716 = vpack.c.b16 %v2206, %v2189
      %v2717 = vpack.c.b16 %v2207, %v2190
      %v2718 = vpack.c.b16 %v2208, %v2191
      %v2719 = vpack.c.b16 %v2209, %v2192
      %v2720 = vpack.c.b16 %v2210, %v2193
      %v2721 = vpack.c.b16 %v2228, %v2211
      %v2722 = vpack.c.b16 %v2229, %v2212
      %v2723 = vpack.c.b16 %v2230, %v2213
      %v2724 = vpack.c.b16 %v2231, %v2214
      %v2725 = vpack.c.b16 %v2232, %v2215
      %v2726 = vpack.c.b16 %v2233, %v2216
      %v2727 = vpack.c.b16 %v2234, %v2217
      %v2728 = vpack.c.b16 %v2235, %v2218
      %v2729 = vpack.c.b16 %v2236, %v2219
      %v2730 = vpack.c.b16 %v2237, %v2220
      %v2731 = vpack.c.b16 %v2238, %v2221
      %v2732 = vpack.c.b16 %v2239, %v2222
      %v2733 = vpack.c.b16 %v2240, %v2223
      %v2734 = vpack.c.b16 %v2241, %v2224
      %v2735 = vpack.c.b16 %v2242, %v2225
      %v2736 = vpack.c.b16 %v2243, %v2226
      %v2737 = vpack.c.b16 %v2244, %v2227
      %v2738 = vpack.c.b16 %v2262, %v2245
      %v2739 = vpack.c.b16 %v2263, %v2246
      %v2740 = vpack.c.b16 %v2264, %v2247
      %v2741 = vpack.c.b16 %v2265, %v2248
      %v2742 = vpack.c.b16 %v2266, %v2249
      %v2743 = vpack.c.b16 %v2267, %v2250
      %v2744 = vpack.c.b16 %v2268, %v2251
      %v2745 = vpack.c.b16 %v2269, %v2252
      %v2746 = vpack.c.b16 %v2270, %v2253
      %v2747 = vpack.c.b16 %v2271, %v2254
      %v2748 = vpack.c.b16 %v2272, %v2255
      %v2749 = vpack.c.b16 %v2273, %v2256
      %v2750 = vpack.c.b16 %v2274, %v2257
      %v2751 = vpack.c.b16 %v2275, %v2258
      %v2752 = vpack.c.b16 %v2276, %v2259
      %v2753 = vpack.c.b16 %v2277, %v2260
      %v2754 = vpack.c.b16 %v2278, %v2261
      %v2755 = vpack.c.b16 %v2296, %v2279
      %v2756 = vpack.c.b16 %v2297, %v2280
      %v2757 = vpack.c.b16 %v2298, %v2281
      %v2758 = vpack.c.b16 %v2299, %v2282
      %v2759 = vpack.c.b16 %v2300, %v2283
      %v2760 = vpack.c.b16 %v2301, %v2284
      %v2761 = vpack.c.b16 %v2302, %v2285
      %v2762 = vpack.c.b16 %v2303, %v2286
      %v2763 = vpack.c.b16 %v2304, %v2287
      %v2764 = vpack.c.b16 %v2305, %v2288
      %v2765 = vpack.c.b16 %v2306, %v2289
      %v2766 = vpack.c.b16 %v2307, %v2290
      %v2767 = vpack.c.b16 %v2308, %v2291
      %v2768 = vpack.c.b16 %v2309, %v2292
      %v2769 = vpack.c.b16 %v2310, %v2293
      %v2770 = vpack.c.b16 %v2311, %v2294
      %v2771 = vpack.c.b16 %v2312, %v2295
      %v2772 = vpack.c.b16 %v2330, %v2313
      %v2773 = vpack.c.b16 %v2331, %v2314
      %v2774 = vpack.c.b16 %v2332, %v2315
      %v2775 = vpack.c.b16 %v2333, %v2316
      %v2776 = vpack.c.b16 %v2334, %v2317
      %v2777 = vpack.c.b16 %v2335, %v2318
      %v2778 = vpack.c.b16 %v2336, %v2319
      %v2779 = vpack.c.b16 %v2337, %v2320
      %v2780 = vpack.c.b16 %v2338, %v2321
      %v2781 = vpack.c.b16 %v2339, %v2322
      %v2782 = vpack.c.b16 %v2340, %v2323
      %v2783 = vpack.c.b16 %v2341, %v2324
      %v2784 = vpack.c.b16 %v2342, %v2325
      %v2785 = vpack.c.b16 %v2343, %v2326
      %v2786 = vpack.c.b16 %v2344, %v2327
      %v2787 = vpack.c.b16 %v2345, %v2328
      %v2788 = vpack.c.b16 %v2346, %v2329
      %v2789 = vpack.c.b16 %v2364, %v2347
      %v2790 = vpack.c.b16 %v2365, %v2348
      %v2791 = vpack.c.b16 %v2366, %v2349
      %v2792 = vpack.c.b16 %v2367, %v2350
      %v2793 = vpack.c.b16 %v2368, %v2351
      %v2794 = vpack.c.b16 %v2369, %v2352
      %v2795 = vpack.c.b16 %v2370, %v2353
      %v2796 = vpack.c.b16 %v2371, %v2354
      %v2797 = vpack.c.b16 %v2372, %v2355
      %v2798 = vpack.c.b16 %v2373, %v2356
      %v2799 = vpack.c.b16 %v2374, %v2357
      %v2800 = vpack.c.b16 %v2375, %v2358
      %v2801 = vpack.c.b16 %v2376, %v2359
      %v2802 = vpack.c.b16 %v2377, %v2360
      %v2803 = vpack.c.b16 %v2378, %v2361
      %v2804 = vpack.c.b16 %v2379, %v2362
      %v2805 = vpack.c.b16 %v2380, %v2363
      %v2806 = vpack.c.b16 %v2398, %v2381
      %v2807 = vpack.c.b16 %v2399, %v2382
      %v2808 = vpack.c.b16 %v2400, %v2383
      %v2809 = vpack.c.b16 %v2401, %v2384
      %v2810 = vpack.c.b16 %v2402, %v2385
      %v2811 = vpack.c.b16 %v2403, %v2386
      %v2812 = vpack.c.b16 %v2404, %v2387
      %v2813 = vpack.c.b16 %v2405, %v2388
      %v2814 = vpack.c.b16 %v2406, %v2389
      %v2815 = vpack.c.b16 %v2407, %v2390
      %v2816 = vpack.c.b16 %v2408, %v2391
      %v2817 = vpack.c.b16 %v2409, %v2392
      %v2818 = vpack.c.b16 %v2410, %v2393
      %v2819 = vpack.c.b16 %v2411, %v2394
      %v2820 = vpack.c.b16 %v2412, %v2395
      %v2821 = vpack.c.b16 %v2413, %v2396
      %v2822 = vpack.c.b16 %v2414, %v2397
      %v2823 = vpack.c.b16 %v2432, %v2415
      %v2824 = vpack.c.b16 %v2433, %v2416
      %v2825 = vpack.c.b16 %v2434, %v2417
      %v2826 = vpack.c.b16 %v2435, %v2418
      %v2827 = vpack.c.b16 %v2436, %v2419
      %v2828 = vpack.c.b16 %v2437, %v2420
      %v2829 = vpack.c.b16 %v2438, %v2421
      %v2830 = vpack.c.b16 %v2439, %v2422
      %v2831 = vpack.c.b16 %v2440, %v2423
      %v2832 = vpack.c.b16 %v2441, %v2424
      %v2833 = vpack.c.b16 %v2442, %v2425
      %v2834 = vpack.c.b16 %v2443, %v2426
      %v2835 = vpack.c.b16 %v2444, %v2427
      %v2836 = vpack.c.b16 %v2445, %v2428
      %v2837 = vpack.c.b16 %v2446, %v2429
      %v2838 = vpack.c.b16 %v2447, %v2430
      %v2839 = vpack.c.b16 %v2448, %v2431
      %v2840 = vpack.c.b16 %v2466, %v2449
      %v2841 = vpack.c.b16 %v2467, %v2450
      %v2842 = vpack.c.b16 %v2468, %v2451
      %v2843 = vpack.c.b16 %v2469, %v2452
      %v2844 = vpack.c.b16 %v2470, %v2453
      %v2845 = vpack.c.b16 %v2471, %v2454
      %v2846 = vpack.c.b16 %v2472, %v2455
      %v2847 = vpack.c.b16 %v2473, %v2456
      %v2848 = vpack.c.b16 %v2474, %v2457
      %v2849 = vpack.c.b16 %v2475, %v2458
      %v2850 = vpack.c.b16 %v2476, %v2459
      %v2851 = vpack.c.b16 %v2477, %v2460
      %v2852 = vpack.c.b16 %v2478, %v2461
      %v2853 = vpack.c.b16 %v2479, %v2462
      %v2854 = vpack.c.b16 %v2480, %v2463
      %v2855 = vpack.c.b16 %v2481, %v2464
      %v2856 = vpack.c.b16 %v2482, %v2465
      %v2857 = vpack.c.b16 %v2500, %v2483
      %v2858 = vpack.c.b16 %v2501, %v2484
      %v2859 = vpack.c.b16 %v2502, %v2485
      %v2860 = vpack.c.b16 %v2503, %v2486
      %v2861 = vpack.c.b16 %v2504, %v2487
      %v2862 = vpack.c.b16 %v2505, %v2488
      %v2863 = vpack.c.b16 %v2506, %v2489
      %v2864 = vpack.c.b16 %v2507, %v2490
      %v2865 = vpack.c.b16 %v2508, %v2491
      %v2866 = vpack.c.b16 %v2509, %v2492
      %v2867 = vpack.c.b16 %v2510, %v2493
      %v2868 = vpack.c.b16 %v2511, %v2494
      %v2869 = vpack.c.b16 %v2512, %v2495
      %v2870 = vpack.c.b16 %v2513, %v2496
      %v2871 = vpack.c.b16 %v2514, %v2497
      %v2872 = vpack.c.b16 %v2515, %v2498
      %v2873 = vpack.c.b16 %v2516, %v2499
      %v2874 = vpack.c.b16 %v2534, %v2517
      %v2875 = vpack.c.b16 %v2535, %v2518
      %v2876 = vpack.c.b16 %v2536, %v2519
      %v2877 = vpack.c.b16 %v2537, %v2520
      %v2878 = vpack.c.b16 %v2538, %v2521
      %v2879 = vpack.c.b16 %v2539, %v2522
      %v2880 = vpack.c.b16 %v2540, %v2523
      %v2881 = vpack.c.b16 %v2541, %v2524
      %v2882 = vpack.c.b16 %v2542, %v2525
      %v2883 = vpack.c.b16 %v2543, %v2526
      %v2884 = vpack.c.b16 %v2544, %v2527
      %v2885 = vpack.c.b16 %v2545, %v2528
      %v2886 = vpack.c.b16 %v2546, %v2529
      %v2887 = vpack.c.b16 %v2547, %v2530
      %v2888 = vpack.c.b16 %v2548, %v2531
      %v2889 = vpack.c.b16 %v2549, %v2532
      %v2890 = vpack.c.b16 %v2550, %v2533
      %v2891 = vpack.c.b16 %v2568, %v2551
      %v2892 = vpack.c.b16 %v2569, %v2552
      %v2893 = vpack.c.b16 %v2570, %v2553
      %v2894 = vpack.c.b16 %v2571, %v2554
      %v2895 = vpack.c.b16 %v2572, %v2555
      %v2896 = vpack.c.b16 %v2573, %v2556
      %v2897 = vpack.c.b16 %v2574, %v2557
      %v2898 = vpack.c.b16 %v2575, %v2558
      %v2899 = vpack.c.b16 %v2576, %v2559
      %v2900 = vpack.c.b16 %v2577, %v2560
      %v2901 = vpack.c.b16 %v2578, %v2561
      %v2902 = vpack.c.b16 %v2579, %v2562
      %v2903 = vpack.c.b16 %v2580, %v2563
      %v2904 = vpack.c.b16 %v2581, %v2564
      %v2905 = vpack.c.b16 %v2582, %v2565
      %v2906 = vpack.c.b16 %v2583, %v2566
      %v2907 = vpack.c.b16 %v2584, %v2567
      %v2908 = vpack.c.b16 %v2602, %v2585
      %v2909 = vpack.c.b16 %v2603, %v2586
      %v2910 = vpack.c.b16 %v2604, %v2587
      %v2911 = vpack.c.b16 %v2605, %v2588
      %v2912 = vpack.c.b16 %v2606, %v2589
      %v2913 = vpack.c.b16 %v2607, %v2590
      %v2914 = vpack.c.b16 %v2608, %v2591
      %v2915 = vpack.c.b16 %v2609, %v2592
      %v2916 = vpack.c.b16 %v2610, %v2593
      %v2917 = vpack.c.b16 %v2611, %v2594
      %v2918 = vpack.c.b16 %v2612, %v2595
      %v2919 = vpack.c.b16 %v2613, %v2596
      %v2920 = vpack.c.b16 %v2614, %v2597
      %v2921 = vpack.c.b16 %v2615, %v2598
      %v2922 = vpack.c.b16 %v2616, %v2599
      %v2923 = vpack.c.b16 %v2617, %v2600
      %v2924 = vpack.c.b16 %v2618, %v2601
      %v2925 = vpack.c.b16 %v2636, %v2619
      %v2926 = vpack.c.b16 %v2637, %v2620
      %v2927 = vpack.c.b16 %v2638, %v2621
      %v2928 = vpack.c.b16 %v2639, %v2622
      %v2929 = vpack.c.b16 %v2640, %v2623
      %v2930 = vpack.c.b16 %v2641, %v2624
      %v2931 = vpack.c.b16 %v2642, %v2625
      %v2932 = vpack.c.b16 %v2643, %v2626
      %v2933 = vpack.c.b16 %v2644, %v2627
      %v2934 = vpack.c.b16 %v2645, %v2628
      %v2935 = vpack.c.b16 %v2646, %v2629
      %v2936 = vpack.c.b16 %v2647, %v2630
      %v2937 = vpack.c.b16 %v2648, %v2631
      %v2938 = vpack.c.b16 %v2649, %v2632
      %v2939 = vpack.c.b16 %v2650, %v2633
      %v2940 = vpack.c.b16 %v2651, %v2634
      %v2941 = vpack.c.b16 %v2652, %v2635
      %v2942 = vpack.c.b16 %v2653, %v2653
      %v2943 = vpack.c.b16 %v2654, %v2654
      %v2944 = vpack.c.b16 %v2655, %v2655
      %v2945 = vpack.c.b16 %v2656, %v2656
      %v2946 = vpack.c.b16 %v2657, %v2657
      %v2947 = vpack.c.b16 %v2658, %v2658
      %v2948 = vpack.c.b16 %v2659, %v2659
      %v2949 = vpack.c.b16 %v2660, %v2660
      %v2950 = vpack.c.b16 %v2661, %v2661
      %v2951 = vpack.c.b16 %v2662, %v2662
      %v2952 = vpack.c.b16 %v2663, %v2663
      %v2953 = vpack.c.b16 %v2664, %v2664
      %v2954 = vpack.c.b16 %v2665, %v2665
      %v2955 = vpack.c.b16 %v2666, %v2666
      %v2956 = vpack.c.b16 %v2667, %v2667
      %v2957 = vpack.c.b16 %v2668, %v2668
      %v2958 = vpack.c.b16 %v2669, %v2669
      %vm3231 = vcmask 523264
      %v3233 = vsel %vm3231, %v2686, 0
      %v3236 = vsel %vm3231, %v2703, 0
      %v3239 = vsel %vm3231, %v2720, 0
      %v3242 = vsel %vm3231, %v2737, 0
      %v3245 = vsel %vm3231, %v2754, 0
      %v3248 = vsel %vm3231, %v2771, 0
      %v3251 = vsel %vm3231, %v2788, 0
      %v3254 = vsel %vm3231, %v2805, 0
      %v3257 = vsel %vm3231, %v2822, 0
      %v3260 = vsel %vm3231, %v2839, 0
      %v3263 = vsel %vm3231, %v2856, 0
      %v3266 = vsel %vm3231, %v2873, 0
      %v3269 = vsel %vm3231, %v2890, 0
      %v3272 = vsel %vm3231, %v2907, 0
      %v3275 = vsel %vm3231, %v2924, 0
      %v3278 = vsel %vm3231, %v2941, 0
      %v3281 = vsel %vm3231, %v2958, 0
      %3283 = vmatprep.subr.bf16.mxu0 %v1252
      %3284 = vmatpush1.bf16.msra.mxu0 %v1251
      %3285 = vmatprep.subr.bf16.mxu0 %v1254
      %3286 = vmatpush1.bf16.msra.mxu0 %v1253
      %3287 = vmatprep.subr.bf16.mxu0 %v1256
      %3288 = vmatpush1.bf16.msra.mxu0 %v1255
      %3289 = vmatprep.subr.bf16.mxu0 %v1258
      %3290 = vmatpush1.bf16.msra.mxu0 %v1257
      %3291 = vmatprep.subr.bf16.mxu0 %v1260
      %3292 = vmatpush1.bf16.msra.mxu0 %v1259
      %3293 = vmatprep.subr.bf16.mxu0 %v1262
      %3294 = vmatpush1.bf16.msra.mxu0 %v1261
      %3295 = vmatprep.subr.bf16.mxu0 %v1264
      %3296 = vmatpush1.bf16.msra.mxu0 %v1263
      %3297 = vmatprep.subr.bf16.mxu0 %v1266
      %3298 = vmatpush1.bf16.msra.mxu0 %v1265
      %3299 = vmatprep.subr.bf16.mxu0 %v1268
      %3300 = vmatpush1.bf16.msra.mxu0 %v1267
      %3301 = vmatprep.subr.bf16.mxu0 %v1270
      %3302 = vmatpush1.bf16.msra.mxu0 %v1269
      %3303 = vmatprep.subr.bf16.mxu0 %v1272
      %3304 = vmatpush1.bf16.msra.mxu0 %v1271
      %3305 = vmatprep.subr.bf16.mxu0 %v1274
      %3306 = vmatpush1.bf16.msra.mxu0 %v1273
      %3307 = vmatprep.subr.bf16.mxu0 %v1276
      %3308 = vmatpush1.bf16.msra.mxu0 %v1275
      %3309 = vmatprep.subr.bf16.mxu0 %v1278
      %3310 = vmatpush1.bf16.msra.mxu0 %v1277
      %3311 = vmatprep.subr.bf16.mxu0 %v1280
      %3312 = vmatpush1.bf16.msra.mxu0 %v1279
      %3313 = vmatprep.subr.bf16.mxu0 %v1282
      %3314 = vmatpush1.bf16.msra.mxu0 %v1281
      %3315 = vmatprep.mubr.bf16.mxu0 %v2671
      %3316 = vmatmul.mubr.bf16.gmra.mrb[0].mxu0 %v2670
      %v3317 = vpop.f32.mrb[0].mxu0
      %v3318 = vadd.f32 0.0, %v3317
      %v3319 = vpop.f32.mrb[0].mxu0
      %v3320 = vadd.f32 0.0, %v3319
      %v3321 = vpop.f32.mrb[0].mxu0
      %v3322 = vadd.f32 0.0, %v3321
      %v3323 = vpop.f32.mrb[0].mxu0
      %v3324 = vadd.f32 0.0, %v3323
      %3325 = vmatprep.mubr.bf16.mxu0 %v2688
      %3326 = vmatmul.mubr.bf16.gmra.mrb[0].mxu0 %v2687
      %v3327 = vpop.f32.mrb[0].mxu0
      %v3328 = vadd.f32 0.0, %v3327
      %v3329 = vpop.f32.mrb[0].mxu0
      %v3330 = vadd.f32 0.0, %v3329
      %v3331 = vpop.f32.mrb[0].mxu0
      %v3332 = vadd.f32 0.0, %v3331
      %v3333 = vpop.f32.mrb[0].mxu0
      %v3334 = vadd.f32 0.0, %v3333
      %3335 = vmatprep.mubr.bf16.mxu0 %v2705
      %3336 = vmatmul.mubr.bf16.gmra.mrb[0].mxu0 %v2704
      %v3337 = vpop.f32.mrb[0].mxu0
      %v3338 = vadd.f32 0.0, %v3337
      %v3339 = vpop.f32.mrb[0].mxu0
      %v3340 = vadd.f32 0.0, %v3339
      %v3341 = vpop.f32.mrb[0].mxu0
      %v3342 = vadd.f32 0.0, %v3341
      %v3343 = vpop.f32.mrb[0].mxu0
      %v3344 = vadd.f32 0.0, %v3343
      %3345 = vmatprep.mubr.bf16.mxu0 %v2722
      %3346 = vmatmul.mubr.bf16.gmra.mrb[0].mxu0 %v2721
      %v3347 = vpop.f32.mrb[0].mxu0
      %v3348 = vadd.f32 0.0, %v3347
      %v3349 = vpop.f32.mrb[0].mxu0
      %v3350 = vadd.f32 0.0, %v3349
      %v3351 = vpop.f32.mrb[0].mxu0
      %v3352 = vadd.f32 0.0, %v3351
      %v3353 = vpop.f32.mrb[0].mxu0
      %v3354 = vadd.f32 0.0, %v3353
      %3355 = vmatprep.mubr.bf16.mxu0 %v2739
      %3356 = vmatmul.mubr.bf16.gmra.mrb[0].mxu0 %v2738
      %v3357 = vpop.f32.mrb[0].mxu0
      %v3358 = vadd.f32 0.0, %v3357
      %v3359 = vpop.f32.mrb[0].mxu0
      %v3360 = vadd.f32 0.0, %v3359
      %v3361 = vpop.f32.mrb[0].mxu0
      %v3362 = vadd.f32 0.0, %v3361
      %v3363 = vpop.f32.mrb[0].mxu0
      %v3364 = vadd.f32 0.0, %v3363
      %3365 = vmatprep.mubr.bf16.mxu0 %v2756
      %3366 = vmatmul.mubr.bf16.gmra.mrb[0].mxu0 %v2755
      %v3367 = vpop.f32.mrb[0].mxu0
      %v3368 = vadd.f32 0.0, %v3367
      %v3369 = vpop.f32.mrb[0].mxu0
      %v3370 = vadd.f32 0.0, %v3369
      %v3371 = vpop.f32.mrb[0].mxu0
      %v3372 = vadd.f32 0.0, %v3371
      %v3373 = vpop.f32.mrb[0].mxu0
      %v3374 = vadd.f32 0.0, %v3373
      %3375 = vmatprep.mubr.bf16.mxu0 %v2773
      %3376 = vmatmul.mubr.bf16.gmra.mrb[0].mxu0 %v2772
      %v3377 = vpop.f32.mrb[0].mxu0
      %v3378 = vadd.f32 0.0, %v3377
      %v3379 = vpop.f32.mrb[0].mxu0
      %v3380 = vadd.f32 0.0, %v3379
      %v3381 = vpop.f32.mrb[0].mxu0
      %v3382 = vadd.f32 0.0, %v3381
      %v3383 = vpop.f32.mrb[0].mxu0
      %v3384 = vadd.f32 0.0, %v3383
      %3385 = vmatprep.mubr.bf16.mxu0 %v2790
      %3386 = vmatmul.mubr.bf16.gmra.mrb[0].mxu0 %v2789
      %v3387 = vpop.f32.mrb[0].mxu0
      %v3388 = vadd.f32 0.0, %v3387
      %v3389 = vpop.f32.mrb[0].mxu0
      %v3390 = vadd.f32 0.0, %v3389
      %v3391 = vpop.f32.mrb[0].mxu0
      %v3392 = vadd.f32 0.0, %v3391
      %v3393 = vpop.f32.mrb[0].mxu0
      %v3394 = vadd.f32 0.0, %v3393
      %3395 = vmatprep.mubr.bf16.mxu0 %v2807
      %3396 = vmatmul.mubr.bf16.gmra.mrb[0].mxu0 %v2806
      %v3397 = vpop.f32.mrb[0].mxu0
      %v3398 = vadd.f32 0.0, %v3397
      %v3399 = vpop.f32.mrb[0].mxu0
      %v3400 = vadd.f32 0.0, %v3399
      %v3401 = vpop.f32.mrb[0].mxu0
      %v3402 = vadd.f32 0.0, %v3401
      %v3403 = vpop.f32.mrb[0].mxu0
      %v3404 = vadd.f32 0.0, %v3403
      %3405 = vmatprep.mubr.bf16.mxu0 %v2824
      %3406 = vmatmul.mubr.bf16.gmra.mrb[0].mxu0 %v2823
      %v3407 = vpop.f32.mrb[0].mxu0
      %v3408 = vadd.f32 0.0, %v3407
      %v3409 = vpop.f32.mrb[0].mxu0
      %v3410 = vadd.f32 0.0, %v3409
      %v3411 = vpop.f32.mrb[0].mxu0
      %v3412 = vadd.f32 0.0, %v3411
      %v3413 = vpop.f32.mrb[0].mxu0
      %v3414 = vadd.f32 0.0, %v3413
      %3415 = vmatprep.mubr.bf16.mxu0 %v2841
      %3416 = vmatmul.mubr.bf16.gmra.mrb[0].mxu0 %v2840
      %v3417 = vpop.f32.mrb[0].mxu0
      %v3418 = vadd.f32 0.0, %v3417
      %v3419 = vpop.f32.mrb[0].mxu0
      %v3420 = vadd.f32 0.0, %v3419
      %v3421 = vpop.f32.mrb[0].mxu0
      %v3422 = vadd.f32 0.0, %v3421
      %v3423 = vpop.f32.mrb[0].mxu0
      %v3424 = vadd.f32 0.0, %v3423
      %3425 = vmatprep.mubr.bf16.mxu0 %v2858
      %3426 = vmatmul.mubr.bf16.gmra.mrb[0].mxu0 %v2857
      %v3427 = vpop.f32.mrb[0].mxu0
      %v3428 = vadd.f32 0.0, %v3427
      %v3429 = vpop.f32.mrb[0].mxu0
      %v3430 = vadd.f32 0.0, %v3429
      %v3431 = vpop.f32.mrb[0].mxu0
      %v3432 = vadd.f32 0.0, %v3431
      %v3433 = vpop.f32.mrb[0].mxu0
      %v3434 = vadd.f32 0.0, %v3433
      %3435 = vmatprep.mubr.bf16.mxu0 %v2875
      %3436 = vmatmul.mubr.bf16.gmra.mrb[0].mxu0 %v2874
      %v3437 = vpop.f32.mrb[0].mxu0
      %v3438 = vadd.f32 0.0, %v3437
      %v3439 = vpop.f32.mrb[0].mxu0
      %v3440 = vadd.f32 0.0, %v3439
      %v3441 = vpop.f32.mrb[0].mxu0
      %v3442 = vadd.f32 0.0, %v3441
      %v3443 = vpop.f32.mrb[0].mxu0
      %v3444 = vadd.f32 0.0, %v3443
      %3445 = vmatprep.mubr.bf16.mxu0 %v2892
      %3446 = vmatmul.mubr.bf16.gmra.mrb[0].mxu0 %v2891
      %v3447 = vpop.f32.mrb[0].mxu0
      %v3448 = vadd.f32 0.0, %v3447
      %v3449 = vpop.f32.mrb[0].mxu0
      %v3450 = vadd.f32 0.0, %v3449
      %v3451 = vpop.f32.mrb[0].mxu0
      %v3452 = vadd.f32 0.0, %v3451
      %v3453 = vpop.f32.mrb[0].mxu0
      %v3454 = vadd.f32 0.0, %v3453
      %3455 = vmatprep.mubr.bf16.mxu0 %v2909
      %3456 = vmatmul.mubr.bf16.gmra.mrb[0].mxu0 %v2908
      %v3457 = vpop.f32.mrb[0].mxu0
      %v3458 = vadd.f32 0.0, %v3457
      %v3459 = vpop.f32.mrb[0].mxu0
      %v3460 = vadd.f32 0.0, %v3459
      %v3461 = vpop.f32.mrb[0].mxu0
      %v3462 = vadd.f32 0.0, %v3461
      %v3463 = vpop.f32.mrb[0].mxu0
      %v3464 = vadd.f32 0.0, %v3463
      %3465 = vmatprep.mubr.bf16.mxu0 %v2926
      %3466 = vmatmul.mubr.bf16.gmra.mrb[0].mxu0 %v2925
      %v3467 = vpop.f32.mrb[0].mxu0
      %v3468 = vadd.f32 0.0, %v3467
      %v3469 = vpop.f32.mrb[0].mxu0
      %v3470 = vadd.f32 0.0, %v3469
      %v3471 = vpop.f32.mrb[0].mxu0
      %v3472 = vadd.f32 0.0, %v3471
      %v3473 = vpop.f32.mrb[0].mxu0
      %v3474 = vadd.f32 0.0, %v3473
      %3475 = vmatprep.mubr.bf16.mxu0 %v2943
      %3476 = vmatmul.mubr.bf16.gmra.mrb[0].mxu0 %v2942
      %v3477 = vpop.f32.mrb[0].mxu0
      %v3478 = vadd.f32 0.0, %v3477
      %v3479 = vpop.f32.mrb[0].mxu0
      %v3480 = vadd.f32 0.0, %v3479
      %v3481 = vpop.f32.mrb[0].mxu0
      %v3482 = vpop.f32.mrb[0].mxu0
      %3483 = vdwg.mxu0
      %3484 = vmatprep.subr.bf16.mxu0 %v1284
      %3485 = vmatpush1.bf16.msra.mxu0 %v1283
      %3486 = vmatprep.subr.bf16.mxu0 %v1286
      %3487 = vmatpush1.bf16.msra.mxu0 %v1285
      %3488 = vmatprep.subr.bf16.mxu0 %v1288
      %3489 = vmatpush1.bf16.msra.mxu0 %v1287
      %3490 = vmatprep.subr.bf16.mxu0 %v1290
      %3491 = vmatpush1.bf16.msra.mxu0 %v1289
      %3492 = vmatprep.subr.bf16.mxu0 %v1292
      %3493 = vmatpush1.bf16.msra.mxu0 %v1291
      %3494 = vmatprep.subr.bf16.mxu0 %v1294
      %3495 = vmatpush1.bf16.msra.mxu0 %v1293
      %3496 = vmatprep.subr.bf16.mxu0 %v1296
      %3497 = vmatpush1.bf16.msra.mxu0 %v1295
      %3498 = vmatprep.subr.bf16.mxu0 %v1298
      %3499 = vmatpush1.bf16.msra.mxu0 %v1297
      %3500 = vmatprep.subr.bf16.mxu0 %v1300
      %3501 = vmatpush1.bf16.msra.mxu0 %v1299
      %3502 = vmatprep.subr.bf16.mxu0 %v1302
      %3503 = vmatpush1.bf16.msra.mxu0 %v1301
      %3504 = vmatprep.subr.bf16.mxu0 %v1304
      %3505 = vmatpush1.bf16.msra.mxu0 %v1303
      %3506 = vmatprep.subr.bf16.mxu0 %v1306
      %3507 = vmatpush1.bf16.msra.mxu0 %v1305
      %3508 = vmatprep.subr.bf16.mxu0 %v1308
      %3509 = vmatpush1.bf16.msra.mxu0 %v1307
      %3510 = vmatprep.subr.bf16.mxu0 %v1310
      %3511 = vmatpush1.bf16.msra.mxu0 %v1309
      %3512 = vmatprep.subr.bf16.mxu0 %v1312
      %3513 = vmatpush1.bf16.msra.mxu0 %v1311
      %3514 = vmatprep.subr.bf16.mxu0 %v1314
      %3515 = vmatpush1.bf16.msra.mxu0 %v1313
      %3516 = vmatprep.mubr.bf16.mxu0 %v2673
      %3517 = vmatmul.mubr.bf16.gmra.mrb[0].mxu0 %v2672
      %v3518 = vpop.f32.mrb[0].mxu0
      %v3519 = vadd.f32 %v3318, %v3518
      %v3520 = vpop.f32.mrb[0].mxu0
      %v3521 = vadd.f32 %v3320, %v3520
      %v3522 = vpop.f32.mrb[0].mxu0
      %v3523 = vadd.f32 %v3322, %v3522
      %v3524 = vpop.f32.mrb[0].mxu0
      %v3525 = vadd.f32 %v3324, %v3524
      %3526 = vmatprep.mubr.bf16.mxu0 %v2690
      %3527 = vmatmul.mubr.bf16.gmra.mrb[0].mxu0 %v2689
      %v3528 = vpop.f32.mrb[0].mxu0
      %v3529 = vadd.f32 %v3328, %v3528
      %v3530 = vpop.f32.mrb[0].mxu0
      %v3531 = vadd.f32 %v3330, %v3530
      %v3532 = vpop.f32.mrb[0].mxu0
      %v3533 = vadd.f32 %v3332, %v3532
      %v3534 = vpop.f32.mrb[0].mxu0
      %v3535 = vadd.f32 %v3334, %v3534
      %3536 = vmatprep.mubr.bf16.mxu0 %v2707
      %3537 = vmatmul.mubr.bf16.gmra.mrb[0].mxu0 %v2706
      %v3538 = vpop.f32.mrb[0].mxu0
      %v3539 = vadd.f32 %v3338, %v3538
      %v3540 = vpop.f32.mrb[0].mxu0
      %v3541 = vadd.f32 %v3340, %v3540
      %v3542 = vpop.f32.mrb[0].mxu0
      %v3543 = vadd.f32 %v3342, %v3542
      %v3544 = vpop.f32.mrb[0].mxu0
      %v3545 = vadd.f32 %v3344, %v3544
      %3546 = vmatprep.mubr.bf16.mxu0 %v2724
      %3547 = vmatmul.mubr.bf16.gmra.mrb[0].mxu0 %v2723
      %v3548 = vpop.f32.mrb[0].mxu0
      %v3549 = vadd.f32 %v3348, %v3548
      %v3550 = vpop.f32.mrb[0].mxu0
      %v3551 = vadd.f32 %v3350, %v3550
      %v3552 = vpop.f32.mrb[0].mxu0
      %v3553 = vadd.f32 %v3352, %v3552
      %v3554 = vpop.f32.mrb[0].mxu0
      %v3555 = vadd.f32 %v3354, %v3554
      %3556 = vmatprep.mubr.bf16.mxu0 %v2741
      %3557 = vmatmul.mubr.bf16.gmra.mrb[0].mxu0 %v2740
      %v3558 = vpop.f32.mrb[0].mxu0
      %v3559 = vadd.f32 %v3358, %v3558
      %v3560 = vpop.f32.mrb[0].mxu0
      %v3561 = vadd.f32 %v3360, %v3560
      %v3562 = vpop.f32.mrb[0].mxu0
      %v3563 = vadd.f32 %v3362, %v3562
      %v3564 = vpop.f32.mrb[0].mxu0
      %v3565 = vadd.f32 %v3364, %v3564
      %3566 = vmatprep.mubr.bf16.mxu0 %v2758
      %3567 = vmatmul.mubr.bf16.gmra.mrb[0].mxu0 %v2757
      %v3568 = vpop.f32.mrb[0].mxu0
      %v3569 = vadd.f32 %v3368, %v3568
      %v3570 = vpop.f32.mrb[0].mxu0
      %v3571 = vadd.f32 %v3370, %v3570
      %v3572 = vpop.f32.mrb[0].mxu0
      %v3573 = vadd.f32 %v3372, %v3572
      %v3574 = vpop.f32.mrb[0].mxu0
      %v3575 = vadd.f32 %v3374, %v3574
      %3576 = vmatprep.mubr.bf16.mxu0 %v2775
      %3577 = vmatmul.mubr.bf16.gmra.mrb[0].mxu0 %v2774
      %v3578 = vpop.f32.mrb[0].mxu0
      %v3579 = vadd.f32 %v3378, %v3578
      %v3580 = vpop.f32.mrb[0].mxu0
      %v3581 = vadd.f32 %v3380, %v3580
      %v3582 = vpop.f32.mrb[0].mxu0
      %v3583 = vadd.f32 %v3382, %v3582
      %v3584 = vpop.f32.mrb[0].mxu0
      %v3585 = vadd.f32 %v3384, %v3584
      %3586 = vmatprep.mubr.bf16.mxu0 %v2792
      %3587 = vmatmul.mubr.bf16.gmra.mrb[0].mxu0 %v2791
      %v3588 = vpop.f32.mrb[0].mxu0
      %v3589 = vadd.f32 %v3388, %v3588
      %v3590 = vpop.f32.mrb[0].mxu0
      %v3591 = vadd.f32 %v3390, %v3590
      %v3592 = vpop.f32.mrb[0].mxu0
      %v3593 = vadd.f32 %v3392, %v3592
      %v3594 = vpop.f32.mrb[0].mxu0
      %v3595 = vadd.f32 %v3394, %v3594
      %3596 = vmatprep.mubr.bf16.mxu0 %v2809
      %3597 = vmatmul.mubr.bf16.gmra.mrb[0].mxu0 %v2808
      %v3598 = vpop.f32.mrb[0].mxu0
      %v3599 = vadd.f32 %v3398, %v3598
      %v3600 = vpop.f32.mrb[0].mxu0
      %v3601 = vadd.f32 %v3400, %v3600
      %v3602 = vpop.f32.mrb[0].mxu0
      %v3603 = vadd.f32 %v3402, %v3602
      %v3604 = vpop.f32.mrb[0].mxu0
      %v3605 = vadd.f32 %v3404, %v3604
      %3606 = vmatprep.mubr.bf16.mxu0 %v2826
      %3607 = vmatmul.mubr.bf16.gmra.mrb[0].mxu0 %v2825
      %v3608 = vpop.f32.mrb[0].mxu0
      %v3609 = vadd.f32 %v3408, %v3608
      %v3610 = vpop.f32.mrb[0].mxu0
      %v3611 = vadd.f32 %v3410, %v3610
      %v3612 = vpop.f32.mrb[0].mxu0
      %v3613 = vadd.f32 %v3412, %v3612
      %v3614 = vpop.f32.mrb[0].mxu0
      %v3615 = vadd.f32 %v3414, %v3614
      %3616 = vmatprep.mubr.bf16.mxu0 %v2843
      %3617 = vmatmul.mubr.bf16.gmra.mrb[0].mxu0 %v2842
      %v3618 = vpop.f32.mrb[0].mxu0
      %v3619 = vadd.f32 %v3418, %v3618
      %v3620 = vpop.f32.mrb[0].mxu0
      %v3621 = vadd.f32 %v3420, %v3620
      %v3622 = vpop.f32.mrb[0].mxu0
      %v3623 = vadd.f32 %v3422, %v3622
      %v3624 = vpop.f32.mrb[0].mxu0
      %v3625 = vadd.f32 %v3424, %v3624
      %3626 = vmatprep.mubr.bf16.mxu0 %v2860
      %3627 = vmatmul.mubr.bf16.gmra.mrb[0].mxu0 %v2859
      %v3628 = vpop.f32.mrb[0].mxu0
      %v3629 = vadd.f32 %v3428, %v3628
      %v3630 = vpop.f32.mrb[0].mxu0
      %v3631 = vadd.f32 %v3430, %v3630
      %v3632 = vpop.f32.mrb[0].mxu0
      %v3633 = vadd.f32 %v3432, %v3632
      %v3634 = vpop.f32.mrb[0].mxu0
      %v3635 = vadd.f32 %v3434, %v3634
      %3636 = vmatprep.mubr.bf16.mxu0 %v2877
      %3637 = vmatmul.mubr.bf16.gmra.mrb[0].mxu0 %v2876
      %v3638 = vpop.f32.mrb[0].mxu0
      %v3639 = vadd.f32 %v3438, %v3638
      %v3640 = vpop.f32.mrb[0].mxu0
      %v3641 = vadd.f32 %v3440, %v3640
      %v3642 = vpop.f32.mrb[0].mxu0
      %v3643 = vadd.f32 %v3442, %v3642
      %v3644 = vpop.f32.mrb[0].mxu0
      %v3645 = vadd.f32 %v3444, %v3644
      %3646 = vmatprep.mubr.bf16.mxu0 %v2894
      %3647 = vmatmul.mubr.bf16.gmra.mrb[0].mxu0 %v2893
      %v3648 = vpop.f32.mrb[0].mxu0
      %v3649 = vadd.f32 %v3448, %v3648
      %v3650 = vpop.f32.mrb[0].mxu0
      %v3651 = vadd.f32 %v3450, %v3650
      %v3652 = vpop.f32.mrb[0].mxu0
      %v3653 = vadd.f32 %v3452, %v3652
      %v3654 = vpop.f32.mrb[0].mxu0
      %v3655 = vadd.f32 %v3454, %v3654
      %3656 = vmatprep.mubr.bf16.mxu0 %v2911
      %3657 = vmatmul.mubr.bf16.gmra.mrb[0].mxu0 %v2910
      %v3658 = vpop.f32.mrb[0].mxu0
      %v3659 = vadd.f32 %v3458, %v3658
      %v3660 = vpop.f32.mrb[0].mxu0
      %v3661 = vadd.f32 %v3460, %v3660
      %v3662 = vpop.f32.mrb[0].mxu0
      %v3663 = vadd.f32 %v3462, %v3662
      %v3664 = vpop.f32.mrb[0].mxu0
      %v3665 = vadd.f32 %v3464, %v3664
      %3666 = vmatprep.mubr.bf16.mxu0 %v2928
      %3667 = vmatmul.mubr.bf16.gmra.mrb[0].mxu0 %v2927
      %v3668 = vpop.f32.mrb[0].mxu0
      %v3669 = vadd.f32 %v3468, %v3668
      %v3670 = vpop.f32.mrb[0].mxu0
      %v3671 = vadd.f32 %v3470, %v3670
      %v3672 = vpop.f32.mrb[0].mxu0
      %v3673 = vadd.f32 %v3472, %v3672
      %v3674 = vpop.f32.mrb[0].mxu0
      %v3675 = vadd.f32 %v3474, %v3674
      %3676 = vmatprep.mubr.bf16.mxu0 %v2945
      %3677 = vmatmul.mubr.bf16.gmra.mrb[0].mxu0 %v2944
      %v3678 = vpop.f32.mrb[0].mxu0
      %v3679 = vadd.f32 %v3478, %v3678
      %v3680 = vpop.f32.mrb[0].mxu0
      %v3681 = vadd.f32 %v3480, %v3680
      %v3682 = vpop.f32.mrb[0].mxu0
      %v3683 = vpop.f32.mrb[0].mxu0
      %3684 = vdwg.mxu0
      %3685 = vmatprep.subr.bf16.mxu0 %v1316
      %3686 = vmatpush1.bf16.msra.mxu0 %v1315
      %3687 = vmatprep.subr.bf16.mxu0 %v1318
      %3688 = vmatpush1.bf16.msra.mxu0 %v1317
      %3689 = vmatprep.subr.bf16.mxu0 %v1320
      %3690 = vmatpush1.bf16.msra.mxu0 %v1319
      %3691 = vmatprep.subr.bf16.mxu0 %v1322
      %3692 = vmatpush1.bf16.msra.mxu0 %v1321
      %3693 = vmatprep.subr.bf16.mxu0 %v1324
      %3694 = vmatpush1.bf16.msra.mxu0 %v1323
      %3695 = vmatprep.subr.bf16.mxu0 %v1326
      %3696 = vmatpush1.bf16.msra.mxu0 %v1325
      %3697 = vmatprep.subr.bf16.mxu0 %v1328
      %3698 = vmatpush1.bf16.msra.mxu0 %v1327
      %3699 = vmatprep.subr.bf16.mxu0 %v1330
      %3700 = vmatpush1.bf16.msra.mxu0 %v1329
      %3701 = vmatprep.subr.bf16.mxu0 %v1332
      %3702 = vmatpush1.bf16.msra.mxu0 %v1331
      %3703 = vmatprep.subr.bf16.mxu0 %v1334
      %3704 = vmatpush1.bf16.msra.mxu0 %v1333
      %3705 = vmatprep.subr.bf16.mxu0 %v1336
      %3706 = vmatpush1.bf16.msra.mxu0 %v1335
      %3707 = vmatprep.subr.bf16.mxu0 %v1338
      %3708 = vmatpush1.bf16.msra.mxu0 %v1337
      %3709 = vmatprep.subr.bf16.mxu0 %v1340
      %3710 = vmatpush1.bf16.msra.mxu0 %v1339
      %3711 = vmatprep.subr.bf16.mxu0 %v1342
      %3712 = vmatpush1.bf16.msra.mxu0 %v1341
      %3713 = vmatprep.subr.bf16.mxu0 %v1344
      %3714 = vmatpush1.bf16.msra.mxu0 %v1343
      %3715 = vmatprep.subr.bf16.mxu0 %v1346
      %3716 = vmatpush1.bf16.msra.mxu0 %v1345
      %3717 = vmatprep.mubr.bf16.mxu0 %v2675
      %3718 = vmatmul.mubr.bf16.gmra.mrb[0].mxu0 %v2674
      %v3719 = vpop.f32.mrb[0].mxu0
      %v3720 = vadd.f32 %v3519, %v3719
      %v3721 = vpop.f32.mrb[0].mxu0
      %v3722 = vadd.f32 %v3521, %v3721
      %v3723 = vpop.f32.mrb[0].mxu0
      %v3724 = vadd.f32 %v3523, %v3723
      %v3725 = vpop.f32.mrb[0].mxu0
      %v3726 = vadd.f32 %v3525, %v3725
      %3727 = vmatprep.mubr.bf16.mxu0 %v2692
      %3728 = vmatmul.mubr.bf16.gmra.mrb[0].mxu0 %v2691
      %v3729 = vpop.f32.mrb[0].mxu0
      %v3730 = vadd.f32 %v3529, %v3729
      %v3731 = vpop.f32.mrb[0].mxu0
      %v3732 = vadd.f32 %v3531, %v3731
      %v3733 = vpop.f32.mrb[0].mxu0
      %v3734 = vadd.f32 %v3533, %v3733
      %v3735 = vpop.f32.mrb[0].mxu0
      %v3736 = vadd.f32 %v3535, %v3735
      %3737 = vmatprep.mubr.bf16.mxu0 %v2709
      %3738 = vmatmul.mubr.bf16.gmra.mrb[0].mxu0 %v2708
      %v3739 = vpop.f32.mrb[0].mxu0
      %v3740 = vadd.f32 %v3539, %v3739
      %v3741 = vpop.f32.mrb[0].mxu0
      %v3742 = vadd.f32 %v3541, %v3741
      %v3743 = vpop.f32.mrb[0].mxu0
      %v3744 = vadd.f32 %v3543, %v3743
      %v3745 = vpop.f32.mrb[0].mxu0
      %v3746 = vadd.f32 %v3545, %v3745
      %3747 = vmatprep.mubr.bf16.mxu0 %v2726
      %3748 = vmatmul.mubr.bf16.gmra.mrb[0].mxu0 %v2725
      %v3749 = vpop.f32.mrb[0].mxu0
      %v3750 = vadd.f32 %v3549, %v3749
      %v3751 = vpop.f32.mrb[0].mxu0
      %v3752 = vadd.f32 %v3551, %v3751
      %v3753 = vpop.f32.mrb[0].mxu0
      %v3754 = vadd.f32 %v3553, %v3753
      %v3755 = vpop.f32.mrb[0].mxu0
      %v3756 = vadd.f32 %v3555, %v3755
      %3757 = vmatprep.mubr.bf16.mxu0 %v2743
      %3758 = vmatmul.mubr.bf16.gmra.mrb[0].mxu0 %v2742
      %v3759 = vpop.f32.mrb[0].mxu0
      %v3760 = vadd.f32 %v3559, %v3759
      %v3761 = vpop.f32.mrb[0].mxu0
      %v3762 = vadd.f32 %v3561, %v3761
      %v3763 = vpop.f32.mrb[0].mxu0
      %v3764 = vadd.f32 %v3563, %v3763
      %v3765 = vpop.f32.mrb[0].mxu0
      %v3766 = vadd.f32 %v3565, %v3765
      %3767 = vmatprep.mubr.bf16.mxu0 %v2760
      %3768 = vmatmul.mubr.bf16.gmra.mrb[0].mxu0 %v2759
      %v3769 = vpop.f32.mrb[0].mxu0
      %v3770 = vadd.f32 %v3569, %v3769
      %v3771 = vpop.f32.mrb[0].mxu0
      %v3772 = vadd.f32 %v3571, %v3771
      %v3773 = vpop.f32.mrb[0].mxu0
      %v3774 = vadd.f32 %v3573, %v3773
      %v3775 = vpop.f32.mrb[0].mxu0
      %v3776 = vadd.f32 %v3575, %v3775
      %3777 = vmatprep.mubr.bf16.mxu0 %v2777
      %3778 = vmatmul.mubr.bf16.gmra.mrb[0].mxu0 %v2776
      %v3779 = vpop.f32.mrb[0].mxu0
      %v3780 = vadd.f32 %v3579, %v3779
      %v3781 = vpop.f32.mrb[0].mxu0
      %v3782 = vadd.f32 %v3581, %v3781
      %v3783 = vpop.f32.mrb[0].mxu0
      %v3784 = vadd.f32 %v3583, %v3783
      %v3785 = vpop.f32.mrb[0].mxu0
      %v3786 = vadd.f32 %v3585, %v3785
      %3787 = vmatprep.mubr.bf16.mxu0 %v2794
      %3788 = vmatmul.mubr.bf16.gmra.mrb[0].mxu0 %v2793
      %v3789 = vpop.f32.mrb[0].mxu0
      %v3790 = vadd.f32 %v3589, %v3789
      %v3791 = vpop.f32.mrb[0].mxu0
      %v3792 = vadd.f32 %v3591, %v3791
      %v3793 = vpop.f32.mrb[0].mxu0
      %v3794 = vadd.f32 %v3593, %v3793
      %v3795 = vpop.f32.mrb[0].mxu0
      %v3796 = vadd.f32 %v3595, %v3795
      %3797 = vmatprep.mubr.bf16.mxu0 %v2811
      %3798 = vmatmul.mubr.bf16.gmra.mrb[0].mxu0 %v2810
      %v3799 = vpop.f32.mrb[0].mxu0
      %v3800 = vadd.f32 %v3599, %v3799
      %v3801 = vpop.f32.mrb[0].mxu0
      %v3802 = vadd.f32 %v3601, %v3801
      %v3803 = vpop.f32.mrb[0].mxu0
      %v3804 = vadd.f32 %v3603, %v3803
      %v3805 = vpop.f32.mrb[0].mxu0
      %v3806 = vadd.f32 %v3605, %v3805
      %3807 = vmatprep.mubr.bf16.mxu0 %v2828
      %3808 = vmatmul.mubr.bf16.gmra.mrb[0].mxu0 %v2827
      %v3809 = vpop.f32.mrb[0].mxu0
      %v3810 = vadd.f32 %v3609, %v3809
      %v3811 = vpop.f32.mrb[0].mxu0
      %v3812 = vadd.f32 %v3611, %v3811
      %v3813 = vpop.f32.mrb[0].mxu0
      %v3814 = vadd.f32 %v3613, %v3813
      %v3815 = vpop.f32.mrb[0].mxu0
      %v3816 = vadd.f32 %v3615, %v3815
      %3817 = vmatprep.mubr.bf16.mxu0 %v2845
      %3818 = vmatmul.mubr.bf16.gmra.mrb[0].mxu0 %v2844
      %v3819 = vpop.f32.mrb[0].mxu0
      %v3820 = vadd.f32 %v3619, %v3819
      %v3821 = vpop.f32.mrb[0].mxu0
      %v3822 = vadd.f32 %v3621, %v3821
      %v3823 = vpop.f32.mrb[0].mxu0
      %v3824 = vadd.f32 %v3623, %v3823
      %v3825 = vpop.f32.mrb[0].mxu0
      %v3826 = vadd.f32 %v3625, %v3825
      %3827 = vmatprep.mubr.bf16.mxu0 %v2862
      %3828 = vmatmul.mubr.bf16.gmra.mrb[0].mxu0 %v2861
      %v3829 = vpop.f32.mrb[0].mxu0
      %v3830 = vadd.f32 %v3629, %v3829
      %v3831 = vpop.f32.mrb[0].mxu0
      %v3832 = vadd.f32 %v3631, %v3831
      %v3833 = vpop.f32.mrb[0].mxu0
      %v3834 = vadd.f32 %v3633, %v3833
      %v3835 = vpop.f32.mrb[0].mxu0
      %v3836 = vadd.f32 %v3635, %v3835
      %3837 = vmatprep.mubr.bf16.mxu0 %v2879
      %3838 = vmatmul.mubr.bf16.gmra.mrb[0].mxu0 %v2878
      %v3839 = vpop.f32.mrb[0].mxu0
      %v3840 = vadd.f32 %v3639, %v3839
      %v3841 = vpop.f32.mrb[0].mxu0
      %v3842 = vadd.f32 %v3641, %v3841
      %v3843 = vpop.f32.mrb[0].mxu0
      %v3844 = vadd.f32 %v3643, %v3843
      %v3845 = vpop.f32.mrb[0].mxu0
      %v3846 = vadd.f32 %v3645, %v3845
      %3847 = vmatprep.mubr.bf16.mxu0 %v2896
      %3848 = vmatmul.mubr.bf16.gmra.mrb[0].mxu0 %v2895
      %v3849 = vpop.f32.mrb[0].mxu0
      %v3850 = vadd.f32 %v3649, %v3849
      %v3851 = vpop.f32.mrb[0].mxu0
      %v3852 = vadd.f32 %v3651, %v3851
      %v3853 = vpop.f32.mrb[0].mxu0
      %v3854 = vadd.f32 %v3653, %v3853
      %v3855 = vpop.f32.mrb[0].mxu0
      %v3856 = vadd.f32 %v3655, %v3855
      %3857 = vmatprep.mubr.bf16.mxu0 %v2913
      %3858 = vmatmul.mubr.bf16.gmra.mrb[0].mxu0 %v2912
      %v3859 = vpop.f32.mrb[0].mxu0
      %v3860 = vadd.f32 %v3659, %v3859
      %v3861 = vpop.f32.mrb[0].mxu0
      %v3862 = vadd.f32 %v3661, %v3861
      %v3863 = vpop.f32.mrb[0].mxu0
      %v3864 = vadd.f32 %v3663, %v3863
      %v3865 = vpop.f32.mrb[0].mxu0
      %v3866 = vadd.f32 %v3665, %v3865
      %3867 = vmatprep.mubr.bf16.mxu0 %v2930
      %3868 = vmatmul.mubr.bf16.gmra.mrb[0].mxu0 %v2929
      %v3869 = vpop.f32.mrb[0].mxu0
      %v3870 = vadd.f32 %v3669, %v3869
      %v3871 = vpop.f32.mrb[0].mxu0
      %v3872 = vadd.f32 %v3671, %v3871
      %v3873 = vpop.f32.mrb[0].mxu0
      %v3874 = vadd.f32 %v3673, %v3873
      %v3875 = vpop.f32.mrb[0].mxu0
      %v3876 = vadd.f32 %v3675, %v3875
      %3877 = vmatprep.mubr.bf16.mxu0 %v2947
      %3878 = vmatmul.mubr.bf16.gmra.mrb[0].mxu0 %v2946
      %v3879 = vpop.f32.mrb[0].mxu0
      %v3880 = vadd.f32 %v3679, %v3879
      %v3881 = vpop.f32.mrb[0].mxu0
      %v3882 = vadd.f32 %v3681, %v3881
      %v3883 = vpop.f32.mrb[0].mxu0
      %v3884 = vpop.f32.mrb[0].mxu0
      %3885 = vdwg.mxu0
      %3886 = vmatprep.subr.bf16.mxu0 %v1348
      %3887 = vmatpush1.bf16.msra.mxu0 %v1347
      %3888 = vmatprep.subr.bf16.mxu0 %v1350
      %3889 = vmatpush1.bf16.msra.mxu0 %v1349
      %3890 = vmatprep.subr.bf16.mxu0 %v1352
      %3891 = vmatpush1.bf16.msra.mxu0 %v1351
      %3892 = vmatprep.subr.bf16.mxu0 %v1354
      %3893 = vmatpush1.bf16.msra.mxu0 %v1353
      %3894 = vmatprep.subr.bf16.mxu0 %v1356
      %3895 = vmatpush1.bf16.msra.mxu0 %v1355
      %3896 = vmatprep.subr.bf16.mxu0 %v1358
      %3897 = vmatpush1.bf16.msra.mxu0 %v1357
      %3898 = vmatprep.subr.bf16.mxu0 %v1360
      %3899 = vmatpush1.bf16.msra.mxu0 %v1359
      %3900 = vmatprep.subr.bf16.mxu0 %v1362
      %3901 = vmatpush1.bf16.msra.mxu0 %v1361
      %3902 = vmatprep.subr.bf16.mxu0 %v1364
      %3903 = vmatpush1.bf16.msra.mxu0 %v1363
      %3904 = vmatprep.subr.bf16.mxu0 %v1366
      %3905 = vmatpush1.bf16.msra.mxu0 %v1365
      %3906 = vmatprep.subr.bf16.mxu0 %v1368
      %3907 = vmatpush1.bf16.msra.mxu0 %v1367
      %3908 = vmatprep.subr.bf16.mxu0 %v1370
      %3909 = vmatpush1.bf16.msra.mxu0 %v1369
      %3910 = vmatprep.subr.bf16.mxu0 %v1372
      %3911 = vmatpush1.bf16.msra.mxu0 %v1371
      %3912 = vmatprep.subr.bf16.mxu0 %v1374
      %3913 = vmatpush1.bf16.msra.mxu0 %v1373
      %3914 = vmatprep.subr.bf16.mxu0 %v1376
      %3915 = vmatpush1.bf16.msra.mxu0 %v1375
      %3916 = vmatprep.subr.bf16.mxu0 %v1378
      %3917 = vmatpush1.bf16.msra.mxu0 %v1377
      %3918 = vmatprep.mubr.bf16.mxu0 %v2677
      %3919 = vmatmul.mubr.bf16.gmra.mrb[0].mxu0 %v2676
      %v3920 = vpop.f32.mrb[0].mxu0
      %v3921 = vadd.f32 %v3720, %v3920
      %v3922 = vpop.f32.mrb[0].mxu0
      %v3923 = vadd.f32 %v3722, %v3922
      %v3924 = vpop.f32.mrb[0].mxu0
      %v3925 = vadd.f32 %v3724, %v3924
      %v3926 = vpop.f32.mrb[0].mxu0
      %v3927 = vadd.f32 %v3726, %v3926
      %3928 = vmatprep.mubr.bf16.mxu0 %v2694
      %3929 = vmatmul.mubr.bf16.gmra.mrb[0].mxu0 %v2693
      %v3930 = vpop.f32.mrb[0].mxu0
      %v3931 = vadd.f32 %v3730, %v3930
      %v3932 = vpop.f32.mrb[0].mxu0
      %v3933 = vadd.f32 %v3732, %v3932
      %v3934 = vpop.f32.mrb[0].mxu0
      %v3935 = vadd.f32 %v3734, %v3934
      %v3936 = vpop.f32.mrb[0].mxu0
      %v3937 = vadd.f32 %v3736, %v3936
      %3938 = vmatprep.mubr.bf16.mxu0 %v2711
      %3939 = vmatmul.mubr.bf16.gmra.mrb[0].mxu0 %v2710
      %v3940 = vpop.f32.mrb[0].mxu0
      %v3941 = vadd.f32 %v3740, %v3940
      %v3942 = vpop.f32.mrb[0].mxu0
      %v3943 = vadd.f32 %v3742, %v3942
      %v3944 = vpop.f32.mrb[0].mxu0
      %v3945 = vadd.f32 %v3744, %v3944
      %v3946 = vpop.f32.mrb[0].mxu0
      %v3947 = vadd.f32 %v3746, %v3946
      %3948 = vmatprep.mubr.bf16.mxu0 %v2728
      %3949 = vmatmul.mubr.bf16.gmra.mrb[0].mxu0 %v2727
      %v3950 = vpop.f32.mrb[0].mxu0
      %v3951 = vadd.f32 %v3750, %v3950
      %v3952 = vpop.f32.mrb[0].mxu0
      %v3953 = vadd.f32 %v3752, %v3952
      %v3954 = vpop.f32.mrb[0].mxu0
      %v3955 = vadd.f32 %v3754, %v3954
      %v3956 = vpop.f32.mrb[0].mxu0
      %v3957 = vadd.f32 %v3756, %v3956
      %3958 = vmatprep.mubr.bf16.mxu0 %v2745
      %3959 = vmatmul.mubr.bf16.gmra.mrb[0].mxu0 %v2744
      %v3960 = vpop.f32.mrb[0].mxu0
      %v3961 = vadd.f32 %v3760, %v3960
      %v3962 = vpop.f32.mrb[0].mxu0
      %v3963 = vadd.f32 %v3762, %v3962
      %v3964 = vpop.f32.mrb[0].mxu0
      %v3965 = vadd.f32 %v3764, %v3964
      %v3966 = vpop.f32.mrb[0].mxu0
      %v3967 = vadd.f32 %v3766, %v3966
      %3968 = vmatprep.mubr.bf16.mxu0 %v2762
      %3969 = vmatmul.mubr.bf16.gmra.mrb[0].mxu0 %v2761
      %v3970 = vpop.f32.mrb[0].mxu0
      %v3971 = vadd.f32 %v3770, %v3970
      %v3972 = vpop.f32.mrb[0].mxu0
      %v3973 = vadd.f32 %v3772, %v3972
      %v3974 = vpop.f32.mrb[0].mxu0
      %v3975 = vadd.f32 %v3774, %v3974
      %v3976 = vpop.f32.mrb[0].mxu0
      %v3977 = vadd.f32 %v3776, %v3976
      %3978 = vmatprep.mubr.bf16.mxu0 %v2779
      %3979 = vmatmul.mubr.bf16.gmra.mrb[0].mxu0 %v2778
      %v3980 = vpop.f32.mrb[0].mxu0
      %v3981 = vadd.f32 %v3780, %v3980
      %v3982 = vpop.f32.mrb[0].mxu0
      %v3983 = vadd.f32 %v3782, %v3982
      %v3984 = vpop.f32.mrb[0].mxu0
      %v3985 = vadd.f32 %v3784, %v3984
      %v3986 = vpop.f32.mrb[0].mxu0
      %v3987 = vadd.f32 %v3786, %v3986
      %3988 = vmatprep.mubr.bf16.mxu0 %v2796
      %3989 = vmatmul.mubr.bf16.gmra.mrb[0].mxu0 %v2795
      %v3990 = vpop.f32.mrb[0].mxu0
      %v3991 = vadd.f32 %v3790, %v3990
      %v3992 = vpop.f32.mrb[0].mxu0
      %v3993 = vadd.f32 %v3792, %v3992
      %v3994 = vpop.f32.mrb[0].mxu0
      %v3995 = vadd.f32 %v3794, %v3994
      %v3996 = vpop.f32.mrb[0].mxu0
      %v3997 = vadd.f32 %v3796, %v3996
      %3998 = vmatprep.mubr.bf16.mxu0 %v2813
      %3999 = vmatmul.mubr.bf16.gmra.mrb[0].mxu0 %v2812
      %v4000 = vpop.f32.mrb[0].mxu0
      %v4001 = vadd.f32 %v3800, %v4000
      %v4002 = vpop.f32.mrb[0].mxu0
      %v4003 = vadd.f32 %v3802, %v4002
      %v4004 = vpop.f32.mrb[0].mxu0
      %v4005 = vadd.f32 %v3804, %v4004
      %v4006 = vpop.f32.mrb[0].mxu0
      %v4007 = vadd.f32 %v3806, %v4006
      %4008 = vmatprep.mubr.bf16.mxu0 %v2830
      %4009 = vmatmul.mubr.bf16.gmra.mrb[0].mxu0 %v2829
      %v4010 = vpop.f32.mrb[0].mxu0
      %v4011 = vadd.f32 %v3810, %v4010
      %v4012 = vpop.f32.mrb[0].mxu0
      %v4013 = vadd.f32 %v3812, %v4012
      %v4014 = vpop.f32.mrb[0].mxu0
      %v4015 = vadd.f32 %v3814, %v4014
      %v4016 = vpop.f32.mrb[0].mxu0
      %v4017 = vadd.f32 %v3816, %v4016
      %4018 = vmatprep.mubr.bf16.mxu0 %v2847
      %4019 = vmatmul.mubr.bf16.gmra.mrb[0].mxu0 %v2846
      %v4020 = vpop.f32.mrb[0].mxu0
      %v4021 = vadd.f32 %v3820, %v4020
      %v4022 = vpop.f32.mrb[0].mxu0
      %v4023 = vadd.f32 %v3822, %v4022
      %v4024 = vpop.f32.mrb[0].mxu0
      %v4025 = vadd.f32 %v3824, %v4024
      %v4026 = vpop.f32.mrb[0].mxu0
      %v4027 = vadd.f32 %v3826, %v4026
      %4028 = vmatprep.mubr.bf16.mxu0 %v2864
      %4029 = vmatmul.mubr.bf16.gmra.mrb[0].mxu0 %v2863
      %v4030 = vpop.f32.mrb[0].mxu0
      %v4031 = vadd.f32 %v3830, %v4030
      %v4032 = vpop.f32.mrb[0].mxu0
      %v4033 = vadd.f32 %v3832, %v4032
      %v4034 = vpop.f32.mrb[0].mxu0
      %v4035 = vadd.f32 %v3834, %v4034
      %v4036 = vpop.f32.mrb[0].mxu0
      %v4037 = vadd.f32 %v3836, %v4036
      %4038 = vmatprep.mubr.bf16.mxu0 %v2881
      %4039 = vmatmul.mubr.bf16.gmra.mrb[0].mxu0 %v2880
      %v4040 = vpop.f32.mrb[0].mxu0
      %v4041 = vadd.f32 %v3840, %v4040
      %v4042 = vpop.f32.mrb[0].mxu0
      %v4043 = vadd.f32 %v3842, %v4042
      %v4044 = vpop.f32.mrb[0].mxu0
      %v4045 = vadd.f32 %v3844, %v4044
      %v4046 = vpop.f32.mrb[0].mxu0
      %v4047 = vadd.f32 %v3846, %v4046
      %4048 = vmatprep.mubr.bf16.mxu0 %v2898
      %4049 = vmatmul.mubr.bf16.gmra.mrb[0].mxu0 %v2897
      %v4050 = vpop.f32.mrb[0].mxu0
      %v4051 = vadd.f32 %v3850, %v4050
      %v4052 = vpop.f32.mrb[0].mxu0
      %v4053 = vadd.f32 %v3852, %v4052
      %v4054 = vpop.f32.mrb[0].mxu0
      %v4055 = vadd.f32 %v3854, %v4054
      %v4056 = vpop.f32.mrb[0].mxu0
      %v4057 = vadd.f32 %v3856, %v4056
      %4058 = vmatprep.mubr.bf16.mxu0 %v2915
      %4059 = vmatmul.mubr.bf16.gmra.mrb[0].mxu0 %v2914
      %v4060 = vpop.f32.mrb[0].mxu0
      %v4061 = vadd.f32 %v3860, %v4060
      %v4062 = vpop.f32.mrb[0].mxu0
      %v4063 = vadd.f32 %v3862, %v4062
      %v4064 = vpop.f32.mrb[0].mxu0
      %v4065 = vadd.f32 %v3864, %v4064
      %v4066 = vpop.f32.mrb[0].mxu0
      %v4067 = vadd.f32 %v3866, %v4066
      %4068 = vmatprep.mubr.bf16.mxu0 %v2932
      %4069 = vmatmul.mubr.bf16.gmra.mrb[0].mxu0 %v2931
      %v4070 = vpop.f32.mrb[0].mxu0
      %v4071 = vadd.f32 %v3870, %v4070
      %v4072 = vpop.f32.mrb[0].mxu0
      %v4073 = vadd.f32 %v3872, %v4072
      %v4074 = vpop.f32.mrb[0].mxu0
      %v4075 = vadd.f32 %v3874, %v4074
      %v4076 = vpop.f32.mrb[0].mxu0
      %v4077 = vadd.f32 %v3876, %v4076
      %4078 = vmatprep.mubr.bf16.mxu0 %v2949
      %4079 = vmatmul.mubr.bf16.gmra.mrb[0].mxu0 %v2948
      %v4080 = vpop.f32.mrb[0].mxu0
      %v4081 = vadd.f32 %v3880, %v4080
      %v4082 = vpop.f32.mrb[0].mxu0
      %v4083 = vadd.f32 %v3882, %v4082
      %v4084 = vpop.f32.mrb[0].mxu0
      %v4085 = vpop.f32.mrb[0].mxu0
      %4086 = vdwg.mxu0
      %4087 = vmatprep.subr.bf16.mxu0 %v1380
      %4088 = vmatpush1.bf16.msra.mxu0 %v1379
      %4089 = vmatprep.subr.bf16.mxu0 %v1382
      %4090 = vmatpush1.bf16.msra.mxu0 %v1381
      %4091 = vmatprep.subr.bf16.mxu0 %v1384
      %4092 = vmatpush1.bf16.msra.mxu0 %v1383
      %4093 = vmatprep.subr.bf16.mxu0 %v1386
      %4094 = vmatpush1.bf16.msra.mxu0 %v1385
      %4095 = vmatprep.subr.bf16.mxu0 %v1388
      %4096 = vmatpush1.bf16.msra.mxu0 %v1387
      %4097 = vmatprep.subr.bf16.mxu0 %v1390
      %4098 = vmatpush1.bf16.msra.mxu0 %v1389
      %4099 = vmatprep.subr.bf16.mxu0 %v1392
      %4100 = vmatpush1.bf16.msra.mxu0 %v1391
      %4101 = vmatprep.subr.bf16.mxu0 %v1394
      %4102 = vmatpush1.bf16.msra.mxu0 %v1393
      %4103 = vmatprep.subr.bf16.mxu0 %v1396
      %4104 = vmatpush1.bf16.msra.mxu0 %v1395
      %4105 = vmatprep.subr.bf16.mxu0 %v1398
      %4106 = vmatpush1.bf16.msra.mxu0 %v1397
      %4107 = vmatprep.subr.bf16.mxu0 %v1400
      %4108 = vmatpush1.bf16.msra.mxu0 %v1399
      %4109 = vmatprep.subr.bf16.mxu0 %v1402
      %4110 = vmatpush1.bf16.msra.mxu0 %v1401
      %4111 = vmatprep.subr.bf16.mxu0 %v1404
      %4112 = vmatpush1.bf16.msra.mxu0 %v1403
      %4113 = vmatprep.subr.bf16.mxu0 %v1406
      %4114 = vmatpush1.bf16.msra.mxu0 %v1405
      %4115 = vmatprep.subr.bf16.mxu0 %v1408
      %4116 = vmatpush1.bf16.msra.mxu0 %v1407
      %4117 = vmatprep.subr.bf16.mxu0 %v1410
      %4118 = vmatpush1.bf16.msra.mxu0 %v1409
      %4119 = vmatprep.mubr.bf16.mxu0 %v2679
      %4120 = vmatmul.mubr.bf16.gmra.mrb[0].mxu0 %v2678
      %v4121 = vpop.f32.mrb[0].mxu0
      %v4122 = vadd.f32 %v3921, %v4121
      %v4123 = vpop.f32.mrb[0].mxu0
      %v4124 = vadd.f32 %v3923, %v4123
      %v4125 = vpop.f32.mrb[0].mxu0
      %v4126 = vadd.f32 %v3925, %v4125
      %v4127 = vpop.f32.mrb[0].mxu0
      %v4128 = vadd.f32 %v3927, %v4127
      %4129 = vmatprep.mubr.bf16.mxu0 %v2696
      %4130 = vmatmul.mubr.bf16.gmra.mrb[0].mxu0 %v2695
      %v4131 = vpop.f32.mrb[0].mxu0
      %v4132 = vadd.f32 %v3931, %v4131
      %v4133 = vpop.f32.mrb[0].mxu0
      %v4134 = vadd.f32 %v3933, %v4133
      %v4135 = vpop.f32.mrb[0].mxu0
      %v4136 = vadd.f32 %v3935, %v4135
      %v4137 = vpop.f32.mrb[0].mxu0
      %v4138 = vadd.f32 %v3937, %v4137
      %4139 = vmatprep.mubr.bf16.mxu0 %v2713
      %4140 = vmatmul.mubr.bf16.gmra.mrb[0].mxu0 %v2712
      %v4141 = vpop.f32.mrb[0].mxu0
      %v4142 = vadd.f32 %v3941, %v4141
      %v4143 = vpop.f32.mrb[0].mxu0
      %v4144 = vadd.f32 %v3943, %v4143
      %v4145 = vpop.f32.mrb[0].mxu0
      %v4146 = vadd.f32 %v3945, %v4145
      %v4147 = vpop.f32.mrb[0].mxu0
      %v4148 = vadd.f32 %v3947, %v4147
      %4149 = vmatprep.mubr.bf16.mxu0 %v2730
      %4150 = vmatmul.mubr.bf16.gmra.mrb[0].mxu0 %v2729
      %v4151 = vpop.f32.mrb[0].mxu0
      %v4152 = vadd.f32 %v3951, %v4151
      %v4153 = vpop.f32.mrb[0].mxu0
      %v4154 = vadd.f32 %v3953, %v4153
      %v4155 = vpop.f32.mrb[0].mxu0
      %v4156 = vadd.f32 %v3955, %v4155
      %v4157 = vpop.f32.mrb[0].mxu0
      %v4158 = vadd.f32 %v3957, %v4157
      %4159 = vmatprep.mubr.bf16.mxu0 %v2747
      %4160 = vmatmul.mubr.bf16.gmra.mrb[0].mxu0 %v2746
      %v4161 = vpop.f32.mrb[0].mxu0
      %v4162 = vadd.f32 %v3961, %v4161
      %v4163 = vpop.f32.mrb[0].mxu0
      %v4164 = vadd.f32 %v3963, %v4163
      %v4165 = vpop.f32.mrb[0].mxu0
      %v4166 = vadd.f32 %v3965, %v4165
      %v4167 = vpop.f32.mrb[0].mxu0
      %v4168 = vadd.f32 %v3967, %v4167
      %4169 = vmatprep.mubr.bf16.mxu0 %v2764
      %4170 = vmatmul.mubr.bf16.gmra.mrb[0].mxu0 %v2763
      %v4171 = vpop.f32.mrb[0].mxu0
      %v4172 = vadd.f32 %v3971, %v4171
      %v4173 = vpop.f32.mrb[0].mxu0
      %v4174 = vadd.f32 %v3973, %v4173
      %v4175 = vpop.f32.mrb[0].mxu0
      %v4176 = vadd.f32 %v3975, %v4175
      %v4177 = vpop.f32.mrb[0].mxu0
      %v4178 = vadd.f32 %v3977, %v4177
      %4179 = vmatprep.mubr.bf16.mxu0 %v2781
      %4180 = vmatmul.mubr.bf16.gmra.mrb[0].mxu0 %v2780
      %v4181 = vpop.f32.mrb[0].mxu0
      %v4182 = vadd.f32 %v3981, %v4181
      %v4183 = vpop.f32.mrb[0].mxu0
      %v4184 = vadd.f32 %v3983, %v4183
      %v4185 = vpop.f32.mrb[0].mxu0
      %v4186 = vadd.f32 %v3985, %v4185
      %v4187 = vpop.f32.mrb[0].mxu0
      %v4188 = vadd.f32 %v3987, %v4187
      %4189 = vmatprep.mubr.bf16.mxu0 %v2798
      %4190 = vmatmul.mubr.bf16.gmra.mrb[0].mxu0 %v2797
      %v4191 = vpop.f32.mrb[0].mxu0
      %v4192 = vadd.f32 %v3991, %v4191
      %v4193 = vpop.f32.mrb[0].mxu0
      %v4194 = vadd.f32 %v3993, %v4193
      %v4195 = vpop.f32.mrb[0].mxu0
      %v4196 = vadd.f32 %v3995, %v4195
      %v4197 = vpop.f32.mrb[0].mxu0
      %v4198 = vadd.f32 %v3997, %v4197
      %4199 = vmatprep.mubr.bf16.mxu0 %v2815
      %4200 = vmatmul.mubr.bf16.gmra.mrb[0].mxu0 %v2814
      %v4201 = vpop.f32.mrb[0].mxu0
      %v4202 = vadd.f32 %v4001, %v4201
      %v4203 = vpop.f32.mrb[0].mxu0
      %v4204 = vadd.f32 %v4003, %v4203
      %v4205 = vpop.f32.mrb[0].mxu0
      %v4206 = vadd.f32 %v4005, %v4205
      %v4207 = vpop.f32.mrb[0].mxu0
      %v4208 = vadd.f32 %v4007, %v4207
      %4209 = vmatprep.mubr.bf16.mxu0 %v2832
      %4210 = vmatmul.mubr.bf16.gmra.mrb[0].mxu0 %v2831
      %v4211 = vpop.f32.mrb[0].mxu0
      %v4212 = vadd.f32 %v4011, %v4211
      %v4213 = vpop.f32.mrb[0].mxu0
      %v4214 = vadd.f32 %v4013, %v4213
      %v4215 = vpop.f32.mrb[0].mxu0
      %v4216 = vadd.f32 %v4015, %v4215
      %v4217 = vpop.f32.mrb[0].mxu0
      %v4218 = vadd.f32 %v4017, %v4217
      %4219 = vmatprep.mubr.bf16.mxu0 %v2849
      %4220 = vmatmul.mubr.bf16.gmra.mrb[0].mxu0 %v2848
      %v4221 = vpop.f32.mrb[0].mxu0
      %v4222 = vadd.f32 %v4021, %v4221
      %v4223 = vpop.f32.mrb[0].mxu0
      %v4224 = vadd.f32 %v4023, %v4223
      %v4225 = vpop.f32.mrb[0].mxu0
      %v4226 = vadd.f32 %v4025, %v4225
      %v4227 = vpop.f32.mrb[0].mxu0
      %v4228 = vadd.f32 %v4027, %v4227
      %4229 = vmatprep.mubr.bf16.mxu0 %v2866
      %4230 = vmatmul.mubr.bf16.gmra.mrb[0].mxu0 %v2865
      %v4231 = vpop.f32.mrb[0].mxu0
      %v4232 = vadd.f32 %v4031, %v4231
      %v4233 = vpop.f32.mrb[0].mxu0
      %v4234 = vadd.f32 %v4033, %v4233
      %v4235 = vpop.f32.mrb[0].mxu0
      %v4236 = vadd.f32 %v4035, %v4235
      %v4237 = vpop.f32.mrb[0].mxu0
      %v4238 = vadd.f32 %v4037, %v4237
      %4239 = vmatprep.mubr.bf16.mxu0 %v2883
      %4240 = vmatmul.mubr.bf16.gmra.mrb[0].mxu0 %v2882
      %v4241 = vpop.f32.mrb[0].mxu0
      %v4242 = vadd.f32 %v4041, %v4241
      %v4243 = vpop.f32.mrb[0].mxu0
      %v4244 = vadd.f32 %v4043, %v4243
      %v4245 = vpop.f32.mrb[0].mxu0
      %v4246 = vadd.f32 %v4045, %v4245
      %v4247 = vpop.f32.mrb[0].mxu0
      %v4248 = vadd.f32 %v4047, %v4247
      %4249 = vmatprep.mubr.bf16.mxu0 %v2900
      %4250 = vmatmul.mubr.bf16.gmra.mrb[0].mxu0 %v2899
      %v4251 = vpop.f32.mrb[0].mxu0
      %v4252 = vadd.f32 %v4051, %v4251
      %v4253 = vpop.f32.mrb[0].mxu0
      %v4254 = vadd.f32 %v4053, %v4253
      %v4255 = vpop.f32.mrb[0].mxu0
      %v4256 = vadd.f32 %v4055, %v4255
      %v4257 = vpop.f32.mrb[0].mxu0
      %v4258 = vadd.f32 %v4057, %v4257
      %4259 = vmatprep.mubr.bf16.mxu0 %v2917
      %4260 = vmatmul.mubr.bf16.gmra.mrb[0].mxu0 %v2916
      %v4261 = vpop.f32.mrb[0].mxu0
      %v4262 = vadd.f32 %v4061, %v4261
      %v4263 = vpop.f32.mrb[0].mxu0
      %v4264 = vadd.f32 %v4063, %v4263
      %v4265 = vpop.f32.mrb[0].mxu0
      %v4266 = vadd.f32 %v4065, %v4265
      %v4267 = vpop.f32.mrb[0].mxu0
      %v4268 = vadd.f32 %v4067, %v4267
      %4269 = vmatprep.mubr.bf16.mxu0 %v2934
      %4270 = vmatmul.mubr.bf16.gmra.mrb[0].mxu0 %v2933
      %v4271 = vpop.f32.mrb[0].mxu0
      %v4272 = vadd.f32 %v4071, %v4271
      %v4273 = vpop.f32.mrb[0].mxu0
      %v4274 = vadd.f32 %v4073, %v4273
      %v4275 = vpop.f32.mrb[0].mxu0
      %v4276 = vadd.f32 %v4075, %v4275
      %v4277 = vpop.f32.mrb[0].mxu0
      %v4278 = vadd.f32 %v4077, %v4277
      %4279 = vmatprep.mubr.bf16.mxu0 %v2951
      %4280 = vmatmul.mubr.bf16.gmra.mrb[0].mxu0 %v2950
      %v4281 = vpop.f32.mrb[0].mxu0
      %v4282 = vadd.f32 %v4081, %v4281
      %v4283 = vpop.f32.mrb[0].mxu0
      %v4284 = vadd.f32 %v4083, %v4283
      %v4285 = vpop.f32.mrb[0].mxu0
      %v4286 = vpop.f32.mrb[0].mxu0
      %4287 = vdwg.mxu0
      %4288 = vmatprep.subr.bf16.mxu0 %v1412
      %4289 = vmatpush1.bf16.msra.mxu0 %v1411
      %4290 = vmatprep.subr.bf16.mxu0 %v1414
      %4291 = vmatpush1.bf16.msra.mxu0 %v1413
      %4292 = vmatprep.subr.bf16.mxu0 %v1416
      %4293 = vmatpush1.bf16.msra.mxu0 %v1415
      %4294 = vmatprep.subr.bf16.mxu0 %v1418
      %4295 = vmatpush1.bf16.msra.mxu0 %v1417
      %4296 = vmatprep.subr.bf16.mxu0 %v1420
      %4297 = vmatpush1.bf16.msra.mxu0 %v1419
      %4298 = vmatprep.subr.bf16.mxu0 %v1422
      %4299 = vmatpush1.bf16.msra.mxu0 %v1421
      %4300 = vmatprep.subr.bf16.mxu0 %v1424
      %4301 = vmatpush1.bf16.msra.mxu0 %v1423
      %4302 = vmatprep.subr.bf16.mxu0 %v1426
      %4303 = vmatpush1.bf16.msra.mxu0 %v1425
      %4304 = vmatprep.subr.bf16.mxu0 %v1428
      %4305 = vmatpush1.bf16.msra.mxu0 %v1427
      %4306 = vmatprep.subr.bf16.mxu0 %v1430
      %4307 = vmatpush1.bf16.msra.mxu0 %v1429
      %4308 = vmatprep.subr.bf16.mxu0 %v1432
      %4309 = vmatpush1.bf16.msra.mxu0 %v1431
      %4310 = vmatprep.subr.bf16.mxu0 %v1434
      %4311 = vmatpush1.bf16.msra.mxu0 %v1433
      %4312 = vmatprep.subr.bf16.mxu0 %v1436
      %4313 = vmatpush1.bf16.msra.mxu0 %v1435
      %4314 = vmatprep.subr.bf16.mxu0 %v1438
      %4315 = vmatpush1.bf16.msra.mxu0 %v1437
      %4316 = vmatprep.subr.bf16.mxu0 %v1440
      %4317 = vmatpush1.bf16.msra.mxu0 %v1439
      %4318 = vmatprep.subr.bf16.mxu0 %v1442
      %4319 = vmatpush1.bf16.msra.mxu0 %v1441
      %4320 = vmatprep.mubr.bf16.mxu0 %v2681
      %4321 = vmatmul.mubr.bf16.gmra.mrb[0].mxu0 %v2680
      %v4322 = vpop.f32.mrb[0].mxu0
      %v4323 = vadd.f32 %v4122, %v4322
      %v4324 = vpop.f32.mrb[0].mxu0
      %v4325 = vadd.f32 %v4124, %v4324
      %v4326 = vpop.f32.mrb[0].mxu0
      %v4327 = vadd.f32 %v4126, %v4326
      %v4328 = vpop.f32.mrb[0].mxu0
      %v4329 = vadd.f32 %v4128, %v4328
      %4330 = vmatprep.mubr.bf16.mxu0 %v2698
      %4331 = vmatmul.mubr.bf16.gmra.mrb[0].mxu0 %v2697
      %v4332 = vpop.f32.mrb[0].mxu0
      %v4333 = vadd.f32 %v4132, %v4332
      %v4334 = vpop.f32.mrb[0].mxu0
      %v4335 = vadd.f32 %v4134, %v4334
      %v4336 = vpop.f32.mrb[0].mxu0
      %v4337 = vadd.f32 %v4136, %v4336
      %v4338 = vpop.f32.mrb[0].mxu0
      %v4339 = vadd.f32 %v4138, %v4338
      %4340 = vmatprep.mubr.bf16.mxu0 %v2715
      %4341 = vmatmul.mubr.bf16.gmra.mrb[0].mxu0 %v2714
      %v4342 = vpop.f32.mrb[0].mxu0
      %v4343 = vadd.f32 %v4142, %v4342
      %v4344 = vpop.f32.mrb[0].mxu0
      %v4345 = vadd.f32 %v4144, %v4344
      %v4346 = vpop.f32.mrb[0].mxu0
      %v4347 = vadd.f32 %v4146, %v4346
      %v4348 = vpop.f32.mrb[0].mxu0
      %v4349 = vadd.f32 %v4148, %v4348
      %4350 = vmatprep.mubr.bf16.mxu0 %v2732
      %4351 = vmatmul.mubr.bf16.gmra.mrb[0].mxu0 %v2731
      %v4352 = vpop.f32.mrb[0].mxu0
      %v4353 = vadd.f32 %v4152, %v4352
      %v4354 = vpop.f32.mrb[0].mxu0
      %v4355 = vadd.f32 %v4154, %v4354
      %v4356 = vpop.f32.mrb[0].mxu0
      %v4357 = vadd.f32 %v4156, %v4356
      %v4358 = vpop.f32.mrb[0].mxu0
      %v4359 = vadd.f32 %v4158, %v4358
      %4360 = vmatprep.mubr.bf16.mxu0 %v2749
      %4361 = vmatmul.mubr.bf16.gmra.mrb[0].mxu0 %v2748
      %v4362 = vpop.f32.mrb[0].mxu0
      %v4363 = vadd.f32 %v4162, %v4362
      %v4364 = vpop.f32.mrb[0].mxu0
      %v4365 = vadd.f32 %v4164, %v4364
      %v4366 = vpop.f32.mrb[0].mxu0
      %v4367 = vadd.f32 %v4166, %v4366
      %v4368 = vpop.f32.mrb[0].mxu0
      %v4369 = vadd.f32 %v4168, %v4368
      %4370 = vmatprep.mubr.bf16.mxu0 %v2766
      %4371 = vmatmul.mubr.bf16.gmra.mrb[0].mxu0 %v2765
      %v4372 = vpop.f32.mrb[0].mxu0
      %v4373 = vadd.f32 %v4172, %v4372
      %v4374 = vpop.f32.mrb[0].mxu0
      %v4375 = vadd.f32 %v4174, %v4374
      %v4376 = vpop.f32.mrb[0].mxu0
      %v4377 = vadd.f32 %v4176, %v4376
      %v4378 = vpop.f32.mrb[0].mxu0
      %v4379 = vadd.f32 %v4178, %v4378
      %4380 = vmatprep.mubr.bf16.mxu0 %v2783
      %4381 = vmatmul.mubr.bf16.gmra.mrb[0].mxu0 %v2782
      %v4382 = vpop.f32.mrb[0].mxu0
      %v4383 = vadd.f32 %v4182, %v4382
      %v4384 = vpop.f32.mrb[0].mxu0
      %v4385 = vadd.f32 %v4184, %v4384
      %v4386 = vpop.f32.mrb[0].mxu0
      %v4387 = vadd.f32 %v4186, %v4386
      %v4388 = vpop.f32.mrb[0].mxu0
      %v4389 = vadd.f32 %v4188, %v4388
      %4390 = vmatprep.mubr.bf16.mxu0 %v2800
      %4391 = vmatmul.mubr.bf16.gmra.mrb[0].mxu0 %v2799
      %v4392 = vpop.f32.mrb[0].mxu0
      %v4393 = vadd.f32 %v4192, %v4392
      %v4394 = vpop.f32.mrb[0].mxu0
      %v4395 = vadd.f32 %v4194, %v4394
      %v4396 = vpop.f32.mrb[0].mxu0
      %v4397 = vadd.f32 %v4196, %v4396
      %v4398 = vpop.f32.mrb[0].mxu0
      %v4399 = vadd.f32 %v4198, %v4398
      %4400 = vmatprep.mubr.bf16.mxu0 %v2817
      %4401 = vmatmul.mubr.bf16.gmra.mrb[0].mxu0 %v2816
      %v4402 = vpop.f32.mrb[0].mxu0
      %v4403 = vadd.f32 %v4202, %v4402
      %v4404 = vpop.f32.mrb[0].mxu0
      %v4405 = vadd.f32 %v4204, %v4404
      %v4406 = vpop.f32.mrb[0].mxu0
      %v4407 = vadd.f32 %v4206, %v4406
      %v4408 = vpop.f32.mrb[0].mxu0
      %v4409 = vadd.f32 %v4208, %v4408
      %4410 = vmatprep.mubr.bf16.mxu0 %v2834
      %4411 = vmatmul.mubr.bf16.gmra.mrb[0].mxu0 %v2833
      %v4412 = vpop.f32.mrb[0].mxu0
      %v4413 = vadd.f32 %v4212, %v4412
      %v4414 = vpop.f32.mrb[0].mxu0
      %v4415 = vadd.f32 %v4214, %v4414
      %v4416 = vpop.f32.mrb[0].mxu0
      %v4417 = vadd.f32 %v4216, %v4416
      %v4418 = vpop.f32.mrb[0].mxu0
      %v4419 = vadd.f32 %v4218, %v4418
      %4420 = vmatprep.mubr.bf16.mxu0 %v2851
      %4421 = vmatmul.mubr.bf16.gmra.mrb[0].mxu0 %v2850
      %v4422 = vpop.f32.mrb[0].mxu0
      %v4423 = vadd.f32 %v4222, %v4422
      %v4424 = vpop.f32.mrb[0].mxu0
      %v4425 = vadd.f32 %v4224, %v4424
      %v4426 = vpop.f32.mrb[0].mxu0
      %v4427 = vadd.f32 %v4226, %v4426
      %v4428 = vpop.f32.mrb[0].mxu0
      %v4429 = vadd.f32 %v4228, %v4428
      %4430 = vmatprep.mubr.bf16.mxu0 %v2868
      %4431 = vmatmul.mubr.bf16.gmra.mrb[0].mxu0 %v2867
      %v4432 = vpop.f32.mrb[0].mxu0
      %v4433 = vadd.f32 %v4232, %v4432
      %v4434 = vpop.f32.mrb[0].mxu0
      %v4435 = vadd.f32 %v4234, %v4434
      %v4436 = vpop.f32.mrb[0].mxu0
      %v4437 = vadd.f32 %v4236, %v4436
      %v4438 = vpop.f32.mrb[0].mxu0
      %v4439 = vadd.f32 %v4238, %v4438
      %4440 = vmatprep.mubr.bf16.mxu0 %v2885
      %4441 = vmatmul.mubr.bf16.gmra.mrb[0].mxu0 %v2884
      %v4442 = vpop.f32.mrb[0].mxu0
      %v4443 = vadd.f32 %v4242, %v4442
      %v4444 = vpop.f32.mrb[0].mxu0
      %v4445 = vadd.f32 %v4244, %v4444
      %v4446 = vpop.f32.mrb[0].mxu0
      %v4447 = vadd.f32 %v4246, %v4446
      %v4448 = vpop.f32.mrb[0].mxu0
      %v4449 = vadd.f32 %v4248, %v4448
      %4450 = vmatprep.mubr.bf16.mxu0 %v2902
      %4451 = vmatmul.mubr.bf16.gmra.mrb[0].mxu0 %v2901
      %v4452 = vpop.f32.mrb[0].mxu0
      %v4453 = vadd.f32 %v4252, %v4452
      %v4454 = vpop.f32.mrb[0].mxu0
      %v4455 = vadd.f32 %v4254, %v4454
      %v4456 = vpop.f32.mrb[0].mxu0
      %v4457 = vadd.f32 %v4256, %v4456
      %v4458 = vpop.f32.mrb[0].mxu0
      %v4459 = vadd.f32 %v4258, %v4458
      %4460 = vmatprep.mubr.bf16.mxu0 %v2919
      %4461 = vmatmul.mubr.bf16.gmra.mrb[0].mxu0 %v2918
      %v4462 = vpop.f32.mrb[0].mxu0
      %v4463 = vadd.f32 %v4262, %v4462
      %v4464 = vpop.f32.mrb[0].mxu0
      %v4465 = vadd.f32 %v4264, %v4464
      %v4466 = vpop.f32.mrb[0].mxu0
      %v4467 = vadd.f32 %v4266, %v4466
      %v4468 = vpop.f32.mrb[0].mxu0
      %v4469 = vadd.f32 %v4268, %v4468
      %4470 = vmatprep.mubr.bf16.mxu0 %v2936
      %4471 = vmatmul.mubr.bf16.gmra.mrb[0].mxu0 %v2935
      %v4472 = vpop.f32.mrb[0].mxu0
      %v4473 = vadd.f32 %v4272, %v4472
      %v4474 = vpop.f32.mrb[0].mxu0
      %v4475 = vadd.f32 %v4274, %v4474
      %v4476 = vpop.f32.mrb[0].mxu0
      %v4477 = vadd.f32 %v4276, %v4476
      %v4478 = vpop.f32.mrb[0].mxu0
      %v4479 = vadd.f32 %v4278, %v4478
      %4480 = vmatprep.mubr.bf16.mxu0 %v2953
      %4481 = vmatmul.mubr.bf16.gmra.mrb[0].mxu0 %v2952
      %v4482 = vpop.f32.mrb[0].mxu0
      %v4483 = vadd.f32 %v4282, %v4482
      %v4484 = vpop.f32.mrb[0].mxu0
      %v4485 = vadd.f32 %v4284, %v4484
      %v4486 = vpop.f32.mrb[0].mxu0
      %v4487 = vpop.f32.mrb[0].mxu0
      %4488 = vdwg.mxu0
      %4489 = vmatprep.subr.bf16.mxu0 %v1444
      %4490 = vmatpush1.bf16.msra.mxu0 %v1443
      %4491 = vmatprep.subr.bf16.mxu0 %v1446
      %4492 = vmatpush1.bf16.msra.mxu0 %v1445
      %4493 = vmatprep.subr.bf16.mxu0 %v1448
      %4494 = vmatpush1.bf16.msra.mxu0 %v1447
      %4495 = vmatprep.subr.bf16.mxu0 %v1450
      %4496 = vmatpush1.bf16.msra.mxu0 %v1449
      %4497 = vmatprep.subr.bf16.mxu0 %v1452
      %4498 = vmatpush1.bf16.msra.mxu0 %v1451
      %4499 = vmatprep.subr.bf16.mxu0 %v1454
      %4500 = vmatpush1.bf16.msra.mxu0 %v1453
      %4501 = vmatprep.subr.bf16.mxu0 %v1456
      %4502 = vmatpush1.bf16.msra.mxu0 %v1455
      %4503 = vmatprep.subr.bf16.mxu0 %v1458
      %4504 = vmatpush1.bf16.msra.mxu0 %v1457
      %4505 = vmatprep.subr.bf16.mxu0 %v1460
      %4506 = vmatpush1.bf16.msra.mxu0 %v1459
      %4507 = vmatprep.subr.bf16.mxu0 %v1462
      %4508 = vmatpush1.bf16.msra.mxu0 %v1461
      %4509 = vmatprep.subr.bf16.mxu0 %v1464
      %4510 = vmatpush1.bf16.msra.mxu0 %v1463
      %4511 = vmatprep.subr.bf16.mxu0 %v1466
      %4512 = vmatpush1.bf16.msra.mxu0 %v1465
      %4513 = vmatprep.subr.bf16.mxu0 %v1468
      %4514 = vmatpush1.bf16.msra.mxu0 %v1467
      %4515 = vmatprep.subr.bf16.mxu0 %v1470
      %4516 = vmatpush1.bf16.msra.mxu0 %v1469
      %4517 = vmatprep.subr.bf16.mxu0 %v1472
      %4518 = vmatpush1.bf16.msra.mxu0 %v1471
      %4519 = vmatprep.subr.bf16.mxu0 %v1474
      %4520 = vmatpush1.bf16.msra.mxu0 %v1473
      %4521 = vmatprep.mubr.bf16.mxu0 %v2683
      %4522 = vmatmul.mubr.bf16.gmra.mrb[0].mxu0 %v2682
      %v4523 = vpop.f32.mrb[0].mxu0
      %v4524 = vadd.f32 %v4323, %v4523
      %v4525 = vpop.f32.mrb[0].mxu0
      %v4526 = vadd.f32 %v4325, %v4525
      %v4527 = vpop.f32.mrb[0].mxu0
      %v4528 = vadd.f32 %v4327, %v4527
      %v4529 = vpop.f32.mrb[0].mxu0
      %v4530 = vadd.f32 %v4329, %v4529
      %4531 = vmatprep.mubr.bf16.mxu0 %v2700
      %4532 = vmatmul.mubr.bf16.gmra.mrb[0].mxu0 %v2699
      %v4533 = vpop.f32.mrb[0].mxu0
      %v4534 = vadd.f32 %v4333, %v4533
      %v4535 = vpop.f32.mrb[0].mxu0
      %v4536 = vadd.f32 %v4335, %v4535
      %v4537 = vpop.f32.mrb[0].mxu0
      %v4538 = vadd.f32 %v4337, %v4537
      %v4539 = vpop.f32.mrb[0].mxu0
      %v4540 = vadd.f32 %v4339, %v4539
      %4541 = vmatprep.mubr.bf16.mxu0 %v2717
      %4542 = vmatmul.mubr.bf16.gmra.mrb[0].mxu0 %v2716
      %v4543 = vpop.f32.mrb[0].mxu0
      %v4544 = vadd.f32 %v4343, %v4543
      %v4545 = vpop.f32.mrb[0].mxu0
      %v4546 = vadd.f32 %v4345, %v4545
      %v4547 = vpop.f32.mrb[0].mxu0
      %v4548 = vadd.f32 %v4347, %v4547
      %v4549 = vpop.f32.mrb[0].mxu0
      %v4550 = vadd.f32 %v4349, %v4549
      %4551 = vmatprep.mubr.bf16.mxu0 %v2734
      %4552 = vmatmul.mubr.bf16.gmra.mrb[0].mxu0 %v2733
      %v4553 = vpop.f32.mrb[0].mxu0
      %v4554 = vadd.f32 %v4353, %v4553
      %v4555 = vpop.f32.mrb[0].mxu0
      %v4556 = vadd.f32 %v4355, %v4555
      %v4557 = vpop.f32.mrb[0].mxu0
      %v4558 = vadd.f32 %v4357, %v4557
      %v4559 = vpop.f32.mrb[0].mxu0
      %v4560 = vadd.f32 %v4359, %v4559
      %4561 = vmatprep.mubr.bf16.mxu0 %v2751
      %4562 = vmatmul.mubr.bf16.gmra.mrb[0].mxu0 %v2750
      %v4563 = vpop.f32.mrb[0].mxu0
      %v4564 = vadd.f32 %v4363, %v4563
      %v4565 = vpop.f32.mrb[0].mxu0
      %v4566 = vadd.f32 %v4365, %v4565
      %v4567 = vpop.f32.mrb[0].mxu0
      %v4568 = vadd.f32 %v4367, %v4567
      %v4569 = vpop.f32.mrb[0].mxu0
      %v4570 = vadd.f32 %v4369, %v4569
      %4571 = vmatprep.mubr.bf16.mxu0 %v2768
      %4572 = vmatmul.mubr.bf16.gmra.mrb[0].mxu0 %v2767
      %v4573 = vpop.f32.mrb[0].mxu0
      %v4574 = vadd.f32 %v4373, %v4573
      %v4575 = vpop.f32.mrb[0].mxu0
      %v4576 = vadd.f32 %v4375, %v4575
      %v4577 = vpop.f32.mrb[0].mxu0
      %v4578 = vadd.f32 %v4377, %v4577
      %v4579 = vpop.f32.mrb[0].mxu0
      %v4580 = vadd.f32 %v4379, %v4579
      %4581 = vmatprep.mubr.bf16.mxu0 %v2785
      %4582 = vmatmul.mubr.bf16.gmra.mrb[0].mxu0 %v2784
      %v4583 = vpop.f32.mrb[0].mxu0
      %v4584 = vadd.f32 %v4383, %v4583
      %v4585 = vpop.f32.mrb[0].mxu0
      %v4586 = vadd.f32 %v4385, %v4585
      %v4587 = vpop.f32.mrb[0].mxu0
      %v4588 = vadd.f32 %v4387, %v4587
      %v4589 = vpop.f32.mrb[0].mxu0
      %v4590 = vadd.f32 %v4389, %v4589
      %4591 = vmatprep.mubr.bf16.mxu0 %v2802
      %4592 = vmatmul.mubr.bf16.gmra.mrb[0].mxu0 %v2801
      %v4593 = vpop.f32.mrb[0].mxu0
      %v4594 = vadd.f32 %v4393, %v4593
      %v4595 = vpop.f32.mrb[0].mxu0
      %v4596 = vadd.f32 %v4395, %v4595
      %v4597 = vpop.f32.mrb[0].mxu0
      %v4598 = vadd.f32 %v4397, %v4597
      %v4599 = vpop.f32.mrb[0].mxu0
      %v4600 = vadd.f32 %v4399, %v4599
      %4601 = vmatprep.mubr.bf16.mxu0 %v2819
      %4602 = vmatmul.mubr.bf16.gmra.mrb[0].mxu0 %v2818
      %v4603 = vpop.f32.mrb[0].mxu0
      %v4604 = vadd.f32 %v4403, %v4603
      %v4605 = vpop.f32.mrb[0].mxu0
      %v4606 = vadd.f32 %v4405, %v4605
      %v4607 = vpop.f32.mrb[0].mxu0
      %v4608 = vadd.f32 %v4407, %v4607
      %v4609 = vpop.f32.mrb[0].mxu0
      %v4610 = vadd.f32 %v4409, %v4609
      %4611 = vmatprep.mubr.bf16.mxu0 %v2836
      %4612 = vmatmul.mubr.bf16.gmra.mrb[0].mxu0 %v2835
      %v4613 = vpop.f32.mrb[0].mxu0
      %v4614 = vadd.f32 %v4413, %v4613
      %v4615 = vpop.f32.mrb[0].mxu0
      %v4616 = vadd.f32 %v4415, %v4615
      %v4617 = vpop.f32.mrb[0].mxu0
      %v4618 = vadd.f32 %v4417, %v4617
      %v4619 = vpop.f32.mrb[0].mxu0
      %v4620 = vadd.f32 %v4419, %v4619
      %4621 = vmatprep.mubr.bf16.mxu0 %v2853
      %4622 = vmatmul.mubr.bf16.gmra.mrb[0].mxu0 %v2852
      %v4623 = vpop.f32.mrb[0].mxu0
      %v4624 = vadd.f32 %v4423, %v4623
      %v4625 = vpop.f32.mrb[0].mxu0
      %v4626 = vadd.f32 %v4425, %v4625
      %v4627 = vpop.f32.mrb[0].mxu0
      %v4628 = vadd.f32 %v4427, %v4627
      %v4629 = vpop.f32.mrb[0].mxu0
      %v4630 = vadd.f32 %v4429, %v4629
      %4631 = vmatprep.mubr.bf16.mxu0 %v2870
      %4632 = vmatmul.mubr.bf16.gmra.mrb[0].mxu0 %v2869
      %v4633 = vpop.f32.mrb[0].mxu0
      %v4634 = vadd.f32 %v4433, %v4633
      %v4635 = vpop.f32.mrb[0].mxu0
      %v4636 = vadd.f32 %v4435, %v4635
      %v4637 = vpop.f32.mrb[0].mxu0
      %v4638 = vadd.f32 %v4437, %v4637
      %v4639 = vpop.f32.mrb[0].mxu0
      %v4640 = vadd.f32 %v4439, %v4639
      %4641 = vmatprep.mubr.bf16.mxu0 %v2887
      %4642 = vmatmul.mubr.bf16.gmra.mrb[0].mxu0 %v2886
      %v4643 = vpop.f32.mrb[0].mxu0
      %v4644 = vadd.f32 %v4443, %v4643
      %v4645 = vpop.f32.mrb[0].mxu0
      %v4646 = vadd.f32 %v4445, %v4645
      %v4647 = vpop.f32.mrb[0].mxu0
      %v4648 = vadd.f32 %v4447, %v4647
      %v4649 = vpop.f32.mrb[0].mxu0
      %v4650 = vadd.f32 %v4449, %v4649
      %4651 = vmatprep.mubr.bf16.mxu0 %v2904
      %4652 = vmatmul.mubr.bf16.gmra.mrb[0].mxu0 %v2903
      %v4653 = vpop.f32.mrb[0].mxu0
      %v4654 = vadd.f32 %v4453, %v4653
      %v4655 = vpop.f32.mrb[0].mxu0
      %v4656 = vadd.f32 %v4455, %v4655
      %v4657 = vpop.f32.mrb[0].mxu0
      %v4658 = vadd.f32 %v4457, %v4657
      %v4659 = vpop.f32.mrb[0].mxu0
      %v4660 = vadd.f32 %v4459, %v4659
      %4661 = vmatprep.mubr.bf16.mxu0 %v2921
      %4662 = vmatmul.mubr.bf16.gmra.mrb[0].mxu0 %v2920
      %v4663 = vpop.f32.mrb[0].mxu0
      %v4664 = vadd.f32 %v4463, %v4663
      %v4665 = vpop.f32.mrb[0].mxu0
      %v4666 = vadd.f32 %v4465, %v4665
      %v4667 = vpop.f32.mrb[0].mxu0
      %v4668 = vadd.f32 %v4467, %v4667
      %v4669 = vpop.f32.mrb[0].mxu0
      %v4670 = vadd.f32 %v4469, %v4669
      %4671 = vmatprep.mubr.bf16.mxu0 %v2938
      %4672 = vmatmul.mubr.bf16.gmra.mrb[0].mxu0 %v2937
      %v4673 = vpop.f32.mrb[0].mxu0
      %v4674 = vadd.f32 %v4473, %v4673
      %v4675 = vpop.f32.mrb[0].mxu0
      %v4676 = vadd.f32 %v4475, %v4675
      %v4677 = vpop.f32.mrb[0].mxu0
      %v4678 = vadd.f32 %v4477, %v4677
      %v4679 = vpop.f32.mrb[0].mxu0
      %v4680 = vadd.f32 %v4479, %v4679
      %4681 = vmatprep.mubr.bf16.mxu0 %v2955
      %4682 = vmatmul.mubr.bf16.gmra.mrb[0].mxu0 %v2954
      %v4683 = vpop.f32.mrb[0].mxu0
      %v4684 = vadd.f32 %v4483, %v4683
      %v4685 = vpop.f32.mrb[0].mxu0
      %v4686 = vadd.f32 %v4485, %v4685
      %v4687 = vpop.f32.mrb[0].mxu0
      %v4688 = vpop.f32.mrb[0].mxu0
      %4689 = vdwg.mxu0
      %4690 = vmatprep.subr.bf16.mxu0 %v1476
      %4691 = vmatpush1.bf16.msra.mxu0 %v1475
      %4692 = vmatprep.subr.bf16.mxu0 %v1478
      %4693 = vmatpush1.bf16.msra.mxu0 %v1477
      %4694 = vmatprep.subr.bf16.mxu0 %v1480
      %4695 = vmatpush1.bf16.msra.mxu0 %v1479
      %4696 = vmatprep.subr.bf16.mxu0 %v1482
      %4697 = vmatpush1.bf16.msra.mxu0 %v1481
      %4698 = vmatprep.subr.bf16.mxu0 %v1484
      %4699 = vmatpush1.bf16.msra.mxu0 %v1483
      %4700 = vmatprep.subr.bf16.mxu0 %v1486
      %4701 = vmatpush1.bf16.msra.mxu0 %v1485
      %4702 = vmatprep.subr.bf16.mxu0 %v1488
      %4703 = vmatpush1.bf16.msra.mxu0 %v1487
      %4704 = vmatprep.subr.bf16.mxu0 %v1490
      %4705 = vmatpush1.bf16.msra.mxu0 %v1489
      %4706 = vmatprep.subr.bf16.mxu0 %v1492
      %4707 = vmatpush1.bf16.msra.mxu0 %v1491
      %4708 = vmatprep.subr.bf16.mxu0 %v1494
      %4709 = vmatpush1.bf16.msra.mxu0 %v1493
      %4710 = vmatprep.subr.bf16.mxu0 %v1496
      %4711 = vmatpush1.bf16.msra.mxu0 %v1495
      %4712 = vmatprep.subr.bf16.mxu0 %v1498
      %4713 = vmatpush1.bf16.msra.mxu0 %v1497
      %4714 = vmatprep.subr.bf16.mxu0 %v1500
      %4715 = vmatpush1.bf16.msra.mxu0 %v1499
      %4716 = vmatprep.subr.bf16.mxu0 %v1502
      %4717 = vmatpush1.bf16.msra.mxu0 %v1501
      %4718 = vmatprep.subr.bf16.mxu0 %v1504
      %4719 = vmatpush1.bf16.msra.mxu0 %v1503
      %4720 = vmatprep.subr.bf16.mxu0 %v1506
      %4721 = vmatpush1.bf16.msra.mxu0 %v1505
      %4722 = vmatprep.mubr.bf16.mxu0 %v2685
      %4723 = vmatmul.mubr.bf16.gmra.mrb[0].mxu0 %v2684
      %v4724 = vpop.f32.mrb[0].mxu0
      %v4725 = vadd.f32 %v4524, %v4724
      %v4726 = vpop.f32.mrb[0].mxu0
      %v4727 = vadd.f32 %v4526, %v4726
      %v4728 = vpop.f32.mrb[0].mxu0
      %v4729 = vadd.f32 %v4528, %v4728
      %v4730 = vpop.f32.mrb[0].mxu0
      %v4731 = vadd.f32 %v4530, %v4730
      %4732 = vmatprep.mubr.bf16.mxu0 %v2702
      %4733 = vmatmul.mubr.bf16.gmra.mrb[0].mxu0 %v2701
      %v4734 = vpop.f32.mrb[0].mxu0
      %v4735 = vadd.f32 %v4534, %v4734
      %v4736 = vpop.f32.mrb[0].mxu0
      %v4737 = vadd.f32 %v4536, %v4736
      %v4738 = vpop.f32.mrb[0].mxu0
      %v4739 = vadd.f32 %v4538, %v4738
      %v4740 = vpop.f32.mrb[0].mxu0
      %v4741 = vadd.f32 %v4540, %v4740
      %4742 = vmatprep.mubr.bf16.mxu0 %v2719
      %4743 = vmatmul.mubr.bf16.gmra.mrb[0].mxu0 %v2718
      %v4744 = vpop.f32.mrb[0].mxu0
      %v4745 = vadd.f32 %v4544, %v4744
      %v4746 = vpop.f32.mrb[0].mxu0
      %v4747 = vadd.f32 %v4546, %v4746
      %v4748 = vpop.f32.mrb[0].mxu0
      %v4749 = vadd.f32 %v4548, %v4748
      %v4750 = vpop.f32.mrb[0].mxu0
      %v4751 = vadd.f32 %v4550, %v4750
      %4752 = vmatprep.mubr.bf16.mxu0 %v2736
      %4753 = vmatmul.mubr.bf16.gmra.mrb[0].mxu0 %v2735
      %v4754 = vpop.f32.mrb[0].mxu0
      %v4755 = vadd.f32 %v4554, %v4754
      %v4756 = vpop.f32.mrb[0].mxu0
      %v4757 = vadd.f32 %v4556, %v4756
      %v4758 = vpop.f32.mrb[0].mxu0
      %v4759 = vadd.f32 %v4558, %v4758
      %v4760 = vpop.f32.mrb[0].mxu0
      %v4761 = vadd.f32 %v4560, %v4760
      %4762 = vmatprep.mubr.bf16.mxu0 %v2753
      %4763 = vmatmul.mubr.bf16.gmra.mrb[0].mxu0 %v2752
      %v4764 = vpop.f32.mrb[0].mxu0
      %v4765 = vadd.f32 %v4564, %v4764
      %v4766 = vpop.f32.mrb[0].mxu0
      %v4767 = vadd.f32 %v4566, %v4766
      %v4768 = vpop.f32.mrb[0].mxu0
      %v4769 = vadd.f32 %v4568, %v4768
      %v4770 = vpop.f32.mrb[0].mxu0
      %v4771 = vadd.f32 %v4570, %v4770
      %4772 = vmatprep.mubr.bf16.mxu0 %v2770
      %4773 = vmatmul.mubr.bf16.gmra.mrb[0].mxu0 %v2769
      %v4774 = vpop.f32.mrb[0].mxu0
      %v4775 = vadd.f32 %v4574, %v4774
      %v4776 = vpop.f32.mrb[0].mxu0
      %v4777 = vadd.f32 %v4576, %v4776
      %v4778 = vpop.f32.mrb[0].mxu0
      %v4779 = vadd.f32 %v4578, %v4778
      %v4780 = vpop.f32.mrb[0].mxu0
      %v4781 = vadd.f32 %v4580, %v4780
      %4782 = vmatprep.mubr.bf16.mxu0 %v2787
      %4783 = vmatmul.mubr.bf16.gmra.mrb[0].mxu0 %v2786
      %v4784 = vpop.f32.mrb[0].mxu0
      %v4785 = vadd.f32 %v4584, %v4784
      %v4786 = vpop.f32.mrb[0].mxu0
      %v4787 = vadd.f32 %v4586, %v4786
      %v4788 = vpop.f32.mrb[0].mxu0
      %v4789 = vadd.f32 %v4588, %v4788
      %v4790 = vpop.f32.mrb[0].mxu0
      %v4791 = vadd.f32 %v4590, %v4790
      %4792 = vmatprep.mubr.bf16.mxu0 %v2804
      %4793 = vmatmul.mubr.bf16.gmra.mrb[0].mxu0 %v2803
      %v4794 = vpop.f32.mrb[0].mxu0
      %v4795 = vadd.f32 %v4594, %v4794
      %v4796 = vpop.f32.mrb[0].mxu0
      %v4797 = vadd.f32 %v4596, %v4796
      %v4798 = vpop.f32.mrb[0].mxu0
      %v4799 = vadd.f32 %v4598, %v4798
      %v4800 = vpop.f32.mrb[0].mxu0
      %v4801 = vadd.f32 %v4600, %v4800
      %4802 = vmatprep.mubr.bf16.mxu0 %v2821
      %4803 = vmatmul.mubr.bf16.gmra.mrb[0].mxu0 %v2820
      %v4804 = vpop.f32.mrb[0].mxu0
      %v4805 = vadd.f32 %v4604, %v4804
      %v4806 = vpop.f32.mrb[0].mxu0
      %v4807 = vadd.f32 %v4606, %v4806
      %v4808 = vpop.f32.mrb[0].mxu0
      %v4809 = vadd.f32 %v4608, %v4808
      %v4810 = vpop.f32.mrb[0].mxu0
      %v4811 = vadd.f32 %v4610, %v4810
      %4812 = vmatprep.mubr.bf16.mxu0 %v2838
      %4813 = vmatmul.mubr.bf16.gmra.mrb[0].mxu0 %v2837
      %v4814 = vpop.f32.mrb[0].mxu0
      %v4815 = vadd.f32 %v4614, %v4814
      %v4816 = vpop.f32.mrb[0].mxu0
      %v4817 = vadd.f32 %v4616, %v4816
      %v4818 = vpop.f32.mrb[0].mxu0
      %v4819 = vadd.f32 %v4618, %v4818
      %v4820 = vpop.f32.mrb[0].mxu0
      %v4821 = vadd.f32 %v4620, %v4820
      %4822 = vmatprep.mubr.bf16.mxu0 %v2855
      %4823 = vmatmul.mubr.bf16.gmra.mrb[0].mxu0 %v2854
      %v4824 = vpop.f32.mrb[0].mxu0
      %v4825 = vadd.f32 %v4624, %v4824
      %v4826 = vpop.f32.mrb[0].mxu0
      %v4827 = vadd.f32 %v4626, %v4826
      %v4828 = vpop.f32.mrb[0].mxu0
      %v4829 = vadd.f32 %v4628, %v4828
      %v4830 = vpop.f32.mrb[0].mxu0
      %v4831 = vadd.f32 %v4630, %v4830
      %4832 = vmatprep.mubr.bf16.mxu0 %v2872
      %4833 = vmatmul.mubr.bf16.gmra.mrb[0].mxu0 %v2871
      %v4834 = vpop.f32.mrb[0].mxu0
      %v4835 = vadd.f32 %v4634, %v4834
      %v4836 = vpop.f32.mrb[0].mxu0
      %v4837 = vadd.f32 %v4636, %v4836
      %v4838 = vpop.f32.mrb[0].mxu0
      %v4839 = vadd.f32 %v4638, %v4838
      %v4840 = vpop.f32.mrb[0].mxu0
      %v4841 = vadd.f32 %v4640, %v4840
      %4842 = vmatprep.mubr.bf16.mxu0 %v2889
      %4843 = vmatmul.mubr.bf16.gmra.mrb[0].mxu0 %v2888
      %v4844 = vpop.f32.mrb[0].mxu0
      %v4845 = vadd.f32 %v4644, %v4844
      %v4846 = vpop.f32.mrb[0].mxu0
      %v4847 = vadd.f32 %v4646, %v4846
      %v4848 = vpop.f32.mrb[0].mxu0
      %v4849 = vadd.f32 %v4648, %v4848
      %v4850 = vpop.f32.mrb[0].mxu0
      %v4851 = vadd.f32 %v4650, %v4850
      %4852 = vmatprep.mubr.bf16.mxu0 %v2906
      %4853 = vmatmul.mubr.bf16.gmra.mrb[0].mxu0 %v2905
      %v4854 = vpop.f32.mrb[0].mxu0
      %v4855 = vadd.f32 %v4654, %v4854
      %v4856 = vpop.f32.mrb[0].mxu0
      %v4857 = vadd.f32 %v4656, %v4856
      %v4858 = vpop.f32.mrb[0].mxu0
      %v4859 = vadd.f32 %v4658, %v4858
      %v4860 = vpop.f32.mrb[0].mxu0
      %v4861 = vadd.f32 %v4660, %v4860
      %4862 = vmatprep.mubr.bf16.mxu0 %v2923
      %4863 = vmatmul.mubr.bf16.gmra.mrb[0].mxu0 %v2922
      %v4864 = vpop.f32.mrb[0].mxu0
      %v4865 = vadd.f32 %v4664, %v4864
      %v4866 = vpop.f32.mrb[0].mxu0
      %v4867 = vadd.f32 %v4666, %v4866
      %v4868 = vpop.f32.mrb[0].mxu0
      %v4869 = vadd.f32 %v4668, %v4868
      %v4870 = vpop.f32.mrb[0].mxu0
      %v4871 = vadd.f32 %v4670, %v4870
      %4872 = vmatprep.mubr.bf16.mxu0 %v2940
      %4873 = vmatmul.mubr.bf16.gmra.mrb[0].mxu0 %v2939
      %v4874 = vpop.f32.mrb[0].mxu0
      %v4875 = vadd.f32 %v4674, %v4874
      %v4876 = vpop.f32.mrb[0].mxu0
      %v4877 = vadd.f32 %v4676, %v4876
      %v4878 = vpop.f32.mrb[0].mxu0
      %v4879 = vadd.f32 %v4678, %v4878
      %v4880 = vpop.f32.mrb[0].mxu0
      %v4881 = vadd.f32 %v4680, %v4880
      %4882 = vmatprep.mubr.bf16.mxu0 %v2957
      %4883 = vmatmul.mubr.bf16.gmra.mrb[0].mxu0 %v2956
      %v4884 = vpop.f32.mrb[0].mxu0
      %v4885 = vadd.f32 %v4684, %v4884
      %v4886 = vpop.f32.mrb[0].mxu0
      %v4887 = vadd.f32 %v4686, %v4886
      %v4888 = vpop.f32.mrb[0].mxu0
      %v4889 = vpop.f32.mrb[0].mxu0
      %4890 = vdwg.mxu0
      %4891 = vmatprep.subr.bf16.mxu0 %v1508
      %4892 = vmatpush1.bf16.msra.mxu0 %v1507
      %4893 = vmatprep.subr.bf16.mxu0 %v1510
      %4894 = vmatpush1.bf16.msra.mxu0 %v1509
      %4895 = vmatprep.subr.bf16.mxu0 %v1512
      %4896 = vmatpush1.bf16.msra.mxu0 %v1511
      %4897 = vmatprep.subr.bf16.mxu0 %v1514
      %4898 = vmatpush1.bf16.msra.mxu0 %v1513
      %4899 = vmatprep.subr.bf16.mxu0 0
      %4900 = vmatpush1.bf16.msra.mxu0 0
      %4901 = vmatprep.subr.bf16.mxu0 0
      %4902 = vmatpush1.bf16.msra.mxu0 0
      %4903 = vmatprep.subr.bf16.mxu0 0
      %4904 = vmatpush1.bf16.msra.mxu0 0
      %4905 = vmatprep.subr.bf16.mxu0 0
      %4906 = vmatpush1.bf16.msra.mxu0 0
      %4907 = vmatprep.subr.bf16.mxu0 0
      %4908 = vmatpush1.bf16.msra.mxu0 0
      %4909 = vmatprep.subr.bf16.mxu0 0
      %4910 = vmatpush1.bf16.msra.mxu0 0
      %4911 = vmatprep.subr.bf16.mxu0 0
      %4912 = vmatpush1.bf16.msra.mxu0 0
      %4913 = vmatprep.subr.bf16.mxu0 0
      %4914 = vmatpush1.bf16.msra.mxu0 0
      %4915 = vmatprep.subr.bf16.mxu0 0
      %4916 = vmatpush1.bf16.msra.mxu0 0
      %4917 = vmatprep.subr.bf16.mxu0 0
      %4918 = vmatpush1.bf16.msra.mxu0 0
      %4919 = vmatprep.subr.bf16.mxu0 0
      %4920 = vmatpush1.bf16.msra.mxu0 0
      %4921 = vmatprep.subr.bf16.mxu0 0
      %4922 = vmatpush1.bf16.msra.mxu0 0
      %4923 = vmatprep.mubr.bf16.mxu0 0
      %4924 = vmatmul.mubr.bf16.gmra.mrb[0].mxu0 %v3233
      %v4925 = vpop.f32.mrb[0].mxu0
      %v4926 = vadd.f32 %v4725, %v4925
      %v4927 = vpop.f32.mrb[0].mxu0
      %v4928 = vadd.f32 %v4727, %v4927
      %v4929 = vpop.f32.mrb[0].mxu0
      %v4930 = vadd.f32 %v4729, %v4929
      %v4931 = vpop.f32.mrb[0].mxu0
      %v4932 = vadd.f32 %v4731, %v4931
      %4933 = vmatprep.mubr.bf16.mxu0 0
      %4934 = vmatmul.mubr.bf16.gmra.mrb[0].mxu0 %v3236
      %v4935 = vpop.f32.mrb[0].mxu0
      %v4936 = vadd.f32 %v4735, %v4935
      %v4937 = vpop.f32.mrb[0].mxu0
      %v4938 = vadd.f32 %v4737, %v4937
      %v4939 = vpop.f32.mrb[0].mxu0
      %v4940 = vadd.f32 %v4739, %v4939
      %v4941 = vpop.f32.mrb[0].mxu0
      %v4942 = vadd.f32 %v4741, %v4941
      %4943 = vmatprep.mubr.bf16.mxu0 0
      %4944 = vmatmul.mubr.bf16.gmra.mrb[0].mxu0 %v3239
      %v4945 = vpop.f32.mrb[0].mxu0
      %v4946 = vadd.f32 %v4745, %v4945
      %v4947 = vpop.f32.mrb[0].mxu0
      %v4948 = vadd.f32 %v4747, %v4947
      %v4949 = vpop.f32.mrb[0].mxu0
      %v4950 = vadd.f32 %v4749, %v4949
      %v4951 = vpop.f32.mrb[0].mxu0
      %v4952 = vadd.f32 %v4751, %v4951
      %4953 = vmatprep.mubr.bf16.mxu0 0
      %4954 = vmatmul.mubr.bf16.gmra.mrb[0].mxu0 %v3242
      %v4955 = vpop.f32.mrb[0].mxu0
      %v4956 = vadd.f32 %v4755, %v4955
      %v4957 = vpop.f32.mrb[0].mxu0
      %v4958 = vadd.f32 %v4757, %v4957
      %v4959 = vpop.f32.mrb[0].mxu0
      %v4960 = vadd.f32 %v4759, %v4959
      %v4961 = vpop.f32.mrb[0].mxu0
      %v4962 = vadd.f32 %v4761, %v4961
      %4963 = vmatprep.mubr.bf16.mxu0 0
      %4964 = vmatmul.mubr.bf16.gmra.mrb[0].mxu0 %v3245
      %v4965 = vpop.f32.mrb[0].mxu0
      %v4966 = vadd.f32 %v4765, %v4965
      %v4967 = vpop.f32.mrb[0].mxu0
      %v4968 = vadd.f32 %v4767, %v4967
      %v4969 = vpop.f32.mrb[0].mxu0
      %v4970 = vadd.f32 %v4769, %v4969
      %v4971 = vpop.f32.mrb[0].mxu0
      %v4972 = vadd.f32 %v4771, %v4971
      %4973 = vmatprep.mubr.bf16.mxu0 0
      %4974 = vmatmul.mubr.bf16.gmra.mrb[0].mxu0 %v3248
      %v4975 = vpop.f32.mrb[0].mxu0
      %v4976 = vadd.f32 %v4775, %v4975
      %v4977 = vpop.f32.mrb[0].mxu0
      %v4978 = vadd.f32 %v4777, %v4977
      %v4979 = vpop.f32.mrb[0].mxu0
      %v4980 = vadd.f32 %v4779, %v4979
      %v4981 = vpop.f32.mrb[0].mxu0
      %v4982 = vadd.f32 %v4781, %v4981
      %4983 = vmatprep.mubr.bf16.mxu0 0
      %4984 = vmatmul.mubr.bf16.gmra.mrb[0].mxu0 %v3251
      %v4985 = vpop.f32.mrb[0].mxu0
      %v4986 = vadd.f32 %v4785, %v4985
      %v4987 = vpop.f32.mrb[0].mxu0
      %v4988 = vadd.f32 %v4787, %v4987
      %v4989 = vpop.f32.mrb[0].mxu0
      %v4990 = vadd.f32 %v4789, %v4989
      %v4991 = vpop.f32.mrb[0].mxu0
      %v4992 = vadd.f32 %v4791, %v4991
      %4993 = vmatprep.mubr.bf16.mxu0 0
      %4994 = vmatmul.mubr.bf16.gmra.mrb[0].mxu0 %v3254
      %v4995 = vpop.f32.mrb[0].mxu0
      %v4996 = vadd.f32 %v4795, %v4995
      %v4997 = vpop.f32.mrb[0].mxu0
      %v4998 = vadd.f32 %v4797, %v4997
      %v4999 = vpop.f32.mrb[0].mxu0
      %v5000 = vadd.f32 %v4799, %v4999
      %v5001 = vpop.f32.mrb[0].mxu0
      %v5002 = vadd.f32 %v4801, %v5001
      %5003 = vmatprep.mubr.bf16.mxu0 0
      %5004 = vmatmul.mubr.bf16.gmra.mrb[0].mxu0 %v3257
      %v5005 = vpop.f32.mrb[0].mxu0
      %v5006 = vadd.f32 %v4805, %v5005
      %v5007 = vpop.f32.mrb[0].mxu0
      %v5008 = vadd.f32 %v4807, %v5007
      %v5009 = vpop.f32.mrb[0].mxu0
      %v5010 = vadd.f32 %v4809, %v5009
      %v5011 = vpop.f32.mrb[0].mxu0
      %v5012 = vadd.f32 %v4811, %v5011
      %5013 = vmatprep.mubr.bf16.mxu0 0
      %5014 = vmatmul.mubr.bf16.gmra.mrb[0].mxu0 %v3260
      %v5015 = vpop.f32.mrb[0].mxu0
      %v5016 = vadd.f32 %v4815, %v5015
      %v5017 = vpop.f32.mrb[0].mxu0
      %v5018 = vadd.f32 %v4817, %v5017
      %v5019 = vpop.f32.mrb[0].mxu0
      %v5020 = vadd.f32 %v4819, %v5019
      %v5021 = vpop.f32.mrb[0].mxu0
      %v5022 = vadd.f32 %v4821, %v5021
      %5023 = vmatprep.mubr.bf16.mxu0 0
      %5024 = vmatmul.mubr.bf16.gmra.mrb[0].mxu0 %v3263
      %v5025 = vpop.f32.mrb[0].mxu0
      %v5026 = vadd.f32 %v4825, %v5025
      %v5027 = vpop.f32.mrb[0].mxu0
      %v5028 = vadd.f32 %v4827, %v5027
      %v5029 = vpop.f32.mrb[0].mxu0
      %v5030 = vadd.f32 %v4829, %v5029
      %v5031 = vpop.f32.mrb[0].mxu0
      %v5032 = vadd.f32 %v4831, %v5031
      %5033 = vmatprep.mubr.bf16.mxu0 0
      %5034 = vmatmul.mubr.bf16.gmra.mrb[0].mxu0 %v3266
      %v5035 = vpop.f32.mrb[0].mxu0
      %v5036 = vadd.f32 %v4835, %v5035
      %v5037 = vpop.f32.mrb[0].mxu0
      %v5038 = vadd.f32 %v4837, %v5037
      %v5039 = vpop.f32.mrb[0].mxu0
      %v5040 = vadd.f32 %v4839, %v5039
      %v5041 = vpop.f32.mrb[0].mxu0
      %v5042 = vadd.f32 %v4841, %v5041
      %5043 = vmatprep.mubr.bf16.mxu0 0
      %5044 = vmatmul.mubr.bf16.gmra.mrb[0].mxu0 %v3269
      %v5045 = vpop.f32.mrb[0].mxu0
      %v5046 = vadd.f32 %v4845, %v5045
      %v5047 = vpop.f32.mrb[0].mxu0
      %v5048 = vadd.f32 %v4847, %v5047
      %v5049 = vpop.f32.mrb[0].mxu0
      %v5050 = vadd.f32 %v4849, %v5049
      %v5051 = vpop.f32.mrb[0].mxu0
      %v5052 = vadd.f32 %v4851, %v5051
      %5053 = vmatprep.mubr.bf16.mxu0 0
      %5054 = vmatmul.mubr.bf16.gmra.mrb[0].mxu0 %v3272
      %v5055 = vpop.f32.mrb[0].mxu0
      %v5056 = vadd.f32 %v4855, %v5055
      %v5057 = vpop.f32.mrb[0].mxu0
      %v5058 = vadd.f32 %v4857, %v5057
      %v5059 = vpop.f32.mrb[0].mxu0
      %v5060 = vadd.f32 %v4859, %v5059
      %v5061 = vpop.f32.mrb[0].mxu0
      %v5062 = vadd.f32 %v4861, %v5061
      %5063 = vmatprep.mubr.bf16.mxu0 0
      %5064 = vmatmul.mubr.bf16.gmra.mrb[0].mxu0 %v3275
      %v5065 = vpop.f32.mrb[0].mxu0
      %v5066 = vadd.f32 %v4865, %v5065
      %v5067 = vpop.f32.mrb[0].mxu0
      %v5068 = vadd.f32 %v4867, %v5067
      %v5069 = vpop.f32.mrb[0].mxu0
      %v5070 = vadd.f32 %v4869, %v5069
      %v5071 = vpop.f32.mrb[0].mxu0
      %v5072 = vadd.f32 %v4871, %v5071
      %5073 = vmatprep.mubr.bf16.mxu0 0
      %5074 = vmatmul.mubr.bf16.gmra.mrb[0].mxu0 %v3278
      %v5075 = vpop.f32.mrb[0].mxu0
      %v5076 = vadd.f32 %v4875, %v5075
      %v5077 = vpop.f32.mrb[0].mxu0
      %v5078 = vadd.f32 %v4877, %v5077
      %v5079 = vpop.f32.mrb[0].mxu0
      %v5080 = vadd.f32 %v4879, %v5079
      %v5081 = vpop.f32.mrb[0].mxu0
      %v5082 = vadd.f32 %v4881, %v5081
      %5083 = vmatprep.mubr.bf16.mxu0 0
      %5084 = vmatmul.mubr.bf16.gmra.mrb[0].mxu0 %v3281
      %v5085 = vpop.f32.mrb[0].mxu0
      %v5086 = vadd.f32 %v4885, %v5085
      %v5087 = vpop.f32.mrb[0].mxu0
      %v5088 = vadd.f32 %v4887, %v5087
      %v5089 = vpop.f32.mrb[0].mxu0
      %v5090 = vpop.f32.mrb[0].mxu0
      %5091 = vdwg.mxu0
      %5092 = vst [vmem:[%s192] sm:$0xff] %v4926
      %vm5093 = vcmask 556032
      %5094 = vst.msk [vmem:[%s192 + $0x8] sm:$0xff] %vm5093, %v4928
      %5095 = vst [vmem:[%s192 + $0x10] sm:$0xff] %v4930
      %5096 = vst.msk [vmem:[%s192 + $0x18] sm:$0xff] %vm5093, %v4932
      %5097 = vst [vmem:[%s192 + $0x20] sm:$0xff] %v4936
      %5098 = vst.msk [vmem:[%s192 + $0x28] sm:$0xff] %vm5093, %v4938
      %5099 = vst [vmem:[%s192 + $0x30] sm:$0xff] %v4940
      %5100 = vst.msk [vmem:[%s192 + $0x38] sm:$0xff] %vm5093, %v4942
      %5101 = vst [vmem:[%s192 + $0x40] sm:$0xff] %v4946
      %5102 = vst.msk [vmem:[%s192 + $0x48] sm:$0xff] %vm5093, %v4948
      %5103 = vst [vmem:[%s192 + $0x50] sm:$0xff] %v4950
      %5104 = vst.msk [vmem:[%s192 + $0x58] sm:$0xff] %vm5093, %v4952
      %5105 = vst [vmem:[%s192 + $0x60] sm:$0xff] %v4956
      %5106 = vst.msk [vmem:[%s192 + $0x68] sm:$0xff] %vm5093, %v4958
      %5107 = vst [vmem:[%s192 + $0x70] sm:$0xff] %v4960
      %5108 = vst.msk [vmem:[%s192 + $0x78] sm:$0xff] %vm5093, %v4962
      %5109 = vst [vmem:[%s192 + $0x80] sm:$0xff] %v4966
      %5110 = vst.msk [vmem:[%s192 + $0x88] sm:$0xff] %vm5093, %v4968
      %5111 = vst [vmem:[%s192 + $0x90] sm:$0xff] %v4970
      %5112 = vst.msk [vmem:[%s192 + $0x98] sm:$0xff] %vm5093, %v4972
      %5113 = vst [vmem:[%s192 + $0xa0] sm:$0xff] %v4976
      %5114 = vst.msk [vmem:[%s192 + $0xa8] sm:$0xff] %vm5093, %v4978
      %5115 = vst [vmem:[%s192 + $0xb0] sm:$0xff] %v4980
      %5116 = vst.msk [vmem:[%s192 + $0xb8] sm:$0xff] %vm5093, %v4982
      %5117 = vst [vmem:[%s192 + $0xc0] sm:$0xff] %v4986
      %5118 = vst.msk [vmem:[%s192 + $0xc8] sm:$0xff] %vm5093, %v4988
      %5119 = vst [vmem:[%s192 + $0xd0] sm:$0xff] %v4990
      %5120 = vst.msk [vmem:[%s192 + $0xd8] sm:$0xff] %vm5093, %v4992
      %5121 = vst [vmem:[%s192 + $0xe0] sm:$0xff] %v4996
      %5122 = vst.msk [vmem:[%s192 + $0xe8] sm:$0xff] %vm5093, %v4998
      %5123 = vst [vmem:[%s192 + $0xf0] sm:$0xff] %v5000
      %5124 = vst.msk [vmem:[%s192 + $0xf8] sm:$0xff] %vm5093, %v5002
      %5125 = vst [vmem:[%s192 + $0x100] sm:$0xff] %v5006
      %5126 = vst.msk [vmem:[%s192 + $0x108] sm:$0xff] %vm5093, %v5008
      %5127 = vst [vmem:[%s192 + $0x110] sm:$0xff] %v5010
      %5128 = vst.msk [vmem:[%s192 + $0x118] sm:$0xff] %vm5093, %v5012
      %5129 = vst [vmem:[%s192 + $0x120] sm:$0xff] %v5016
      %5130 = vst.msk [vmem:[%s192 + $0x128] sm:$0xff] %vm5093, %v5018
      %5131 = vst [vmem:[%s192 + $0x130] sm:$0xff] %v5020
      %5132 = vst.msk [vmem:[%s192 + $0x138] sm:$0xff] %vm5093, %v5022
      %5133 = vst [vmem:[%s192 + $0x140] sm:$0xff] %v5026
      %5134 = vst.msk [vmem:[%s192 + $0x148] sm:$0xff] %vm5093, %v5028
      %5135 = vst [vmem:[%s192 + $0x150] sm:$0xff] %v5030
      %5136 = vst.msk [vmem:[%s192 + $0x158] sm:$0xff] %vm5093, %v5032
      %5137 = vst [vmem:[%s192 + $0x160] sm:$0xff] %v5036
      %5138 = vst.msk [vmem:[%s192 + $0x168] sm:$0xff] %vm5093, %v5038
      %5139 = vst [vmem:[%s192 + $0x170] sm:$0xff] %v5040
      %5140 = vst.msk [vmem:[%s192 + $0x178] sm:$0xff] %vm5093, %v5042
      %5141 = vst [vmem:[%s192 + $0x180] sm:$0xff] %v5046
      %5142 = vst.msk [vmem:[%s192 + $0x188] sm:$0xff] %vm5093, %v5048
      %5143 = vst [vmem:[%s192 + $0x190] sm:$0xff] %v5050
      %5144 = vst.msk [vmem:[%s192 + $0x198] sm:$0xff] %vm5093, %v5052
      %5145 = vst [vmem:[%s192 + $0x1a0] sm:$0xff] %v5056
      %5146 = vst.msk [vmem:[%s192 + $0x1a8] sm:$0xff] %vm5093, %v5058
      %5147 = vst [vmem:[%s192 + $0x1b0] sm:$0xff] %v5060
      %5148 = vst.msk [vmem:[%s192 + $0x1b8] sm:$0xff] %vm5093, %v5062
      %5149 = vst [vmem:[%s192 + $0x1c0] sm:$0xff] %v5066
      %5150 = vst.msk [vmem:[%s192 + $0x1c8] sm:$0xff] %vm5093, %v5068
      %5151 = vst [vmem:[%s192 + $0x1d0] sm:$0xff] %v5070
      %5152 = vst.msk [vmem:[%s192 + $0x1d8] sm:$0xff] %vm5093, %v5072
      %5153 = vst [vmem:[%s192 + $0x1e0] sm:$0xff] %v5076
      %5154 = vst.msk [vmem:[%s192 + $0x1e8] sm:$0xff] %vm5093, %v5078
      %5155 = vst [vmem:[%s192 + $0x1f0] sm:$0xff] %v5080
      %5156 = vst.msk [vmem:[%s192 + $0x1f8] sm:$0xff] %vm5093, %v5082
      %5157 = vst [vmem:[%s192 + $0x200] sm:$0xff] %v5086
      %5158 = vst.msk [vmem:[%s192 + $0x208] sm:$0xff] %vm5093, %v5088
      %s5159 = smul.u32 33, %s18
      %p5160 = scmp.lt.s32.totalorder %s17, 0
      %s5161 = scalar_select %p5160, %s17, 0
      %p5162 = scmp.lt.s32.totalorder %s5159, 131
      %s5163 = scalar_select %p5162, %s5159, 131
      %s5164 = smul.addr %s5163, 2
      %s5165 = smul.addr %s5161, 264
      %s5166 = sadd.s32 %s5164, %s5165
      %s5167 = smul.addr %s5166, 8
      %s5168 = scalar_lea.vmem %s2, %s5167
      // Predicated region
      $region29: #{relu_conv1x1.1} parent=27 // pred_check
        %p5169 = pneg %p97
      $region30: #{relu_conv1x1.1} parent=27 // pred_check_branch
        %5171 = sbr.rel (%p5169) target = $region32
      $region31: #{relu_conv1x1.1} parent=27 // pred_region
        %s5172 = smul.u32 33, %s18
      $region32: #{relu_conv1x1.1} parent=27 // pred_fallthru
        _
    $region28: #{relu_conv1x1.1} parent=5 // pred_fallthru
      _
    %p5173 = scmp.le.s32.totalorder 2, %s8
    // Predicated region
    $region33: #{relu_conv1x1.1} parent=5 // pred_check
      %p5174 = pneg %p5173
    $region34: #{relu_conv1x1.1} parent=5 // pred_check_branch
      %5176 = sbr.rel (%p5174) target = $region36
    $region35: #{relu_conv1x1.1} parent=5 // pred_region
      %s5177 = ssub.s32 %s8, 2
      // Predicated region
      $region37: #{relu_conv1x1.1} parent=35 // pred_check
        %p5178 = pneg %p103
      $region38: #{relu_conv1x1.1} parent=35 // pred_check_branch
        %5180 = sbr.rel (%p5178) target = $region40
      $region39: #{relu_conv1x1.1} parent=35 // pred_region
        %s5181 = smul.u32 33, %s20
        %p5182 = scmp.lt.s32.totalorder %s19, 0
        %s5183 = scalar_select %p5182, %s19, 0
        %p5184 = scmp.lt.s32.totalorder %s5181, 131
        %s5185 = scalar_select %p5184, %s5181, 131
        %s5186 = smul.addr %s5185, 2
        %s5187 = smul.addr %s5183, 264
        %s5188 = sadd.s32 %s5186, %s5187
        %s5189 = smul.addr %s5188, 8
        %s5190 = scalar_lea.vmem %s2, %s5189
      $region40: #{relu_conv1x1.1} parent=35 // pred_fallthru
        _
    $region36: #{relu_conv1x1.1} parent=5 // pred_fallthru
      _
  $region6: #{relu_conv1x1.1} parent=0 // loop_footer
    %s12 = sadd.s32 1, %s8
  $region7: #{relu_conv1x1.1} parent=0 // loop_footer_branch
    %7 = sbr.rel target = $region3
  $region8: #{relu_conv1x1.1} parent=0 // loop_exit
    _

</llo_original>
